<compile_context>
chip_gen: v7x
topology: tpu7x:2x2x1
jax: 0.10.0
libtpu: 0.0.40
codegen_flags: <defaults>
</compile_context>

<pallas_src>
import functools

import jax
import jax.numpy as jnp
from jax.experimental import pallas as pl
from jax.experimental.pallas import tpu as pltpu


def _round_up(v, m):
    return ((v + m - 1) // m) * m


# ------------------------------ fused Pallas kernel ------------------------------
def _fused_disc_kernel(x_ref, w1_ref, b1_ref, w2_ref, b2_ref, o_ref, h_ref,
                       *, ws, k2, r1, r2, neg_slope):
    """One batch element, fully fused.

    x_ref  : (RX, 4*Cin)            space-to-depth input rows (row = Y*ws + X)
    w1_ref : (4, 4*Cin, hidden)     conv1 tap weights (tap = a*2 + b)
    b1_ref : (1, hidden)
    w2_ref : (k2*k2, hidden, 128)   conv2 tap weights, out-channels zero-padded to 128
    b2_ref : (1, 128)
    o_ref  : (R2, 128)              conv2 output rows (row = Y*ws + X), lane-dense
    h_ref  : (R1, hidden)           VMEM scratch holding the conv1 activation
    """
    hidden = h_ref.shape[1]
    n2 = o_ref.shape[1]

    # ---- conv1 (k=4, s=2, p=1) == 4 tap matmuls on the space-to-depth slab ----
    acc1 = jnp.broadcast_to(b1_ref[...], (r1, hidden)).astype(jnp.float32)
    for a in range(2):
        for b in range(2):
            d = a * ws + b
            acc1 = acc1 + jnp.dot(x_ref[pl.ds(d, r1), :], w1_ref[a * 2 + b],
                                  preferred_element_type=jnp.float32)
    # LeakyReLU(0.2) epilogue, f32 (rides in VPU slack under the MXU).
    acc1 = jnp.where(acc1 >= 0.0, acc1, neg_slope * acc1)
    h_ref[...] = acc1

    # ---- conv2 (k=k2, s=1, p=0) == k2*k2 tap matmuls on the VMEM-resident activation ----
    acc2 = jnp.broadcast_to(b2_ref[...], (r2, n2)).astype(jnp.float32)
    for i in range(k2):
        for j in range(k2):
            d = i * ws + j
            acc2 = acc2 + jnp.dot(h_ref[pl.ds(d, r2), :], w2_ref[i * k2 + j],
                                  preferred_element_type=jnp.float32)
    o_ref[...] = acc2


# ------------------------------------ wrapper ------------------------------------
def spatial_discriminator(x_nchw, w1, b1, w2, b2, kernel_size):
    """Forward pass equivalent to the PyTorch SpatialDiscriminator.

    x_nchw : (N, C_in, H, W) f32
    w1     : (hidden, C_in, 4, 4),  b1: (hidden,)
    w2     : (2, hidden, K, K),     b2: (2,)
    returns (N, 2 * H2 * W2) f32
    """
    n, c, h, w = x_nchw.shape
    hidden = w1.shape[0]
    k2 = kernel_size
    n2_pad = 128                               # lane-dense padded output channels

    # PyTorch conv output sizes.
    h1 = (h + 2 - 4) // 2 + 1
    w1o = (w + 2 - 4) // 2 + 1
    h2 = h1 - k2 + 1
    w2o = w1o - k2 + 1

    # Space-to-depth geometry of the padded input (stride-2 phases -> channels).
    hp, wp = h + 2, w + 2
    hp2, wp2 = _round_up(hp, 2), _round_up(wp, 2)
    hs, ws = hp2 // 2, wp2 // 2
    cs = 4 * c

    # Row budgets (multiples of 8 so every in-kernel load/store is sublane-aligned).
    r2 = _round_up(h2 * ws, 8)                       # conv2 rows computed
    r1 = _round_up(r2 + (k2 - 1) * (ws + 1), 8)      # conv1 rows needed by conv2
    rx = _round_up(max(r1 + ws + 1, hs * ws), 8)     # s2d rows needed by conv1

    # ----------------- wrapper-side layout glue (no data replication) -----------------
    xp = jnp.pad(x_nchw, ((0, 0), (0, 0),
                          (1, hp2 - hp + 1), (1, wp2 - wp + 1)))
    # (N,C,Hp,Wp) -> (N, Hs, Ws, 4C) with channel index = (di*2 + dj)*C + c
    xs = jnp.transpose(xp.reshape(n, c, hs, 2, ws, 2), (0, 2, 4, 3, 5, 1))
    xs = xs.reshape(n, hs * ws, cs)
    xs = jnp.pad(xs, ((0, 0), (0, rx - hs * ws), (0, 0)))

    # conv1 weights -> 4 taps (a*2+b) of shape (4*Cin, hidden); row = (di*2+dj)*Cin + cin
    w1t = jnp.transpose(w1.reshape(hidden, c, 2, 2, 2, 2),
                        (2, 4, 3, 5, 1, 0)).reshape(4, cs, hidden)
    b1r = b1.reshape(1, hidden).astype(jnp.float32)

    # conv2 weights -> k2*k2 taps (i*k2+j) of shape (hidden, 128), out-channels padded.
    w2t = jnp.transpose(w2, (2, 3, 1, 0)).reshape(k2 * k2, hidden, 2)
    w2t = jnp.pad(w2t, ((0, 0), (0, 0), (0, n2_pad - 2)))
    b2r = jnp.pad(b2.reshape(1, 2), ((0, 0), (0, n2_pad - 2))).astype(jnp.float32)

    kernel = functools.partial(_fused_disc_kernel, ws=ws, k2=k2, r1=r1, r2=r2,
                               neg_slope=0.2)
    out_full = pl.pallas_call(
        kernel,
        out_shape=jax.ShapeDtypeStruct((n, r2, n2_pad), jnp.float32),
        grid=(n,),
        in_specs=[
            pl.BlockSpec((None, rx, cs), lambda bi: (bi, 0, 0)),
            pl.BlockSpec((4, cs, hidden), lambda bi: (0, 0, 0)),
            pl.BlockSpec((1, hidden), lambda bi: (0, 0)),
            pl.BlockSpec((k2 * k2, hidden, n2_pad), lambda bi: (0, 0, 0)),
            pl.BlockSpec((1, n2_pad), lambda bi: (0, 0)),
        ],
        out_specs=pl.BlockSpec((None, r2, n2_pad), lambda bi: (bi, 0, 0)),
        scratch_shapes=[pltpu.VMEM((r1, hidden), jnp.float32)],
        compiler_params=pltpu.CompilerParams(dimension_semantics=("parallel",)),
    )(xs.astype(jnp.float32), w1t.astype(jnp.float32), b1r,
      w2t.astype(jnp.float32), b2r)

    # Crop lane/sublane padding and reorder to PyTorch's flatten(start_dim=1) layout.
    out = out_full[:, : h2 * ws, :2].reshape(n, h2, ws, 2)[:, :, :w2o, :]
    out = jnp.transpose(out, (0, 3, 1, 2)).reshape(n, 2 * h2 * w2o)
    return out


# ------------------------------- pure-XLA reference -------------------------------
def _reference(x, w1, b1, w2, b2):
    dn = ("NCHW", "OIHW", "NCHW")
    y = jax.lax.conv_general_dilated(x, w1, (2, 2), ((1, 1), (1, 1)),
                                     dimension_numbers=dn,
                                     precision=jax.lax.Precision.HIGHEST)
    y = y + b1.reshape(1, -1, 1, 1)
    y = jnp.where(y >= 0, y, 0.2 * y)
    y = jax.lax.conv_general_dilated(y, w2, (1, 1), "VALID",
                                     dimension_numbers=dn,
                                     precision=jax.lax.Precision.HIGHEST)
    y = y + b2.reshape(1, -1, 1, 1)
    return y.reshape(y.shape[0], -1)


# --------------------------------------- main --------------------------------------
if __name__ == "__main__":
    batch, in_features, spatial = 2, 4, 16
    hidden_size, kernel_size = 32, 4

    key = jax.random.PRNGKey(0)
    kx, kw1, kb1, kw2, kb2 = jax.random.split(key, 5)

    x = jax.random.normal(kx, (batch, in_features, spatial, spatial), jnp.float32)
    w1 = 0.05 * jax.random.normal(kw1, (hidden_size, in_features, 4, 4), jnp.float32)
    b1 = 0.01 * jax.random.normal(kb1, (hidden_size,), jnp.float32)
    w2 = 0.05 * jax.random.normal(kw2, (2, hidden_size, kernel_size, kernel_size), jnp.float32)
    b2 = 0.01 * jax.random.normal(kb2, (2,), jnp.float32)

    fwd = jax.jit(functools.partial(spatial_discriminator, kernel_size=kernel_size))
    y = fwd(x, w1, b1, w2, b2)
    jax.block_until_ready(y)

    # 16 -(k4,s2,p1)-> 8 -(k4,s1,p0)-> 5 ; flatten -> 2*5*5 = 50
    assert y.shape == (batch, 2 * 5 * 5), y.shape

    # Numerical sanity check against a pure-XLA conv reference.
    y_ref = _reference(x, w1, b1, w2, b2)
    assert jnp.allclose(y, y_ref, atol=1e-2, rtol=1e-2), float(jnp.max(jnp.abs(y - y_ref)))

    print("KERNEL_OK")
</pallas_src>

<mosaic_0001>
module attributes {stable_mosaic.version = 11 : i64} {
  func.func @_fused_disc_kernel(%arg0: i32, %arg1: memref<1x96x16xf32, #tpu.memory_space<vmem>>, %arg2: memref<4x16x32xf32, #tpu.memory_space<vmem>>, %arg3: memref<1x32xf32, #tpu.memory_space<vmem>>, %arg4: memref<16x32x128xf32, #tpu.memory_space<vmem>>, %arg5: memref<1x128xf32, #tpu.memory_space<vmem>>, %arg6: memref<1x48x128xf32, #tpu.memory_space<vmem>>, %arg7: memref<80x32xf32, #tpu.memory_space<vmem>>) attributes {dimension_semantics = [#tpu.dimension_semantics<parallel>], iteration_bounds = array<i64: 2>, scalar_prefetch = 0 : i64, scratch_operands = 1 : i64, tpu.core_type = #tpu.core_type<tc>, window_params = [{transform_indices = @transform_0, window_bounds = array<i64: 1, 96, 16>}, {pipeline_mode = #tpu.pipeline_mode<synchronous>, transform_indices = @transform_1, window_bounds = array<i64: 4, 16, 32>}, {pipeline_mode = #tpu.pipeline_mode<synchronous>, transform_indices = @transform_2, window_bounds = array<i64: 1, 32>}, {pipeline_mode = #tpu.pipeline_mode<synchronous>, transform_indices = @transform_3, window_bounds = array<i64: 16, 32, 128>}, {pipeline_mode = #tpu.pipeline_mode<synchronous>, transform_indices = @transform_4, window_bounds = array<i64: 1, 128>}, {transform_indices = @transform_5, window_bounds = array<i64: 1, 48, 128>}]} {
    %c0 = arith.constant 0 : index
    %c0_0 = arith.constant 0 : index
    %0 = vector.load %arg3[%c0, %c0_0] : memref<1x32xf32, #tpu.memory_space<vmem>>, vector<1x32xf32>
    %1 = vector.shape_cast %0 : vector<1x32xf32> to vector<1x32xf32>
    %2 = vector.broadcast %1 : vector<1x32xf32> to vector<80x32xf32>
    %c0_1 = arith.constant 0 : index
    %c0_2 = arith.constant 0 : index
    %c0_3 = arith.constant 0 : index
    %3 = vector.load %arg1[%c0_1, %c0_2, %c0_3] : memref<1x96x16xf32, #tpu.memory_space<vmem>>, vector<1x80x16xf32>
    %4 = vector.shape_cast %3 : vector<1x80x16xf32> to vector<80x16xf32>
    %c0_4 = arith.constant 0 : index
    %c0_5 = arith.constant 0 : index
    %c0_6 = arith.constant 0 : index
    %5 = vector.load %arg2[%c0_4, %c0_5, %c0_6] : memref<4x16x32xf32, #tpu.memory_space<vmem>>, vector<1x16x32xf32>
    %6 = vector.shape_cast %5 : vector<1x16x32xf32> to vector<16x32xf32>
    %cst = arith.constant dense<0.000000e+00> : vector<80x32xf32>
    %7 = tpu.matmul %4, %6, %cst {dimension_numbers = #tpu.dot_dimension_numbers<[1], [0], [0], [1], [0, 0, 1, 1], [], []>} : vector<80x16xf32>, vector<16x32xf32>, vector<80x32xf32> -> vector<80x32xf32>
    %8 = arith.addf %2, %7 : vector<80x32xf32>
    %c0_7 = arith.constant 0 : index
    %c1 = arith.constant 1 : index
    %c0_8 = arith.constant 0 : index
    %9 = vector.load %arg1[%c0_7, %c1, %c0_8] : memref<1x96x16xf32, #tpu.memory_space<vmem>>, vector<1x80x16xf32>
    %10 = vector.shape_cast %9 : vector<1x80x16xf32> to vector<80x16xf32>
    %c1_9 = arith.constant 1 : index
    %c0_10 = arith.constant 0 : index
    %c0_11 = arith.constant 0 : index
    %11 = vector.load %arg2[%c1_9, %c0_10, %c0_11] : memref<4x16x32xf32, #tpu.memory_space<vmem>>, vector<1x16x32xf32>
    %12 = vector.shape_cast %11 : vector<1x16x32xf32> to vector<16x32xf32>
    %cst_12 = arith.constant dense<0.000000e+00> : vector<80x32xf32>
    %13 = tpu.matmul %10, %12, %cst_12 {dimension_numbers = #tpu.dot_dimension_numbers<[1], [0], [0], [1], [0, 0, 1, 1], [], []>} : vector<80x16xf32>, vector<16x32xf32>, vector<80x32xf32> -> vector<80x32xf32>
    %14 = arith.addf %8, %13 : vector<80x32xf32>
    %c0_13 = arith.constant 0 : index
    %c9 = arith.constant 9 : index
    %c0_14 = arith.constant 0 : index
    %15 = vector.load %arg1[%c0_13, %c9, %c0_14] : memref<1x96x16xf32, #tpu.memory_space<vmem>>, vector<1x80x16xf32>
    %16 = vector.shape_cast %15 : vector<1x80x16xf32> to vector<80x16xf32>
    %c2 = arith.constant 2 : index
    %c0_15 = arith.constant 0 : index
    %c0_16 = arith.constant 0 : index
    %17 = vector.load %arg2[%c2, %c0_15, %c0_16] : memref<4x16x32xf32, #tpu.memory_space<vmem>>, vector<1x16x32xf32>
    %18 = vector.shape_cast %17 : vector<1x16x32xf32> to vector<16x32xf32>
    %cst_17 = arith.constant dense<0.000000e+00> : vector<80x32xf32>
    %19 = tpu.matmul %16, %18, %cst_17 {dimension_numbers = #tpu.dot_dimension_numbers<[1], [0], [0], [1], [0, 0, 1, 1], [], []>} : vector<80x16xf32>, vector<16x32xf32>, vector<80x32xf32> -> vector<80x32xf32>
    %20 = arith.addf %14, %19 : vector<80x32xf32>
    %c0_18 = arith.constant 0 : index
    %c10 = arith.constant 10 : index
    %c0_19 = arith.constant 0 : index
    %21 = vector.load %arg1[%c0_18, %c10, %c0_19] : memref<1x96x16xf32, #tpu.memory_space<vmem>>, vector<1x80x16xf32>
    %22 = vector.shape_cast %21 : vector<1x80x16xf32> to vector<80x16xf32>
    %c3 = arith.constant 3 : index
    %c0_20 = arith.constant 0 : index
    %c0_21 = arith.constant 0 : index
    %23 = vector.load %arg2[%c3, %c0_20, %c0_21] : memref<4x16x32xf32, #tpu.memory_space<vmem>>, vector<1x16x32xf32>
    %24 = vector.shape_cast %23 : vector<1x16x32xf32> to vector<16x32xf32>
    %cst_22 = arith.constant dense<0.000000e+00> : vector<80x32xf32>
    %25 = tpu.matmul %22, %24, %cst_22 {dimension_numbers = #tpu.dot_dimension_numbers<[1], [0], [0], [1], [0, 0, 1, 1], [], []>} : vector<80x16xf32>, vector<16x32xf32>, vector<80x32xf32> -> vector<80x32xf32>
    %26 = arith.addf %20, %25 : vector<80x32xf32>
    %cst_23 = arith.constant 0.000000e+00 : f32
    %27 = vector.broadcast %cst_23 : f32 to vector<80x32xf32>
    %28 = arith.cmpf oge, %26, %27 : vector<80x32xf32>
    %cst_24 = arith.constant 2.000000e-01 : f32
    %29 = vector.broadcast %cst_24 : f32 to vector<80x32xf32>
    %30 = arith.mulf %29, %26 : vector<80x32xf32>
    %31 = arith.select %28, %26, %30 : vector<80x32xi1>, vector<80x32xf32>
    %c0_25 = arith.constant 0 : index
    %c0_26 = arith.constant 0 : index
    %32 = vector.load %arg7[%c0_25, %c0_26] : memref<80x32xf32, #tpu.memory_space<vmem>>, vector<80x32xf32>
    tpu.vector_store %arg7[%c0_25, %c0_26], %31 {strides = array<i32>} : memref<80x32xf32, #tpu.memory_space<vmem>>, vector<80x32xf32>,
    %c0_27 = arith.constant 0 : index
    %c0_28 = arith.constant 0 : index
    %33 = vector.load %arg5[%c0_27, %c0_28] : memref<1x128xf32, #tpu.memory_space<vmem>>, vector<1x128xf32>
    %34 = vector.shape_cast %33 : vector<1x128xf32> to vector<1x128xf32>
    %35 = vector.broadcast %34 : vector<1x128xf32> to vector<48x128xf32>
    %c0_29 = arith.constant 0 : index
    %c0_30 = arith.constant 0 : index
    %36 = vector.load %arg7[%c0_29, %c0_30] : memref<80x32xf32, #tpu.memory_space<vmem>>, vector<48x32xf32>
    %c0_31 = arith.constant 0 : index
    %c0_32 = arith.constant 0 : index
    %c0_33 = arith.constant 0 : index
    %37 = vector.load %arg4[%c0_31, %c0_32, %c0_33] : memref<16x32x128xf32, #tpu.memory_space<vmem>>, vector<1x32x128xf32>
    %38 = vector.shape_cast %37 : vector<1x32x128xf32> to vector<32x128xf32>
    %cst_34 = arith.constant dense<0.000000e+00> : vector<48x128xf32>
    %39 = tpu.matmul %36, %38, %cst_34 {dimension_numbers = #tpu.dot_dimension_numbers<[1], [0], [0], [1], [0, 0, 1, 1], [], []>} : vector<48x32xf32>, vector<32x128xf32>, vector<48x128xf32> -> vector<48x128xf32>
    %40 = arith.addf %35, %39 : vector<48x128xf32>
    %c1_35 = arith.constant 1 : index
    %c0_36 = arith.constant 0 : index
    %41 = vector.load %arg7[%c1_35, %c0_36] : memref<80x32xf32, #tpu.memory_space<vmem>>, vector<48x32xf32>
    %c1_37 = arith.constant 1 : index
    %c0_38 = arith.constant 0 : index
    %c0_39 = arith.constant 0 : index
    %42 = vector.load %arg4[%c1_37, %c0_38, %c0_39] : memref<16x32x128xf32, #tpu.memory_space<vmem>>, vector<1x32x128xf32>
    %43 = vector.shape_cast %42 : vector<1x32x128xf32> to vector<32x128xf32>
    %cst_40 = arith.constant dense<0.000000e+00> : vector<48x128xf32>
    %44 = tpu.matmul %41, %43, %cst_40 {dimension_numbers = #tpu.dot_dimension_numbers<[1], [0], [0], [1], [0, 0, 1, 1], [], []>} : vector<48x32xf32>, vector<32x128xf32>, vector<48x128xf32> -> vector<48x128xf32>
    %45 = arith.addf %40, %44 : vector<48x128xf32>
    %c2_41 = arith.constant 2 : index
    %c0_42 = arith.constant 0 : index
    %46 = vector.load %arg7[%c2_41, %c0_42] : memref<80x32xf32, #tpu.memory_space<vmem>>, vector<48x32xf32>
    %c2_43 = arith.constant 2 : index
    %c0_44 = arith.constant 0 : index
    %c0_45 = arith.constant 0 : index
    %47 = vector.load %arg4[%c2_43, %c0_44, %c0_45] : memref<16x32x128xf32, #tpu.memory_space<vmem>>, vector<1x32x128xf32>
    %48 = vector.shape_cast %47 : vector<1x32x128xf32> to vector<32x128xf32>
    %cst_46 = arith.constant dense<0.000000e+00> : vector<48x128xf32>
    %49 = tpu.matmul %46, %48, %cst_46 {dimension_numbers = #tpu.dot_dimension_numbers<[1], [0], [0], [1], [0, 0, 1, 1], [], []>} : vector<48x32xf32>, vector<32x128xf32>, vector<48x128xf32> -> vector<48x128xf32>
    %50 = arith.addf %45, %49 : vector<48x128xf32>
    %c3_47 = arith.constant 3 : index
    %c0_48 = arith.constant 0 : index
    %51 = vector.load %arg7[%c3_47, %c0_48] : memref<80x32xf32, #tpu.memory_space<vmem>>, vector<48x32xf32>
    %c3_49 = arith.constant 3 : index
    %c0_50 = arith.constant 0 : index
    %c0_51 = arith.constant 0 : index
    %52 = vector.load %arg4[%c3_49, %c0_50, %c0_51] : memref<16x32x128xf32, #tpu.memory_space<vmem>>, vector<1x32x128xf32>
    %53 = vector.shape_cast %52 : vector<1x32x128xf32> to vector<32x128xf32>
    %cst_52 = arith.constant dense<0.000000e+00> : vector<48x128xf32>
    %54 = tpu.matmul %51, %53, %cst_52 {dimension_numbers = #tpu.dot_dimension_numbers<[1], [0], [0], [1], [0, 0, 1, 1], [], []>} : vector<48x32xf32>, vector<32x128xf32>, vector<48x128xf32> -> vector<48x128xf32>
    %55 = arith.addf %50, %54 : vector<48x128xf32>
    %c9_53 = arith.constant 9 : index
    %c0_54 = arith.constant 0 : index
    %56 = vector.load %arg7[%c9_53, %c0_54] : memref<80x32xf32, #tpu.memory_space<vmem>>, vector<48x32xf32>
    %c4 = arith.constant 4 : index
    %c0_55 = arith.constant 0 : index
    %c0_56 = arith.constant 0 : index
    %57 = vector.load %arg4[%c4, %c0_55, %c0_56] : memref<16x32x128xf32, #tpu.memory_space<vmem>>, vector<1x32x128xf32>
    %58 = vector.shape_cast %57 : vector<1x32x128xf32> to vector<32x128xf32>
    %cst_57 = arith.constant dense<0.000000e+00> : vector<48x128xf32>
    %59 = tpu.matmul %56, %58, %cst_57 {dimension_numbers = #tpu.dot_dimension_numbers<[1], [0], [0], [1], [0, 0, 1, 1], [], []>} : vector<48x32xf32>, vector<32x128xf32>, vector<48x128xf32> -> vector<48x128xf32>
    %60 = arith.addf %55, %59 : vector<48x128xf32>
    %c10_58 = arith.constant 10 : index
    %c0_59 = arith.constant 0 : index
    %61 = vector.load %arg7[%c10_58, %c0_59] : memref<80x32xf32, #tpu.memory_space<vmem>>, vector<48x32xf32>
    %c5 = arith.constant 5 : index
    %c0_60 = arith.constant 0 : index
    %c0_61 = arith.constant 0 : index
    %62 = vector.load %arg4[%c5, %c0_60, %c0_61] : memref<16x32x128xf32, #tpu.memory_space<vmem>>, vector<1x32x128xf32>
    %63 = vector.shape_cast %62 : vector<1x32x128xf32> to vector<32x128xf32>
    %cst_62 = arith.constant dense<0.000000e+00> : vector<48x128xf32>
    %64 = tpu.matmul %61, %63, %cst_62 {dimension_numbers = #tpu.dot_dimension_numbers<[1], [0], [0], [1], [0, 0, 1, 1], [], []>} : vector<48x32xf32>, vector<32x128xf32>, vector<48x128xf32> -> vector<48x128xf32>
    %65 = arith.addf %60, %64 : vector<48x128xf32>
    %c11 = arith.constant 11 : index
    %c0_63 = arith.constant 0 : index
    %66 = vector.load %arg7[%c11, %c0_63] : memref<80x32xf32, #tpu.memory_space<vmem>>, vector<48x32xf32>
    %c6 = arith.constant 6 : index
    %c0_64 = arith.constant 0 : index
    %c0_65 = arith.constant 0 : index
    %67 = vector.load %arg4[%c6, %c0_64, %c0_65] : memref<16x32x128xf32, #tpu.memory_space<vmem>>, vector<1x32x128xf32>
    %68 = vector.shape_cast %67 : vector<1x32x128xf32> to vector<32x128xf32>
    %cst_66 = arith.constant dense<0.000000e+00> : vector<48x128xf32>
    %69 = tpu.matmul %66, %68, %cst_66 {dimension_numbers = #tpu.dot_dimension_numbers<[1], [0], [0], [1], [0, 0, 1, 1], [], []>} : vector<48x32xf32>, vector<32x128xf32>, vector<48x128xf32> -> vector<48x128xf32>
    %70 = arith.addf %65, %69 : vector<48x128xf32>
    %c12 = arith.constant 12 : index
    %c0_67 = arith.constant 0 : index
    %71 = vector.load %arg7[%c12, %c0_67] : memref<80x32xf32, #tpu.memory_space<vmem>>, vector<48x32xf32>
    %c7 = arith.constant 7 : index
    %c0_68 = arith.constant 0 : index
    %c0_69 = arith.constant 0 : index
    %72 = vector.load %arg4[%c7, %c0_68, %c0_69] : memref<16x32x128xf32, #tpu.memory_space<vmem>>, vector<1x32x128xf32>
    %73 = vector.shape_cast %72 : vector<1x32x128xf32> to vector<32x128xf32>
    %cst_70 = arith.constant dense<0.000000e+00> : vector<48x128xf32>
    %74 = tpu.matmul %71, %73, %cst_70 {dimension_numbers = #tpu.dot_dimension_numbers<[1], [0], [0], [1], [0, 0, 1, 1], [], []>} : vector<48x32xf32>, vector<32x128xf32>, vector<48x128xf32> -> vector<48x128xf32>
    %75 = arith.addf %70, %74 : vector<48x128xf32>
    %c18 = arith.constant 18 : index
    %c0_71 = arith.constant 0 : index
    %76 = vector.load %arg7[%c18, %c0_71] : memref<80x32xf32, #tpu.memory_space<vmem>>, vector<48x32xf32>
    %c8 = arith.constant 8 : index
    %c0_72 = arith.constant 0 : index
    %c0_73 = arith.constant 0 : index
    %77 = vector.load %arg4[%c8, %c0_72, %c0_73] : memref<16x32x128xf32, #tpu.memory_space<vmem>>, vector<1x32x128xf32>
    %78 = vector.shape_cast %77 : vector<1x32x128xf32> to vector<32x128xf32>
    %cst_74 = arith.constant dense<0.000000e+00> : vector<48x128xf32>
    %79 = tpu.matmul %76, %78, %cst_74 {dimension_numbers = #tpu.dot_dimension_numbers<[1], [0], [0], [1], [0, 0, 1, 1], [], []>} : vector<48x32xf32>, vector<32x128xf32>, vector<48x128xf32> -> vector<48x128xf32>
    %80 = arith.addf %75, %79 : vector<48x128xf32>
    %c19 = arith.constant 19 : index
    %c0_75 = arith.constant 0 : index
    %81 = vector.load %arg7[%c19, %c0_75] : memref<80x32xf32, #tpu.memory_space<vmem>>, vector<48x32xf32>
    %c9_76 = arith.constant 9 : index
    %c0_77 = arith.constant 0 : index
    %c0_78 = arith.constant 0 : index
    %82 = vector.load %arg4[%c9_76, %c0_77, %c0_78] : memref<16x32x128xf32, #tpu.memory_space<vmem>>, vector<1x32x128xf32>
    %83 = vector.shape_cast %82 : vector<1x32x128xf32> to vector<32x128xf32>
    %cst_79 = arith.constant dense<0.000000e+00> : vector<48x128xf32>
    %84 = tpu.matmul %81, %83, %cst_79 {dimension_numbers = #tpu.dot_dimension_numbers<[1], [0], [0], [1], [0, 0, 1, 1], [], []>} : vector<48x32xf32>, vector<32x128xf32>, vector<48x128xf32> -> vector<48x128xf32>
    %85 = arith.addf %80, %84 : vector<48x128xf32>
    %c20 = arith.constant 20 : index
    %c0_80 = arith.constant 0 : index
    %86 = vector.load %arg7[%c20, %c0_80] : memref<80x32xf32, #tpu.memory_space<vmem>>, vector<48x32xf32>
    %c10_81 = arith.constant 10 : index
    %c0_82 = arith.constant 0 : index
    %c0_83 = arith.constant 0 : index
    %87 = vector.load %arg4[%c10_81, %c0_82, %c0_83] : memref<16x32x128xf32, #tpu.memory_space<vmem>>, vector<1x32x128xf32>
    %88 = vector.shape_cast %87 : vector<1x32x128xf32> to vector<32x128xf32>
    %cst_84 = arith.constant dense<0.000000e+00> : vector<48x128xf32>
    %89 = tpu.matmul %86, %88, %cst_84 {dimension_numbers = #tpu.dot_dimension_numbers<[1], [0], [0], [1], [0, 0, 1, 1], [], []>} : vector<48x32xf32>, vector<32x128xf32>, vector<48x128xf32> -> vector<48x128xf32>
    %90 = arith.addf %85, %89 : vector<48x128xf32>
    %c21 = arith.constant 21 : index
    %c0_85 = arith.constant 0 : index
    %91 = vector.load %arg7[%c21, %c0_85] : memref<80x32xf32, #tpu.memory_space<vmem>>, vector<48x32xf32>
    %c11_86 = arith.constant 11 : index
    %c0_87 = arith.constant 0 : index
    %c0_88 = arith.constant 0 : index
    %92 = vector.load %arg4[%c11_86, %c0_87, %c0_88] : memref<16x32x128xf32, #tpu.memory_space<vmem>>, vector<1x32x128xf32>
    %93 = vector.shape_cast %92 : vector<1x32x128xf32> to vector<32x128xf32>
    %cst_89 = arith.constant dense<0.000000e+00> : vector<48x128xf32>
    %94 = tpu.matmul %91, %93, %cst_89 {dimension_numbers = #tpu.dot_dimension_numbers<[1], [0], [0], [1], [0, 0, 1, 1], [], []>} : vector<48x32xf32>, vector<32x128xf32>, vector<48x128xf32> -> vector<48x128xf32>
    %95 = arith.addf %90, %94 : vector<48x128xf32>
    %c27 = arith.constant 27 : index
    %c0_90 = arith.constant 0 : index
    %96 = vector.load %arg7[%c27, %c0_90] : memref<80x32xf32, #tpu.memory_space<vmem>>, vector<48x32xf32>
    %c12_91 = arith.constant 12 : index
    %c0_92 = arith.constant 0 : index
    %c0_93 = arith.constant 0 : index
    %97 = vector.load %arg4[%c12_91, %c0_92, %c0_93] : memref<16x32x128xf32, #tpu.memory_space<vmem>>, vector<1x32x128xf32>
    %98 = vector.shape_cast %97 : vector<1x32x128xf32> to vector<32x128xf32>
    %cst_94 = arith.constant dense<0.000000e+00> : vector<48x128xf32>
    %99 = tpu.matmul %96, %98, %cst_94 {dimension_numbers = #tpu.dot_dimension_numbers<[1], [0], [0], [1], [0, 0, 1, 1], [], []>} : vector<48x32xf32>, vector<32x128xf32>, vector<48x128xf32> -> vector<48x128xf32>
    %100 = arith.addf %95, %99 : vector<48x128xf32>
    %c28 = arith.constant 28 : index
    %c0_95 = arith.constant 0 : index
    %101 = vector.load %arg7[%c28, %c0_95] : memref<80x32xf32, #tpu.memory_space<vmem>>, vector<48x32xf32>
    %c13 = arith.constant 13 : index
    %c0_96 = arith.constant 0 : index
    %c0_97 = arith.constant 0 : index
    %102 = vector.load %arg4[%c13, %c0_96, %c0_97] : memref<16x32x128xf32, #tpu.memory_space<vmem>>, vector<1x32x128xf32>
    %103 = vector.shape_cast %102 : vector<1x32x128xf32> to vector<32x128xf32>
    %cst_98 = arith.constant dense<0.000000e+00> : vector<48x128xf32>
    %104 = tpu.matmul %101, %103, %cst_98 {dimension_numbers = #tpu.dot_dimension_numbers<[1], [0], [0], [1], [0, 0, 1, 1], [], []>} : vector<48x32xf32>, vector<32x128xf32>, vector<48x128xf32> -> vector<48x128xf32>
    %105 = arith.addf %100, %104 : vector<48x128xf32>
    %c29 = arith.constant 29 : index
    %c0_99 = arith.constant 0 : index
    %106 = vector.load %arg7[%c29, %c0_99] : memref<80x32xf32, #tpu.memory_space<vmem>>, vector<48x32xf32>
    %c14 = arith.constant 14 : index
    %c0_100 = arith.constant 0 : index
    %c0_101 = arith.constant 0 : index
    %107 = vector.load %arg4[%c14, %c0_100, %c0_101] : memref<16x32x128xf32, #tpu.memory_space<vmem>>, vector<1x32x128xf32>
    %108 = vector.shape_cast %107 : vector<1x32x128xf32> to vector<32x128xf32>
    %cst_102 = arith.constant dense<0.000000e+00> : vector<48x128xf32>
    %109 = tpu.matmul %106, %108, %cst_102 {dimension_numbers = #tpu.dot_dimension_numbers<[1], [0], [0], [1], [0, 0, 1, 1], [], []>} : vector<48x32xf32>, vector<32x128xf32>, vector<48x128xf32> -> vector<48x128xf32>
    %110 = arith.addf %105, %109 : vector<48x128xf32>
    %c30 = arith.constant 30 : index
    %c0_103 = arith.constant 0 : index
    %111 = vector.load %arg7[%c30, %c0_103] : memref<80x32xf32, #tpu.memory_space<vmem>>, vector<48x32xf32>
    %c15 = arith.constant 15 : index
    %c0_104 = arith.constant 0 : index
    %c0_105 = arith.constant 0 : index
    %112 = vector.load %arg4[%c15, %c0_104, %c0_105] : memref<16x32x128xf32, #tpu.memory_space<vmem>>, vector<1x32x128xf32>
    %113 = vector.shape_cast %112 : vector<1x32x128xf32> to vector<32x128xf32>
    %cst_106 = arith.constant dense<0.000000e+00> : vector<48x128xf32>
    %114 = tpu.matmul %111, %113, %cst_106 {dimension_numbers = #tpu.dot_dimension_numbers<[1], [0], [0], [1], [0, 0, 1, 1], [], []>} : vector<48x32xf32>, vector<32x128xf32>, vector<48x128xf32> -> vector<48x128xf32>
    %115 = arith.addf %110, %114 : vector<48x128xf32>
    %c0_107 = arith.constant 0 : index
    %c0_108 = arith.constant 0 : index
    %c0_109 = arith.constant 0 : index
    %116 = vector.load %arg6[%c0_107, %c0_108, %c0_109] : memref<1x48x128xf32, #tpu.memory_space<vmem>>, vector<1x48x128xf32>
    %117 = vector.shape_cast %116 : vector<1x48x128xf32> to vector<48x128xf32>
    %118 = vector.shape_cast %115 : vector<48x128xf32> to vector<1x48x128xf32>
    tpu.vector_store %arg6[%c0_107, %c0_108, %c0_109], %118 {strides = array<i32>} : memref<1x48x128xf32, #tpu.memory_space<vmem>>, vector<1x48x128xf32>,
    return
  }
  func.func @transform_0(%arg0: i32) -> (i32, i32, i32) {
    %c0_i32 = arith.constant 0 : i32
    %c0_i32_0 = arith.constant 0 : i32
    %c0_i32_1 = arith.constant 0 : i32
    return %arg0, %c0_i32, %c0_i32_0 : i32, i32, i32
  }
  func.func @transform_1(%arg0: i32) -> (i32, i32, i32) {
    %c0_i32 = arith.constant 0 : i32
    %c0_i32_0 = arith.constant 0 : i32
    %c0_i32_1 = arith.constant 0 : i32
    %c0_i32_2 = arith.constant 0 : i32
    return %c0_i32, %c0_i32_0, %c0_i32_1 : i32, i32, i32
  }
  func.func @transform_2(%arg0: i32) -> (i32, i32) {
    %c0_i32 = arith.constant 0 : i32
    %c0_i32_0 = arith.constant 0 : i32
    %c0_i32_1 = arith.constant 0 : i32
    return %c0_i32, %c0_i32_0 : i32, i32
  }
  func.func @transform_3(%arg0: i32) -> (i32, i32, i32) {
    %c0_i32 = arith.constant 0 : i32
    %c0_i32_0 = arith.constant 0 : i32
    %c0_i32_1 = arith.constant 0 : i32
    %c0_i32_2 = arith.constant 0 : i32
    return %c0_i32, %c0_i32_0, %c0_i32_1 : i32, i32, i32
  }
  func.func @transform_4(%arg0: i32) -> (i32, i32) {
    %c0_i32 = arith.constant 0 : i32
    %c0_i32_0 = arith.constant 0 : i32
    %c0_i32_1 = arith.constant 0 : i32
    return %c0_i32, %c0_i32_0 : i32, i32
  }
  func.func @transform_5(%arg0: i32) -> (i32, i32, i32) {
    %c0_i32 = arith.constant 0 : i32
    %c0_i32_0 = arith.constant 0 : i32
    %c0_i32_1 = arith.constant 0 : i32
    return %arg0, %c0_i32, %c0_i32_0 : i32, i32, i32
  }
}

</mosaic_0001>

<llo_original>
// kernel: spatial_discriminator.1
$region0: #{spatial_discriminator.1}
  #allocation0 [shape = 'u32[]', space=smem, size = 0x4, offset = 0x4, fixed_abs, tag = 'smem constant byte address 0x4 - core index']
  #allocation1 [shape = 'u32[144,128]{1,0:T(1,128)}', space=vmem, size = 0x12000, scoped, tag = 'internal scratch']
  #allocation2 [shape = 'f32[80,32]{1,0:T(8,128)}', space=vmem, size = 0xa000, scoped, tag = 'scratch operand']
  %s0 = inlined_call_operand.vmem [shape: f32[2,96,16], index: 0, kind: input, shape index: {}]
  %s1 = inlined_call_operand.vmem [shape: f32[4,16,32], index: 1, kind: input, shape index: {}]
  %s2 = inlined_call_operand.vmem [shape: f32[1,32], index: 2, kind: input, shape index: {}]
  %s3 = inlined_call_operand.vmem [shape: f32[16,32,128], index: 3, kind: input, shape index: {}]
  %s4 = inlined_call_operand.vmem [shape: f32[1,128], index: 4, kind: input, shape index: {}]
  %s5 = inlined_call_operand.vmem [shape: f32[2,48,128], index: 5, kind: output, shape index: {}]
  %s6 = sld [smem:[#allocation0]]
  $region53: #{spatial_discriminator.1} parent=0
    _
  %s8 = ssub.s32 1, %s6
  %s9 = scalar_select 0, %s8, %s6
  loop: start=0, step=1, limit=4
  $region2: #{spatial_discriminator.1} parent=0 // loop_pre_header
    _
  $region3: #{spatial_discriminator.1} parent=0 // loop_header
    %s11 = sphi 0, %s15
    %p12 = scmp.ge.s32.totalorder %s11, 4
    %s21 = sphi 0, %s23
    %s24 = sphi 0, %s21
    %s25 = sphi 0, %s24
    %s41 = sphi 0, %s25
    %s45 = sphi 0, %s45
    %s47 = sphi 0, %s45
    %s48 = sphi 0, %s47
    %s62 = sphi 0, %s48
    %s66 = sphi 0, %s66
    %s68 = sphi 0, %s66
    %s69 = sphi 0, %s68
    %s83 = sphi 0, %s69
    %s87 = sphi 0, %s87
    %s89 = sphi 0, %s87
    %s90 = sphi 0, %s89
    %s104 = sphi 0, %s90
    %s108 = sphi 0, %s108
    %s110 = sphi 0, %s108
    %s111 = sphi 0, %s110
    %s125 = sphi 0, %s111
    %s131 = sphi 0, %s133
    %s134 = sphi 0, %s131
    %s135 = sphi 0, %s134
    %s151 = sphi 0, %s135
  $region4: #{spatial_discriminator.1} parent=0 // loop_header_branch
    %14 = sbr.rel (%p12) target = $region8
  $region5: #{spatial_discriminator.1} parent=0 // loop_body
    %s16 = ssub.s32 %s11, 1
    %s17 = ssub.s32 %s11, 2
    %s18 = sadd.s32 %s11, 1
    %s19 = ssub.s32 %s11, %s18
    %p20 = scmp.eq.s32.totalorder %s19, 0
    %s22 = sadd.s32 %s21, 1
    %s23 = scalar_select %p20, %s21, %s22
    %p26 = pneg %p20
    %p27 = scmp.eq.s32.totalorder %s11, 1
    %p28 = por %p26, %p27
    %p29 = scmp.ne.s32.totalorder %s21, %s24
    %p30 = scmp.eq.s32.totalorder %s11, 0
    %p31 = por %p29, %p30
    %p32 = scmp.ne.s32.totalorder %s21, %s24
    %p33 = scmp.eq.s32.totalorder %s16, 1
    %p34 = por %p32, %p33
    %p35 = scmp.ne.s32.totalorder %s24, %s25
    %p36 = scmp.eq.s32.totalorder %s16, 0
    %p37 = por %p35, %p36
    %p38 = scmp.ne.s32.totalorder %s24, %s25
    %p39 = scmp.eq.s32.totalorder %s17, 1
    %p40 = por %p38, %p39
    %p42 = scmp.ne.s32.totalorder %s25, %s41
    %p43 = scmp.eq.s32.totalorder %s17, 0
    %p44 = por %p42, %p43
    %s46 = sadd.s32 %s45, 1
    %p49 = scmp.eq.s32.totalorder %s11, 1
    %p50 = scmp.ne.s32.totalorder %s45, %s47
    %p51 = scmp.eq.s32.totalorder %s11, 0
    %p52 = por %p50, %p51
    %p53 = scmp.ne.s32.totalorder %s45, %s47
    %p54 = scmp.eq.s32.totalorder %s16, 1
    %p55 = por %p53, %p54
    %p56 = scmp.ne.s32.totalorder %s47, %s48
    %p57 = scmp.eq.s32.totalorder %s16, 0
    %p58 = por %p56, %p57
    %p59 = scmp.ne.s32.totalorder %s47, %s48
    %p60 = scmp.eq.s32.totalorder %s17, 1
    %p61 = por %p59, %p60
    %p63 = scmp.ne.s32.totalorder %s48, %s62
    %p64 = scmp.eq.s32.totalorder %s17, 0
    %p65 = por %p63, %p64
    %s67 = sadd.s32 %s66, 1
    %p70 = scmp.eq.s32.totalorder %s11, 1
    %p71 = scmp.ne.s32.totalorder %s66, %s68
    %p72 = scmp.eq.s32.totalorder %s11, 0
    %p73 = por %p71, %p72
    %p74 = scmp.ne.s32.totalorder %s66, %s68
    %p75 = scmp.eq.s32.totalorder %s16, 1
    %p76 = por %p74, %p75
    %p77 = scmp.ne.s32.totalorder %s68, %s69
    %p78 = scmp.eq.s32.totalorder %s16, 0
    %p79 = por %p77, %p78
    %p80 = scmp.ne.s32.totalorder %s68, %s69
    %p81 = scmp.eq.s32.totalorder %s17, 1
    %p82 = por %p80, %p81
    %p84 = scmp.ne.s32.totalorder %s69, %s83
    %p85 = scmp.eq.s32.totalorder %s17, 0
    %p86 = por %p84, %p85
    %s88 = sadd.s32 %s87, 1
    %p91 = scmp.eq.s32.totalorder %s11, 1
    %p92 = scmp.ne.s32.totalorder %s87, %s89
    %p93 = scmp.eq.s32.totalorder %s11, 0
    %p94 = por %p92, %p93
    %p95 = scmp.ne.s32.totalorder %s87, %s89
    %p96 = scmp.eq.s32.totalorder %s16, 1
    %p97 = por %p95, %p96
    %p98 = scmp.ne.s32.totalorder %s89, %s90
    %p99 = scmp.eq.s32.totalorder %s16, 0
    %p100 = por %p98, %p99
    %p101 = scmp.ne.s32.totalorder %s89, %s90
    %p102 = scmp.eq.s32.totalorder %s17, 1
    %p103 = por %p101, %p102
    %p105 = scmp.ne.s32.totalorder %s90, %s104
    %p106 = scmp.eq.s32.totalorder %s17, 0
    %p107 = por %p105, %p106
    %s109 = sadd.s32 %s108, 1
    %p112 = scmp.eq.s32.totalorder %s11, 1
    %p113 = scmp.ne.s32.totalorder %s108, %s110
    %p114 = scmp.eq.s32.totalorder %s11, 0
    %p115 = por %p113, %p114
    %p116 = scmp.ne.s32.totalorder %s108, %s110
    %p117 = scmp.eq.s32.totalorder %s16, 1
    %p118 = por %p116, %p117
    %p119 = scmp.ne.s32.totalorder %s110, %s111
    %p120 = scmp.eq.s32.totalorder %s16, 0
    %p121 = por %p119, %p120
    %p122 = scmp.ne.s32.totalorder %s110, %s111
    %p123 = scmp.eq.s32.totalorder %s17, 1
    %p124 = por %p122, %p123
    %p126 = scmp.ne.s32.totalorder %s111, %s125
    %p127 = scmp.eq.s32.totalorder %s17, 0
    %p128 = por %p126, %p127
    %s129 = ssub.s32 %s11, %s18
    %p130 = scmp.eq.s32.totalorder %s129, 0
    %s132 = sadd.s32 %s131, 1
    %s133 = scalar_select %p130, %s131, %s132
    %p136 = pneg %p130
    %p137 = scmp.eq.s32.totalorder %s11, 1
    %p138 = por %p136, %p137
    %p139 = scmp.ne.s32.totalorder %s131, %s134
    %p140 = scmp.eq.s32.totalorder %s11, 0
    %p141 = por %p139, %p140
    %p142 = scmp.ne.s32.totalorder %s131, %s134
    %p143 = scmp.eq.s32.totalorder %s16, 1
    %p144 = por %p142, %p143
    %p145 = scmp.ne.s32.totalorder %s134, %s135
    %p146 = scmp.eq.s32.totalorder %s16, 0
    %p147 = por %p145, %p146
    %p148 = scmp.ne.s32.totalorder %s134, %s135
    %p149 = scmp.eq.s32.totalorder %s17, 1
    %p150 = por %p148, %p149
    %p152 = scmp.ne.s32.totalorder %s135, %s151
    %p153 = scmp.eq.s32.totalorder %s17, 0
    %p154 = por %p152, %p153
    %p155 = scmp.le.s32.totalorder 1, %s11
    %p156 = scmp.lt.s32.totalorder %s11, 3
    %p157 = pnand %p155, %p156
    %p158 = pneg %p157
    // Predicated region
    $region9: #{spatial_discriminator.1} parent=5 // pred_check
      _
    $region10: #{spatial_discriminator.1} parent=5 // pred_check_branch
      %160 = sbr.rel (%p157) target = $region12
    $region11: #{spatial_discriminator.1} parent=5 // pred_region
      %s161 = ssub.s32 %s11, 1
      // Predicated region
      $region13: #{spatial_discriminator.1} parent=11 // pred_check
        %p162 = pneg %p58
      $region14: #{spatial_discriminator.1} parent=11 // pred_check_branch
        %164 = sbr.rel (%p162) target = $region16
      $region15: #{spatial_discriminator.1} parent=11 // pred_region
        _
      $region16: #{spatial_discriminator.1} parent=11 // pred_fallthru
        _
      // Predicated region
      $region17: #{spatial_discriminator.1} parent=11 // pred_check
        %p165 = pneg %p79
      $region18: #{spatial_discriminator.1} parent=11 // pred_check_branch
        %167 = sbr.rel (%p165) target = $region20
      $region19: #{spatial_discriminator.1} parent=11 // pred_region
        _
      $region20: #{spatial_discriminator.1} parent=11 // pred_fallthru
        _
      // Predicated region
      $region21: #{spatial_discriminator.1} parent=11 // pred_check
        %p168 = pneg %p100
      $region22: #{spatial_discriminator.1} parent=11 // pred_check_branch
        %170 = sbr.rel (%p168) target = $region24
      $region23: #{spatial_discriminator.1} parent=11 // pred_region
        _
      $region24: #{spatial_discriminator.1} parent=11 // pred_fallthru
        _
      // Predicated region
      $region25: #{spatial_discriminator.1} parent=11 // pred_check
        %p171 = pneg %p121
      $region26: #{spatial_discriminator.1} parent=11 // pred_check_branch
        %173 = sbr.rel (%p171) target = $region28
      $region27: #{spatial_discriminator.1} parent=11 // pred_region
        _
      $region28: #{spatial_discriminator.1} parent=11 // pred_fallthru
        _
    $region12: #{spatial_discriminator.1} parent=5 // pred_fallthru
      _
    %p174 = scmp.lt.s32.totalorder %s11, 2
    // Predicated region
    $region29: #{spatial_discriminator.1} parent=5 // pred_check
      %p175 = pneg %p174
    $region30: #{spatial_discriminator.1} parent=5 // pred_check_branch
      %177 = sbr.rel (%p175) target = $region32
    $region31: #{spatial_discriminator.1} parent=5 // pred_region
      // Predicated region
      $region33: #{spatial_discriminator.1} parent=31 // pred_check
        %p178 = pneg %p31
      $region34: #{spatial_discriminator.1} parent=31 // pred_check_branch
        %180 = sbr.rel (%p178) target = $region36
      $region35: #{spatial_discriminator.1} parent=31 // pred_region
        %p181 = scmp.lt.s32.totalorder %s11, 1
        %s182 = scalar_select %p181, %s11, 1
        %s183 = smul.addr %s182, 12
        %s184 = smul.addr %s183, 8
        %s185 = scalar_lea.vmem %s0, %s184
      $region36: #{spatial_discriminator.1} parent=31 // pred_fallthru
        _
    $region32: #{spatial_discriminator.1} parent=5 // pred_fallthru
      _
    %p186 = scmp.le.s32.totalorder 1, %s11
    %p187 = scmp.lt.s32.totalorder %s11, 3
    %p188 = pnand %p186, %p187
    %p189 = pneg %p188
    // Predicated region
    $region37: #{spatial_discriminator.1} parent=5 // pred_check
      _
    $region38: #{spatial_discriminator.1} parent=5 // pred_check_branch
      %191 = sbr.rel (%p188) target = $region40
    $region39: #{spatial_discriminator.1} parent=5 // pred_region
      %s192 = ssub.s32 %s11, 1
      %p193 = scmp.lt.s32.totalorder %s16, 1
      %s194 = scalar_select %p193, %s16, 1
      %s195 = smul.addr %s194, 12
      %s196 = smul.addr %s195, 8
      %s197 = scalar_lea.vmem %s0, %s196
      %p198 = pneg %p37
      %p199 = pneg %p34
      %p200 = pneg %p58
      %p201 = pneg %p55
      %p202 = pneg %p79
      %p203 = pneg %p76
      %p204 = pneg %p100
      %p205 = pneg %p97
      %p206 = pneg %p121
      %p207 = pneg %p118
      %p208 = pneg %p147
      %p209 = pneg %p144
      %p210 = scmp.lt.s32.totalorder %s16, 1
      %s211 = scalar_select %p210, %s16, 1
      %s212 = smul.addr %s211, 6
      %s213 = smul.addr %s212, 8
      %s214 = scalar_lea.vmem %s5, %s213
      %p215 = scmp.lt.s32.totalorder %s16, 1
      %s216 = scalar_select %p215, %s16, 1
      %s217 = smul.addr %s216, 12
      %s218 = smul.addr %s217, 8
      %s219 = scalar_lea.vmem %s0, %s218
      %p220 = scmp.lt.s32.totalorder %s16, 1
      %s221 = scalar_select %p220, %s16, 1
      %s222 = smul.addr %s221, 6
      %s223 = smul.addr %s222, 8
      %s224 = scalar_lea.vmem %s5, %s223
      %v225 = vld [vmem:[%s2] sm:$0x1]
      %v227 = vlaneseq
      %v228 = vshrl.u32 %v227, 7
      %v229 = vsub.s32 0, %v228
      %v230 = vrot.slane %v225, %v229
      %v232 = vld [vmem:[%s219] sm:$0xff]
      %v233 = vld [vmem:[%s219 + $0x8] sm:$0xff]
      %v234 = vld [vmem:[%s219 + $0x10] sm:$0xff]
      %v235 = vld [vmem:[%s219 + $0x18] sm:$0xff]
      %v236 = vld [vmem:[%s219 + $0x20] sm:$0xff]
      %v237 = vld [vmem:[%s219 + $0x28] sm:$0xff]
      %v238 = vld [vmem:[%s219 + $0x30] sm:$0xff]
      %v239 = vld [vmem:[%s219 + $0x38] sm:$0xff]
      %v240 = vld [vmem:[%s219 + $0x40] sm:$0xff]
      %v241 = vld [vmem:[%s219 + $0x48] sm:$0xff]
      %v242 = vld [vmem:[%s1] sm:$0xff]
      %v243 = vld [vmem:[%s1 + $0x8] sm:$0xff]
      %vm244 = vcmask 130048
      %v246 = vsel %vm244, %v232, 0
      %v249 = vsel %vm244, %v233, 0
      %v252 = vsel %vm244, %v234, 0
      %v255 = vsel %vm244, %v235, 0
      %v258 = vsel %vm244, %v236, 0
      %v261 = vsel %vm244, %v237, 0
      %v264 = vsel %vm244, %v238, 0
      %v267 = vsel %vm244, %v239, 0
      %v270 = vsel %vm244, %v240, 0
      %v273 = vsel %vm244, %v241, 0
      %275 = vmatprep.subr.mxu0 0.0
      %276 = vmatpush1.msra.mxu0 %v242
      %277 = vmatprep.subr.mxu0 0.0
      %278 = vmatpush1.msra.mxu0 %v243
      %279 = vmatprep.subr.mxu0 0.0
      %280 = vmatpush1.msra.mxu0 0.0
      %281 = vmatprep.subr.mxu0 0.0
      %282 = vmatpush1.msra.mxu0 0.0
      %283 = vmatprep.subr.mxu0 0.0
      %284 = vmatpush1.msra.mxu0 0.0
      %285 = vmatprep.subr.mxu0 0.0
      %286 = vmatpush1.msra.mxu0 0.0
      %287 = vmatprep.subr.mxu0 0.0
      %288 = vmatpush1.msra.mxu0 0.0
      %289 = vmatprep.subr.mxu0 0.0
      %290 = vmatpush1.msra.mxu0 0.0
      %291 = vmatprep.subr.mxu0 0.0
      %292 = vmatpush1.msra.mxu0 0.0
      %293 = vmatprep.subr.mxu0 0.0
      %294 = vmatpush1.msra.mxu0 0.0
      %295 = vmatprep.subr.mxu0 0.0
      %296 = vmatpush1.msra.mxu0 0.0
      %297 = vmatprep.subr.mxu0 0.0
      %298 = vmatpush1.msra.mxu0 0.0
      %299 = vmatprep.subr.mxu0 0.0
      %300 = vmatpush1.msra.mxu0 0.0
      %301 = vmatprep.subr.mxu0 0.0
      %302 = vmatpush1.msra.mxu0 0.0
      %303 = vmatprep.subr.mxu0 0.0
      %304 = vmatpush1.msra.mxu0 0.0
      %305 = vmatprep.subr.mxu0 0.0
      %306 = vmatpush1.msra.mxu0 0.0
      %307 = vmatprep.subr.mxu0 0.0
      %308 = vmatpush1.msra.mxu0 0.0
      %309 = vmatprep.subr.mxu0 0.0
      %310 = vmatpush1.msra.mxu0 0.0
      %311 = vmatprep.subr.mxu0 0.0
      %312 = vmatpush1.msra.mxu0 0.0
      %313 = vmatprep.subr.mxu0 0.0
      %314 = vmatpush1.msra.mxu0 0.0
      %315 = vmatprep.subr.mxu0 0.0
      %316 = vmatpush1.msra.mxu0 0.0
      %317 = vmatprep.subr.mxu0 0.0
      %318 = vmatpush1.msra.mxu0 0.0
      %319 = vmatprep.subr.mxu0 0.0
      %320 = vmatpush1.msra.mxu0 0.0
      %321 = vmatprep.subr.mxu0 0.0
      %322 = vmatpush1.msra.mxu0 0.0
      %323 = vmatprep.subr.mxu0 0.0
      %324 = vmatpush1.msra.mxu0 0.0
      %325 = vmatprep.subr.mxu0 0.0
      %326 = vmatpush1.msra.mxu0 0.0
      %327 = vmatprep.subr.mxu0 0.0
      %328 = vmatpush1.msra.mxu0 0.0
      %329 = vmatprep.subr.mxu0 0.0
      %330 = vmatpush1.msra.mxu0 0.0
      %331 = vmatprep.subr.mxu0 0.0
      %332 = vmatpush1.msra.mxu0 0.0
      %333 = vmatprep.subr.mxu0 0.0
      %334 = vmatpush1.msra.mxu0 0.0
      %335 = vmatprep.subr.mxu0 0.0
      %336 = vmatpush1.msra.mxu0 0.0
      %337 = vmatprep.subr.mxu0 0.0
      %338 = vmatpush1.msra.mxu0 0.0
      %339 = vmatprep.mubr.f32.mxu0 0.0
      %340 = vmatmul.mubr.f32.gmra.mrb[0].mxu0 %v246
      %v341 = vpop.f32.mrb[0].mxu0
      %v342 = vadd.f32 0.0, %v341
      %v343 = vpop.f32.mrb[0].mxu0
      %344 = vmatprep.mubr.f32.mxu0 0.0
      %345 = vmatmul.mubr.f32.gmra.mrb[0].mxu0 %v249
      %v346 = vpop.f32.mrb[0].mxu0
      %v347 = vadd.f32 0.0, %v346
      %v348 = vpop.f32.mrb[0].mxu0
      %349 = vmatprep.mubr.f32.mxu0 0.0
      %350 = vmatmul.mubr.f32.gmra.mrb[0].mxu0 %v252
      %v351 = vpop.f32.mrb[0].mxu0
      %v352 = vadd.f32 0.0, %v351
      %v353 = vpop.f32.mrb[0].mxu0
      %354 = vmatprep.mubr.f32.mxu0 0.0
      %355 = vmatmul.mubr.f32.gmra.mrb[0].mxu0 %v255
      %v356 = vpop.f32.mrb[0].mxu0
      %v357 = vadd.f32 0.0, %v356
      %v358 = vpop.f32.mrb[0].mxu0
      %359 = vmatprep.mubr.f32.mxu0 0.0
      %360 = vmatmul.mubr.f32.gmra.mrb[0].mxu0 %v258
      %v361 = vpop.f32.mrb[0].mxu0
      %v362 = vadd.f32 0.0, %v361
      %v363 = vpop.f32.mrb[0].mxu0
      %364 = vmatprep.mubr.f32.mxu0 0.0
      %365 = vmatmul.mubr.f32.gmra.mrb[0].mxu0 %v261
      %v366 = vpop.f32.mrb[0].mxu0
      %v367 = vadd.f32 0.0, %v366
      %v368 = vpop.f32.mrb[0].mxu0
      %369 = vmatprep.mubr.f32.mxu0 0.0
      %370 = vmatmul.mubr.f32.gmra.mrb[0].mxu0 %v264
      %v371 = vpop.f32.mrb[0].mxu0
      %v372 = vadd.f32 0.0, %v371
      %v373 = vpop.f32.mrb[0].mxu0
      %374 = vmatprep.mubr.f32.mxu0 0.0
      %375 = vmatmul.mubr.f32.gmra.mrb[0].mxu0 %v267
      %v376 = vpop.f32.mrb[0].mxu0
      %v377 = vadd.f32 0.0, %v376
      %v378 = vpop.f32.mrb[0].mxu0
      %379 = vmatprep.mubr.f32.mxu0 0.0
      %380 = vmatmul.mubr.f32.gmra.mrb[0].mxu0 %v270
      %v381 = vpop.f32.mrb[0].mxu0
      %v382 = vadd.f32 0.0, %v381
      %v383 = vpop.f32.mrb[0].mxu0
      %384 = vmatprep.mubr.f32.mxu0 0.0
      %385 = vmatmul.mubr.f32.gmra.mrb[0].mxu0 %v273
      %v386 = vpop.f32.mrb[0].mxu0
      %v387 = vadd.f32 0.0, %v386
      %v388 = vpop.f32.mrb[0].mxu0
      %389 = vdwg.mxu0
      %v390 = vadd.f32 %v230, %v342
      %v391 = vadd.f32 %v230, %v347
      %v392 = vadd.f32 %v230, %v352
      %v393 = vadd.f32 %v230, %v357
      %v394 = vadd.f32 %v230, %v362
      %v395 = vadd.f32 %v230, %v367
      %v396 = vadd.f32 %v230, %v372
      %v397 = vadd.f32 %v230, %v377
      %v398 = vadd.f32 %v230, %v382
      %v399 = vadd.f32 %v230, %v387
      %v400 = vld [vmem:[%s219 + $0x1] sm:$0xff]
      %v401 = vld [vmem:[%s219 + $0x9] sm:$0xff]
      %v402 = vld [vmem:[%s219 + $0x11] sm:$0xff]
      %v403 = vld [vmem:[%s219 + $0x19] sm:$0xff]
      %v404 = vld [vmem:[%s219 + $0x21] sm:$0xff]
      %v405 = vld [vmem:[%s219 + $0x29] sm:$0xff]
      %v406 = vld [vmem:[%s219 + $0x31] sm:$0xff]
      %v407 = vld [vmem:[%s219 + $0x39] sm:$0xff]
      %v408 = vld [vmem:[%s219 + $0x41] sm:$0xff]
      %v409 = vld [vmem:[%s219 + $0x49] sm:$0xff]
      %s410 = scalar_lea.vmem %s1, 16
      %v411 = vld [vmem:[%s410] sm:$0xff]
      %v412 = vld [vmem:[%s410 + $0x8] sm:$0xff]
      %v414 = vsel %vm244, %v400, 0
      %v417 = vsel %vm244, %v401, 0
      %v420 = vsel %vm244, %v402, 0
      %v423 = vsel %vm244, %v403, 0
      %v426 = vsel %vm244, %v404, 0
      %v429 = vsel %vm244, %v405, 0
      %v432 = vsel %vm244, %v406, 0
      %v435 = vsel %vm244, %v407, 0
      %v438 = vsel %vm244, %v408, 0
      %v441 = vsel %vm244, %v409, 0
      %443 = vmatprep.subr.mxu0 0.0
      %444 = vmatpush1.msra.mxu0 %v411
      %445 = vmatprep.subr.mxu0 0.0
      %446 = vmatpush1.msra.mxu0 %v412
      %447 = vmatprep.subr.mxu0 0.0
      %448 = vmatpush1.msra.mxu0 0.0
      %449 = vmatprep.subr.mxu0 0.0
      %450 = vmatpush1.msra.mxu0 0.0
      %451 = vmatprep.subr.mxu0 0.0
      %452 = vmatpush1.msra.mxu0 0.0
      %453 = vmatprep.subr.mxu0 0.0
      %454 = vmatpush1.msra.mxu0 0.0
      %455 = vmatprep.subr.mxu0 0.0
      %456 = vmatpush1.msra.mxu0 0.0
      %457 = vmatprep.subr.mxu0 0.0
      %458 = vmatpush1.msra.mxu0 0.0
      %459 = vmatprep.subr.mxu0 0.0
      %460 = vmatpush1.msra.mxu0 0.0
      %461 = vmatprep.subr.mxu0 0.0
      %462 = vmatpush1.msra.mxu0 0.0
      %463 = vmatprep.subr.mxu0 0.0
      %464 = vmatpush1.msra.mxu0 0.0
      %465 = vmatprep.subr.mxu0 0.0
      %466 = vmatpush1.msra.mxu0 0.0
      %467 = vmatprep.subr.mxu0 0.0
      %468 = vmatpush1.msra.mxu0 0.0
      %469 = vmatprep.subr.mxu0 0.0
      %470 = vmatpush1.msra.mxu0 0.0
      %471 = vmatprep.subr.mxu0 0.0
      %472 = vmatpush1.msra.mxu0 0.0
      %473 = vmatprep.subr.mxu0 0.0
      %474 = vmatpush1.msra.mxu0 0.0
      %475 = vmatprep.subr.mxu0 0.0
      %476 = vmatpush1.msra.mxu0 0.0
      %477 = vmatprep.subr.mxu0 0.0
      %478 = vmatpush1.msra.mxu0 0.0
      %479 = vmatprep.subr.mxu0 0.0
      %480 = vmatpush1.msra.mxu0 0.0
      %481 = vmatprep.subr.mxu0 0.0
      %482 = vmatpush1.msra.mxu0 0.0
      %483 = vmatprep.subr.mxu0 0.0
      %484 = vmatpush1.msra.mxu0 0.0
      %485 = vmatprep.subr.mxu0 0.0
      %486 = vmatpush1.msra.mxu0 0.0
      %487 = vmatprep.subr.mxu0 0.0
      %488 = vmatpush1.msra.mxu0 0.0
      %489 = vmatprep.subr.mxu0 0.0
      %490 = vmatpush1.msra.mxu0 0.0
      %491 = vmatprep.subr.mxu0 0.0
      %492 = vmatpush1.msra.mxu0 0.0
      %493 = vmatprep.subr.mxu0 0.0
      %494 = vmatpush1.msra.mxu0 0.0
      %495 = vmatprep.subr.mxu0 0.0
      %496 = vmatpush1.msra.mxu0 0.0
      %497 = vmatprep.subr.mxu0 0.0
      %498 = vmatpush1.msra.mxu0 0.0
      %499 = vmatprep.subr.mxu0 0.0
      %500 = vmatpush1.msra.mxu0 0.0
      %501 = vmatprep.subr.mxu0 0.0
      %502 = vmatpush1.msra.mxu0 0.0
      %503 = vmatprep.subr.mxu0 0.0
      %504 = vmatpush1.msra.mxu0 0.0
      %505 = vmatprep.subr.mxu0 0.0
      %506 = vmatpush1.msra.mxu0 0.0
      %507 = vmatprep.mubr.f32.mxu0 0.0
      %508 = vmatmul.mubr.f32.gmra.mrb[0].mxu0 %v414
      %v509 = vpop.f32.mrb[0].mxu0
      %v510 = vadd.f32 0.0, %v509
      %v511 = vpop.f32.mrb[0].mxu0
      %512 = vmatprep.mubr.f32.mxu0 0.0
      %513 = vmatmul.mubr.f32.gmra.mrb[0].mxu0 %v417
      %v514 = vpop.f32.mrb[0].mxu0
      %v515 = vadd.f32 0.0, %v514
      %v516 = vpop.f32.mrb[0].mxu0
      %517 = vmatprep.mubr.f32.mxu0 0.0
      %518 = vmatmul.mubr.f32.gmra.mrb[0].mxu0 %v420
      %v519 = vpop.f32.mrb[0].mxu0
      %v520 = vadd.f32 0.0, %v519
      %v521 = vpop.f32.mrb[0].mxu0
      %522 = vmatprep.mubr.f32.mxu0 0.0
      %523 = vmatmul.mubr.f32.gmra.mrb[0].mxu0 %v423
      %v524 = vpop.f32.mrb[0].mxu0
      %v525 = vadd.f32 0.0, %v524
      %v526 = vpop.f32.mrb[0].mxu0
      %527 = vmatprep.mubr.f32.mxu0 0.0
      %528 = vmatmul.mubr.f32.gmra.mrb[0].mxu0 %v426
      %v529 = vpop.f32.mrb[0].mxu0
      %v530 = vadd.f32 0.0, %v529
      %v531 = vpop.f32.mrb[0].mxu0
      %532 = vmatprep.mubr.f32.mxu0 0.0
      %533 = vmatmul.mubr.f32.gmra.mrb[0].mxu0 %v429
      %v534 = vpop.f32.mrb[0].mxu0
      %v535 = vadd.f32 0.0, %v534
      %v536 = vpop.f32.mrb[0].mxu0
      %537 = vmatprep.mubr.f32.mxu0 0.0
      %538 = vmatmul.mubr.f32.gmra.mrb[0].mxu0 %v432
      %v539 = vpop.f32.mrb[0].mxu0
      %v540 = vadd.f32 0.0, %v539
      %v541 = vpop.f32.mrb[0].mxu0
      %542 = vmatprep.mubr.f32.mxu0 0.0
      %543 = vmatmul.mubr.f32.gmra.mrb[0].mxu0 %v435
      %v544 = vpop.f32.mrb[0].mxu0
      %v545 = vadd.f32 0.0, %v544
      %v546 = vpop.f32.mrb[0].mxu0
      %547 = vmatprep.mubr.f32.mxu0 0.0
      %548 = vmatmul.mubr.f32.gmra.mrb[0].mxu0 %v438
      %v549 = vpop.f32.mrb[0].mxu0
      %v550 = vadd.f32 0.0, %v549
      %v551 = vpop.f32.mrb[0].mxu0
      %552 = vmatprep.mubr.f32.mxu0 0.0
      %553 = vmatmul.mubr.f32.gmra.mrb[0].mxu0 %v441
      %v554 = vpop.f32.mrb[0].mxu0
      %v555 = vadd.f32 0.0, %v554
      %v556 = vpop.f32.mrb[0].mxu0
      %557 = vdwg.mxu0
      %v558 = vadd.f32 %v390, %v510
      %v559 = vadd.f32 %v391, %v515
      %v560 = vadd.f32 %v392, %v520
      %v561 = vadd.f32 %v393, %v525
      %v562 = vadd.f32 %v394, %v530
      %v563 = vadd.f32 %v395, %v535
      %v564 = vadd.f32 %v396, %v540
      %v565 = vadd.f32 %v397, %v545
      %v566 = vadd.f32 %v398, %v550
      %v567 = vadd.f32 %v399, %v555
      %v568 = vld [vmem:[%s219 + $0x9] sm:$0xff]
      %v569 = vld [vmem:[%s219 + $0x11] sm:$0xff]
      %v570 = vld [vmem:[%s219 + $0x19] sm:$0xff]
      %v571 = vld [vmem:[%s219 + $0x21] sm:$0xff]
      %v572 = vld [vmem:[%s219 + $0x29] sm:$0xff]
      %v573 = vld [vmem:[%s219 + $0x31] sm:$0xff]
      %v574 = vld [vmem:[%s219 + $0x39] sm:$0xff]
      %v575 = vld [vmem:[%s219 + $0x41] sm:$0xff]
      %v576 = vld [vmem:[%s219 + $0x49] sm:$0xff]
      %v577 = vld [vmem:[%s219 + $0x51] sm:$0xff]
      %s578 = scalar_lea.vmem %s1, 32
      %v579 = vld [vmem:[%s578] sm:$0xff]
      %v580 = vld [vmem:[%s578 + $0x8] sm:$0xff]
      %v582 = vsel %vm244, %v568, 0
      %v585 = vsel %vm244, %v569, 0
      %v588 = vsel %vm244, %v570, 0
      %v591 = vsel %vm244, %v571, 0
      %v594 = vsel %vm244, %v572, 0
      %v597 = vsel %vm244, %v573, 0
      %v600 = vsel %vm244, %v574, 0
      %v603 = vsel %vm244, %v575, 0
      %v606 = vsel %vm244, %v576, 0
      %v609 = vsel %vm244, %v577, 0
      %611 = vmatprep.subr.mxu0 0.0
      %612 = vmatpush1.msra.mxu0 %v579
      %613 = vmatprep.subr.mxu0 0.0
      %614 = vmatpush1.msra.mxu0 %v580
      %615 = vmatprep.subr.mxu0 0.0
      %616 = vmatpush1.msra.mxu0 0.0
      %617 = vmatprep.subr.mxu0 0.0
      %618 = vmatpush1.msra.mxu0 0.0
      %619 = vmatprep.subr.mxu0 0.0
      %620 = vmatpush1.msra.mxu0 0.0
      %621 = vmatprep.subr.mxu0 0.0
      %622 = vmatpush1.msra.mxu0 0.0
      %623 = vmatprep.subr.mxu0 0.0
      %624 = vmatpush1.msra.mxu0 0.0
      %625 = vmatprep.subr.mxu0 0.0
      %626 = vmatpush1.msra.mxu0 0.0
      %627 = vmatprep.subr.mxu0 0.0
      %628 = vmatpush1.msra.mxu0 0.0
      %629 = vmatprep.subr.mxu0 0.0
      %630 = vmatpush1.msra.mxu0 0.0
      %631 = vmatprep.subr.mxu0 0.0
      %632 = vmatpush1.msra.mxu0 0.0
      %633 = vmatprep.subr.mxu0 0.0
      %634 = vmatpush1.msra.mxu0 0.0
      %635 = vmatprep.subr.mxu0 0.0
      %636 = vmatpush1.msra.mxu0 0.0
      %637 = vmatprep.subr.mxu0 0.0
      %638 = vmatpush1.msra.mxu0 0.0
      %639 = vmatprep.subr.mxu0 0.0
      %640 = vmatpush1.msra.mxu0 0.0
      %641 = vmatprep.subr.mxu0 0.0
      %642 = vmatpush1.msra.mxu0 0.0
      %643 = vmatprep.subr.mxu0 0.0
      %644 = vmatpush1.msra.mxu0 0.0
      %645 = vmatprep.subr.mxu0 0.0
      %646 = vmatpush1.msra.mxu0 0.0
      %647 = vmatprep.subr.mxu0 0.0
      %648 = vmatpush1.msra.mxu0 0.0
      %649 = vmatprep.subr.mxu0 0.0
      %650 = vmatpush1.msra.mxu0 0.0
      %651 = vmatprep.subr.mxu0 0.0
      %652 = vmatpush1.msra.mxu0 0.0
      %653 = vmatprep.subr.mxu0 0.0
      %654 = vmatpush1.msra.mxu0 0.0
      %655 = vmatprep.subr.mxu0 0.0
      %656 = vmatpush1.msra.mxu0 0.0
      %657 = vmatprep.subr.mxu0 0.0
      %658 = vmatpush1.msra.mxu0 0.0
      %659 = vmatprep.subr.mxu0 0.0
      %660 = vmatpush1.msra.mxu0 0.0
      %661 = vmatprep.subr.mxu0 0.0
      %662 = vmatpush1.msra.mxu0 0.0
      %663 = vmatprep.subr.mxu0 0.0
      %664 = vmatpush1.msra.mxu0 0.0
      %665 = vmatprep.subr.mxu0 0.0
      %666 = vmatpush1.msra.mxu0 0.0
      %667 = vmatprep.subr.mxu0 0.0
      %668 = vmatpush1.msra.mxu0 0.0
      %669 = vmatprep.subr.mxu0 0.0
      %670 = vmatpush1.msra.mxu0 0.0
      %671 = vmatprep.subr.mxu0 0.0
      %672 = vmatpush1.msra.mxu0 0.0
      %673 = vmatprep.subr.mxu0 0.0
      %674 = vmatpush1.msra.mxu0 0.0
      %675 = vmatprep.mubr.f32.mxu0 0.0
      %676 = vmatmul.mubr.f32.gmra.mrb[0].mxu0 %v582
      %v677 = vpop.f32.mrb[0].mxu0
      %v678 = vadd.f32 0.0, %v677
      %v679 = vpop.f32.mrb[0].mxu0
      %680 = vmatprep.mubr.f32.mxu0 0.0
      %681 = vmatmul.mubr.f32.gmra.mrb[0].mxu0 %v585
      %v682 = vpop.f32.mrb[0].mxu0
      %v683 = vadd.f32 0.0, %v682
      %v684 = vpop.f32.mrb[0].mxu0
      %685 = vmatprep.mubr.f32.mxu0 0.0
      %686 = vmatmul.mubr.f32.gmra.mrb[0].mxu0 %v588
      %v687 = vpop.f32.mrb[0].mxu0
      %v688 = vadd.f32 0.0, %v687
      %v689 = vpop.f32.mrb[0].mxu0
      %690 = vmatprep.mubr.f32.mxu0 0.0
      %691 = vmatmul.mubr.f32.gmra.mrb[0].mxu0 %v591
      %v692 = vpop.f32.mrb[0].mxu0
      %v693 = vadd.f32 0.0, %v692
      %v694 = vpop.f32.mrb[0].mxu0
      %695 = vmatprep.mubr.f32.mxu0 0.0
      %696 = vmatmul.mubr.f32.gmra.mrb[0].mxu0 %v594
      %v697 = vpop.f32.mrb[0].mxu0
      %v698 = vadd.f32 0.0, %v697
      %v699 = vpop.f32.mrb[0].mxu0
      %700 = vmatprep.mubr.f32.mxu0 0.0
      %701 = vmatmul.mubr.f32.gmra.mrb[0].mxu0 %v597
      %v702 = vpop.f32.mrb[0].mxu0
      %v703 = vadd.f32 0.0, %v702
      %v704 = vpop.f32.mrb[0].mxu0
      %705 = vmatprep.mubr.f32.mxu0 0.0
      %706 = vmatmul.mubr.f32.gmra.mrb[0].mxu0 %v600
      %v707 = vpop.f32.mrb[0].mxu0
      %v708 = vadd.f32 0.0, %v707
      %v709 = vpop.f32.mrb[0].mxu0
      %710 = vmatprep.mubr.f32.mxu0 0.0
      %711 = vmatmul.mubr.f32.gmra.mrb[0].mxu0 %v603
      %v712 = vpop.f32.mrb[0].mxu0
      %v713 = vadd.f32 0.0, %v712
      %v714 = vpop.f32.mrb[0].mxu0
      %715 = vmatprep.mubr.f32.mxu0 0.0
      %716 = vmatmul.mubr.f32.gmra.mrb[0].mxu0 %v606
      %v717 = vpop.f32.mrb[0].mxu0
      %v718 = vadd.f32 0.0, %v717
      %v719 = vpop.f32.mrb[0].mxu0
      %720 = vmatprep.mubr.f32.mxu0 0.0
      %721 = vmatmul.mubr.f32.gmra.mrb[0].mxu0 %v609
      %v722 = vpop.f32.mrb[0].mxu0
      %v723 = vadd.f32 0.0, %v722
      %v724 = vpop.f32.mrb[0].mxu0
      %725 = vdwg.mxu0
      %v726 = vadd.f32 %v558, %v678
      %v727 = vadd.f32 %v559, %v683
      %v728 = vadd.f32 %v560, %v688
      %v729 = vadd.f32 %v561, %v693
      %v730 = vadd.f32 %v562, %v698
      %v731 = vadd.f32 %v563, %v703
      %v732 = vadd.f32 %v564, %v708
      %v733 = vadd.f32 %v565, %v713
      %v734 = vadd.f32 %v566, %v718
      %v735 = vadd.f32 %v567, %v723
      %v736 = vld [vmem:[%s219 + $0xa] sm:$0xff]
      %v737 = vld [vmem:[%s219 + $0x12] sm:$0xff]
      %v738 = vld [vmem:[%s219 + $0x1a] sm:$0xff]
      %v739 = vld [vmem:[%s219 + $0x22] sm:$0xff]
      %v740 = vld [vmem:[%s219 + $0x2a] sm:$0xff]
      %v741 = vld [vmem:[%s219 + $0x32] sm:$0xff]
      %v742 = vld [vmem:[%s219 + $0x3a] sm:$0xff]
      %v743 = vld [vmem:[%s219 + $0x42] sm:$0xff]
      %v744 = vld [vmem:[%s219 + $0x4a] sm:$0xff]
      %v745 = vld [vmem:[%s219 + $0x52] sm:$0xff]
      %s746 = scalar_lea.vmem %s1, 48
      %v747 = vld [vmem:[%s746] sm:$0xff]
      %v748 = vld [vmem:[%s746 + $0x8] sm:$0xff]
      %v750 = vsel %vm244, %v736, 0
      %v753 = vsel %vm244, %v737, 0
      %v756 = vsel %vm244, %v738, 0
      %v759 = vsel %vm244, %v739, 0
      %v762 = vsel %vm244, %v740, 0
      %v765 = vsel %vm244, %v741, 0
      %v768 = vsel %vm244, %v742, 0
      %v771 = vsel %vm244, %v743, 0
      %v774 = vsel %vm244, %v744, 0
      %v777 = vsel %vm244, %v745, 0
      %779 = vmatprep.subr.mxu0 0.0
      %780 = vmatpush1.msra.mxu0 %v747
      %781 = vmatprep.subr.mxu0 0.0
      %782 = vmatpush1.msra.mxu0 %v748
      %783 = vmatprep.subr.mxu0 0.0
      %784 = vmatpush1.msra.mxu0 0.0
      %785 = vmatprep.subr.mxu0 0.0
      %786 = vmatpush1.msra.mxu0 0.0
      %787 = vmatprep.subr.mxu0 0.0
      %788 = vmatpush1.msra.mxu0 0.0
      %789 = vmatprep.subr.mxu0 0.0
      %790 = vmatpush1.msra.mxu0 0.0
      %791 = vmatprep.subr.mxu0 0.0
      %792 = vmatpush1.msra.mxu0 0.0
      %793 = vmatprep.subr.mxu0 0.0
      %794 = vmatpush1.msra.mxu0 0.0
      %795 = vmatprep.subr.mxu0 0.0
      %796 = vmatpush1.msra.mxu0 0.0
      %797 = vmatprep.subr.mxu0 0.0
      %798 = vmatpush1.msra.mxu0 0.0
      %799 = vmatprep.subr.mxu0 0.0
      %800 = vmatpush1.msra.mxu0 0.0
      %801 = vmatprep.subr.mxu0 0.0
      %802 = vmatpush1.msra.mxu0 0.0
      %803 = vmatprep.subr.mxu0 0.0
      %804 = vmatpush1.msra.mxu0 0.0
      %805 = vmatprep.subr.mxu0 0.0
      %806 = vmatpush1.msra.mxu0 0.0
      %807 = vmatprep.subr.mxu0 0.0
      %808 = vmatpush1.msra.mxu0 0.0
      %809 = vmatprep.subr.mxu0 0.0
      %810 = vmatpush1.msra.mxu0 0.0
      %811 = vmatprep.subr.mxu0 0.0
      %812 = vmatpush1.msra.mxu0 0.0
      %813 = vmatprep.subr.mxu0 0.0
      %814 = vmatpush1.msra.mxu0 0.0
      %815 = vmatprep.subr.mxu0 0.0
      %816 = vmatpush1.msra.mxu0 0.0
      %817 = vmatprep.subr.mxu0 0.0
      %818 = vmatpush1.msra.mxu0 0.0
      %819 = vmatprep.subr.mxu0 0.0
      %820 = vmatpush1.msra.mxu0 0.0
      %821 = vmatprep.subr.mxu0 0.0
      %822 = vmatpush1.msra.mxu0 0.0
      %823 = vmatprep.subr.mxu0 0.0
      %824 = vmatpush1.msra.mxu0 0.0
      %825 = vmatprep.subr.mxu0 0.0
      %826 = vmatpush1.msra.mxu0 0.0
      %827 = vmatprep.subr.mxu0 0.0
      %828 = vmatpush1.msra.mxu0 0.0
      %829 = vmatprep.subr.mxu0 0.0
      %830 = vmatpush1.msra.mxu0 0.0
      %831 = vmatprep.subr.mxu0 0.0
      %832 = vmatpush1.msra.mxu0 0.0
      %833 = vmatprep.subr.mxu0 0.0
      %834 = vmatpush1.msra.mxu0 0.0
      %835 = vmatprep.subr.mxu0 0.0
      %836 = vmatpush1.msra.mxu0 0.0
      %837 = vmatprep.subr.mxu0 0.0
      %838 = vmatpush1.msra.mxu0 0.0
      %839 = vmatprep.subr.mxu0 0.0
      %840 = vmatpush1.msra.mxu0 0.0
      %841 = vmatprep.subr.mxu0 0.0
      %842 = vmatpush1.msra.mxu0 0.0
      %843 = vmatprep.mubr.f32.mxu0 0.0
      %844 = vmatmul.mubr.f32.gmra.mrb[0].mxu0 %v750
      %v845 = vpop.f32.mrb[0].mxu0
      %v846 = vadd.f32 0.0, %v845
      %v847 = vpop.f32.mrb[0].mxu0
      %848 = vmatprep.mubr.f32.mxu0 0.0
      %849 = vmatmul.mubr.f32.gmra.mrb[0].mxu0 %v753
      %v850 = vpop.f32.mrb[0].mxu0
      %v851 = vadd.f32 0.0, %v850
      %v852 = vpop.f32.mrb[0].mxu0
      %853 = vmatprep.mubr.f32.mxu0 0.0
      %854 = vmatmul.mubr.f32.gmra.mrb[0].mxu0 %v756
      %v855 = vpop.f32.mrb[0].mxu0
      %v856 = vadd.f32 0.0, %v855
      %v857 = vpop.f32.mrb[0].mxu0
      %858 = vmatprep.mubr.f32.mxu0 0.0
      %859 = vmatmul.mubr.f32.gmra.mrb[0].mxu0 %v759
      %v860 = vpop.f32.mrb[0].mxu0
      %v861 = vadd.f32 0.0, %v860
      %v862 = vpop.f32.mrb[0].mxu0
      %863 = vmatprep.mubr.f32.mxu0 0.0
      %864 = vmatmul.mubr.f32.gmra.mrb[0].mxu0 %v762
      %v865 = vpop.f32.mrb[0].mxu0
      %v866 = vadd.f32 0.0, %v865
      %v867 = vpop.f32.mrb[0].mxu0
      %868 = vmatprep.mubr.f32.mxu0 0.0
      %869 = vmatmul.mubr.f32.gmra.mrb[0].mxu0 %v765
      %v870 = vpop.f32.mrb[0].mxu0
      %v871 = vadd.f32 0.0, %v870
      %v872 = vpop.f32.mrb[0].mxu0
      %873 = vmatprep.mubr.f32.mxu0 0.0
      %874 = vmatmul.mubr.f32.gmra.mrb[0].mxu0 %v768
      %v875 = vpop.f32.mrb[0].mxu0
      %v876 = vadd.f32 0.0, %v875
      %v877 = vpop.f32.mrb[0].mxu0
      %878 = vmatprep.mubr.f32.mxu0 0.0
      %879 = vmatmul.mubr.f32.gmra.mrb[0].mxu0 %v771
      %v880 = vpop.f32.mrb[0].mxu0
      %v881 = vadd.f32 0.0, %v880
      %v882 = vpop.f32.mrb[0].mxu0
      %883 = vmatprep.mubr.f32.mxu0 0.0
      %884 = vmatmul.mubr.f32.gmra.mrb[0].mxu0 %v774
      %v885 = vpop.f32.mrb[0].mxu0
      %v886 = vadd.f32 0.0, %v885
      %v887 = vpop.f32.mrb[0].mxu0
      %888 = vmatprep.mubr.f32.mxu0 0.0
      %889 = vmatmul.mubr.f32.gmra.mrb[0].mxu0 %v777
      %v890 = vpop.f32.mrb[0].mxu0
      %v891 = vadd.f32 0.0, %v890
      %v892 = vpop.f32.mrb[0].mxu0
      %893 = vdwg.mxu0
      %v894 = vadd.f32 %v726, %v846
      %v895 = vadd.f32 %v727, %v851
      %v896 = vadd.f32 %v728, %v856
      %v897 = vadd.f32 %v729, %v861
      %v898 = vadd.f32 %v730, %v866
      %v899 = vadd.f32 %v731, %v871
      %v900 = vadd.f32 %v732, %v876
      %v901 = vadd.f32 %v733, %v881
      %v902 = vadd.f32 %v734, %v886
      %v903 = vadd.f32 %v735, %v891
      %vm904 = vcmp.ge.f32.partialorder %v894, 0.0
      %vm905 = vcmp.ge.f32.partialorder %v895, 0.0
      %vm906 = vcmp.ge.f32.partialorder %v896, 0.0
      %vm907 = vcmp.ge.f32.partialorder %v897, 0.0
      %vm908 = vcmp.ge.f32.partialorder %v898, 0.0
      %vm909 = vcmp.ge.f32.partialorder %v899, 0.0
      %vm910 = vcmp.ge.f32.partialorder %v900, 0.0
      %vm911 = vcmp.ge.f32.partialorder %v901, 0.0
      %vm912 = vcmp.ge.f32.partialorder %v902, 0.0
      %vm913 = vcmp.ge.f32.partialorder %v903, 0.0
      %v914 = vmul.f32 %v894, 0.2
      %v915 = vmul.f32 %v895, 0.2
      %v916 = vmul.f32 %v896, 0.2
      %v917 = vmul.f32 %v897, 0.2
      %v918 = vmul.f32 %v898, 0.2
      %v919 = vmul.f32 %v899, 0.2
      %v920 = vmul.f32 %v900, 0.2
      %v921 = vmul.f32 %v901, 0.2
      %v922 = vmul.f32 %v902, 0.2
      %v923 = vmul.f32 %v903, 0.2
      %v924 = vsel %vm904, %v894, %v914
      %v925 = vsel %vm905, %v895, %v915
      %v926 = vsel %vm906, %v896, %v916
      %v927 = vsel %vm907, %v897, %v917
      %v928 = vsel %vm908, %v898, %v918
      %v929 = vsel %vm909, %v899, %v919
      %v930 = vsel %vm910, %v900, %v920
      %v931 = vsel %vm911, %v901, %v921
      %v932 = vsel %vm912, %v902, %v922
      %v933 = vsel %vm913, %v903, %v923
      %vm934 = vcmask 261120
      %935 = vst.msk [vmem:[#allocation2] sm:$0xff] %vm934, %v924
      %936 = vst.msk [vmem:[#allocation2 + $0x8] sm:$0xff] %vm934, %v925
      %937 = vst.msk [vmem:[#allocation2 + $0x10] sm:$0xff] %vm934, %v926
      %938 = vst.msk [vmem:[#allocation2 + $0x18] sm:$0xff] %vm934, %v927
      %939 = vst.msk [vmem:[#allocation2 + $0x20] sm:$0xff] %vm934, %v928
      %940 = vst.msk [vmem:[#allocation2 + $0x28] sm:$0xff] %vm934, %v929
      %941 = vst.msk [vmem:[#allocation2 + $0x30] sm:$0xff] %vm934, %v930
      %942 = vst.msk [vmem:[#allocation2 + $0x38] sm:$0xff] %vm934, %v931
      %943 = vst.msk [vmem:[#allocation2 + $0x40] sm:$0xff] %vm934, %v932
      %944 = vst.msk [vmem:[#allocation2 + $0x48] sm:$0xff] %vm934, %v933
      %v945 = vld [vmem:[%s4] sm:$0x1]
      %v947 = vlaneseq
      %v948 = vshrl.u32 %v947, 7
      %v949 = vsub.s32 0, %v948
      %v950 = vrot.slane %v945, %v949
      %v952 = vld [vmem:[#allocation2] sm:$0xff]
      %v953 = vld [vmem:[#allocation2 + $0x8] sm:$0xff]
      %v954 = vld [vmem:[#allocation2 + $0x10] sm:$0xff]
      %v955 = vld [vmem:[#allocation2 + $0x18] sm:$0xff]
      %v956 = vld [vmem:[#allocation2 + $0x20] sm:$0xff]
      %v957 = vld [vmem:[#allocation2 + $0x28] sm:$0xff]
      %v958 = vld [vmem:[%s3] sm:$0xff]
      %v959 = vld [vmem:[%s3 + $0x8] sm:$0xff]
      %v960 = vld [vmem:[%s3 + $0x10] sm:$0xff]
      %v961 = vld [vmem:[%s3 + $0x18] sm:$0xff]
      %v963 = vsel %vm934, %v952, 0
      %v966 = vsel %vm934, %v953, 0
      %v969 = vsel %vm934, %v954, 0
      %v972 = vsel %vm934, %v955, 0
      %v975 = vsel %vm934, %v956, 0
      %v978 = vsel %vm934, %v957, 0
      %980 = vmatprep.subr.mxu0 0.0
      %981 = vmatpush1.msra.mxu0 %v958
      %982 = vmatprep.subr.mxu0 0.0
      %983 = vmatpush1.msra.mxu0 %v959
      %984 = vmatprep.subr.mxu0 0.0
      %985 = vmatpush1.msra.mxu0 %v960
      %986 = vmatprep.subr.mxu0 0.0
      %987 = vmatpush1.msra.mxu0 %v961
      %988 = vmatprep.subr.mxu0 0.0
      %989 = vmatpush1.msra.mxu0 0.0
      %990 = vmatprep.subr.mxu0 0.0
      %991 = vmatpush1.msra.mxu0 0.0
      %992 = vmatprep.subr.mxu0 0.0
      %993 = vmatpush1.msra.mxu0 0.0
      %994 = vmatprep.subr.mxu0 0.0
      %995 = vmatpush1.msra.mxu0 0.0
      %996 = vmatprep.subr.mxu0 0.0
      %997 = vmatpush1.msra.mxu0 0.0
      %998 = vmatprep.subr.mxu0 0.0
      %999 = vmatpush1.msra.mxu0 0.0
      %1000 = vmatprep.subr.mxu0 0.0
      %1001 = vmatpush1.msra.mxu0 0.0
      %1002 = vmatprep.subr.mxu0 0.0
      %1003 = vmatpush1.msra.mxu0 0.0
      %1004 = vmatprep.subr.mxu0 0.0
      %1005 = vmatpush1.msra.mxu0 0.0
      %1006 = vmatprep.subr.mxu0 0.0
      %1007 = vmatpush1.msra.mxu0 0.0
      %1008 = vmatprep.subr.mxu0 0.0
      %1009 = vmatpush1.msra.mxu0 0.0
      %1010 = vmatprep.subr.mxu0 0.0
      %1011 = vmatpush1.msra.mxu0 0.0
      %1012 = vmatprep.subr.mxu0 0.0
      %1013 = vmatpush1.msra.mxu0 0.0
      %1014 = vmatprep.subr.mxu0 0.0
      %1015 = vmatpush1.msra.mxu0 0.0
      %1016 = vmatprep.subr.mxu0 0.0
      %1017 = vmatpush1.msra.mxu0 0.0
      %1018 = vmatprep.subr.mxu0 0.0
      %1019 = vmatpush1.msra.mxu0 0.0
      %1020 = vmatprep.subr.mxu0 0.0
      %1021 = vmatpush1.msra.mxu0 0.0
      %1022 = vmatprep.subr.mxu0 0.0
      %1023 = vmatpush1.msra.mxu0 0.0
      %1024 = vmatprep.subr.mxu0 0.0
      %1025 = vmatpush1.msra.mxu0 0.0
      %1026 = vmatprep.subr.mxu0 0.0
      %1027 = vmatpush1.msra.mxu0 0.0
      %1028 = vmatprep.subr.mxu0 0.0
      %1029 = vmatpush1.msra.mxu0 0.0
      %1030 = vmatprep.subr.mxu0 0.0
      %1031 = vmatpush1.msra.mxu0 0.0
      %1032 = vmatprep.subr.mxu0 0.0
      %1033 = vmatpush1.msra.mxu0 0.0
      %1034 = vmatprep.subr.mxu0 0.0
      %1035 = vmatpush1.msra.mxu0 0.0
      %1036 = vmatprep.subr.mxu0 0.0
      %1037 = vmatpush1.msra.mxu0 0.0
      %1038 = vmatprep.subr.mxu0 0.0
      %1039 = vmatpush1.msra.mxu0 0.0
      %1040 = vmatprep.subr.mxu0 0.0
      %1041 = vmatpush1.msra.mxu0 0.0
      %1042 = vmatprep.subr.mxu0 0.0
      %1043 = vmatpush1.msra.mxu0 0.0
      %1044 = vmatprep.mubr.f32.mxu0 0.0
      %1045 = vmatmul.mubr.f32.gmra.mrb[0].mxu0 %v963
      %v1046 = vpop.f32.mrb[0].mxu0
      %v1047 = vadd.f32 0.0, %v1046
      %v1048 = vpop.f32.mrb[0].mxu0
      %1049 = vmatprep.mubr.f32.mxu0 0.0
      %1050 = vmatmul.mubr.f32.gmra.mrb[0].mxu0 %v966
      %v1051 = vpop.f32.mrb[0].mxu0
      %v1052 = vadd.f32 0.0, %v1051
      %v1053 = vpop.f32.mrb[0].mxu0
      %1054 = vmatprep.mubr.f32.mxu0 0.0
      %1055 = vmatmul.mubr.f32.gmra.mrb[0].mxu0 %v969
      %v1056 = vpop.f32.mrb[0].mxu0
      %v1057 = vadd.f32 0.0, %v1056
      %v1058 = vpop.f32.mrb[0].mxu0
      %1059 = vmatprep.mubr.f32.mxu0 0.0
      %1060 = vmatmul.mubr.f32.gmra.mrb[0].mxu0 %v972
      %v1061 = vpop.f32.mrb[0].mxu0
      %v1062 = vadd.f32 0.0, %v1061
      %v1063 = vpop.f32.mrb[0].mxu0
      %1064 = vmatprep.mubr.f32.mxu0 0.0
      %1065 = vmatmul.mubr.f32.gmra.mrb[0].mxu0 %v975
      %v1066 = vpop.f32.mrb[0].mxu0
      %v1067 = vadd.f32 0.0, %v1066
      %v1068 = vpop.f32.mrb[0].mxu0
      %1069 = vmatprep.mubr.f32.mxu0 0.0
      %1070 = vmatmul.mubr.f32.gmra.mrb[0].mxu0 %v978
      %v1071 = vpop.f32.mrb[0].mxu0
      %v1072 = vadd.f32 0.0, %v1071
      %v1073 = vpop.f32.mrb[0].mxu0
      %1074 = vdwg.mxu0
      %v1075 = vadd.f32 %v950, %v1047
      %v1076 = vadd.f32 %v950, %v1052
      %v1077 = vadd.f32 %v950, %v1057
      %v1078 = vadd.f32 %v950, %v1062
      %v1079 = vadd.f32 %v950, %v1067
      %v1080 = vadd.f32 %v950, %v1072
      %v1081 = vld [vmem:[#allocation2 + $0x1] sm:$0xff]
      %v1082 = vld [vmem:[#allocation2 + $0x9] sm:$0xff]
      %v1083 = vld [vmem:[#allocation2 + $0x11] sm:$0xff]
      %v1084 = vld [vmem:[#allocation2 + $0x19] sm:$0xff]
      %v1085 = vld [vmem:[#allocation2 + $0x21] sm:$0xff]
      %v1086 = vld [vmem:[#allocation2 + $0x29] sm:$0xff]
      %s1087 = scalar_lea.vmem %s3, 32
      %v1088 = vld [vmem:[%s1087] sm:$0xff]
      %v1089 = vld [vmem:[%s1087 + $0x8] sm:$0xff]
      %v1090 = vld [vmem:[%s1087 + $0x10] sm:$0xff]
      %v1091 = vld [vmem:[%s1087 + $0x18] sm:$0xff]
      %v1093 = vsel %vm934, %v1081, 0
      %v1096 = vsel %vm934, %v1082, 0
      %v1099 = vsel %vm934, %v1083, 0
      %v1102 = vsel %vm934, %v1084, 0
      %v1105 = vsel %vm934, %v1085, 0
      %v1108 = vsel %vm934, %v1086, 0
      %1110 = vmatprep.subr.mxu0 0.0
      %1111 = vmatpush1.msra.mxu0 %v1088
      %1112 = vmatprep.subr.mxu0 0.0
      %1113 = vmatpush1.msra.mxu0 %v1089
      %1114 = vmatprep.subr.mxu0 0.0
      %1115 = vmatpush1.msra.mxu0 %v1090
      %1116 = vmatprep.subr.mxu0 0.0
      %1117 = vmatpush1.msra.mxu0 %v1091
      %1118 = vmatprep.subr.mxu0 0.0
      %1119 = vmatpush1.msra.mxu0 0.0
      %1120 = vmatprep.subr.mxu0 0.0
      %1121 = vmatpush1.msra.mxu0 0.0
      %1122 = vmatprep.subr.mxu0 0.0
      %1123 = vmatpush1.msra.mxu0 0.0
      %1124 = vmatprep.subr.mxu0 0.0
      %1125 = vmatpush1.msra.mxu0 0.0
      %1126 = vmatprep.subr.mxu0 0.0
      %1127 = vmatpush1.msra.mxu0 0.0
      %1128 = vmatprep.subr.mxu0 0.0
      %1129 = vmatpush1.msra.mxu0 0.0
      %1130 = vmatprep.subr.mxu0 0.0
      %1131 = vmatpush1.msra.mxu0 0.0
      %1132 = vmatprep.subr.mxu0 0.0
      %1133 = vmatpush1.msra.mxu0 0.0
      %1134 = vmatprep.subr.mxu0 0.0
      %1135 = vmatpush1.msra.mxu0 0.0
      %1136 = vmatprep.subr.mxu0 0.0
      %1137 = vmatpush1.msra.mxu0 0.0
      %1138 = vmatprep.subr.mxu0 0.0
      %1139 = vmatpush1.msra.mxu0 0.0
      %1140 = vmatprep.subr.mxu0 0.0
      %1141 = vmatpush1.msra.mxu0 0.0
      %1142 = vmatprep.subr.mxu0 0.0
      %1143 = vmatpush1.msra.mxu0 0.0
      %1144 = vmatprep.subr.mxu0 0.0
      %1145 = vmatpush1.msra.mxu0 0.0
      %1146 = vmatprep.subr.mxu0 0.0
      %1147 = vmatpush1.msra.mxu0 0.0
      %1148 = vmatprep.subr.mxu0 0.0
      %1149 = vmatpush1.msra.mxu0 0.0
      %1150 = vmatprep.subr.mxu0 0.0
      %1151 = vmatpush1.msra.mxu0 0.0
      %1152 = vmatprep.subr.mxu0 0.0
      %1153 = vmatpush1.msra.mxu0 0.0
      %1154 = vmatprep.subr.mxu0 0.0
      %1155 = vmatpush1.msra.mxu0 0.0
      %1156 = vmatprep.subr.mxu0 0.0
      %1157 = vmatpush1.msra.mxu0 0.0
      %1158 = vmatprep.subr.mxu0 0.0
      %1159 = vmatpush1.msra.mxu0 0.0
      %1160 = vmatprep.subr.mxu0 0.0
      %1161 = vmatpush1.msra.mxu0 0.0
      %1162 = vmatprep.subr.mxu0 0.0
      %1163 = vmatpush1.msra.mxu0 0.0
      %1164 = vmatprep.subr.mxu0 0.0
      %1165 = vmatpush1.msra.mxu0 0.0
      %1166 = vmatprep.subr.mxu0 0.0
      %1167 = vmatpush1.msra.mxu0 0.0
      %1168 = vmatprep.subr.mxu0 0.0
      %1169 = vmatpush1.msra.mxu0 0.0
      %1170 = vmatprep.subr.mxu0 0.0
      %1171 = vmatpush1.msra.mxu0 0.0
      %1172 = vmatprep.subr.mxu0 0.0
      %1173 = vmatpush1.msra.mxu0 0.0
      %1174 = vmatprep.mubr.f32.mxu0 0.0
      %1175 = vmatmul.mubr.f32.gmra.mrb[0].mxu0 %v1093
      %v1176 = vpop.f32.mrb[0].mxu0
      %v1177 = vadd.f32 0.0, %v1176
      %v1178 = vpop.f32.mrb[0].mxu0
      %1179 = vmatprep.mubr.f32.mxu0 0.0
      %1180 = vmatmul.mubr.f32.gmra.mrb[0].mxu0 %v1096
      %v1181 = vpop.f32.mrb[0].mxu0
      %v1182 = vadd.f32 0.0, %v1181
      %v1183 = vpop.f32.mrb[0].mxu0
      %1184 = vmatprep.mubr.f32.mxu0 0.0
      %1185 = vmatmul.mubr.f32.gmra.mrb[0].mxu0 %v1099
      %v1186 = vpop.f32.mrb[0].mxu0
      %v1187 = vadd.f32 0.0, %v1186
      %v1188 = vpop.f32.mrb[0].mxu0
      %1189 = vmatprep.mubr.f32.mxu0 0.0
      %1190 = vmatmul.mubr.f32.gmra.mrb[0].mxu0 %v1102
      %v1191 = vpop.f32.mrb[0].mxu0
      %v1192 = vadd.f32 0.0, %v1191
      %v1193 = vpop.f32.mrb[0].mxu0
      %1194 = vmatprep.mubr.f32.mxu0 0.0
      %1195 = vmatmul.mubr.f32.gmra.mrb[0].mxu0 %v1105
      %v1196 = vpop.f32.mrb[0].mxu0
      %v1197 = vadd.f32 0.0, %v1196
      %v1198 = vpop.f32.mrb[0].mxu0
      %1199 = vmatprep.mubr.f32.mxu0 0.0
      %1200 = vmatmul.mubr.f32.gmra.mrb[0].mxu0 %v1108
      %v1201 = vpop.f32.mrb[0].mxu0
      %v1202 = vadd.f32 0.0, %v1201
      %v1203 = vpop.f32.mrb[0].mxu0
      %1204 = vdwg.mxu0
      %v1205 = vadd.f32 %v1075, %v1177
      %v1206 = vadd.f32 %v1076, %v1182
      %v1207 = vadd.f32 %v1077, %v1187
      %v1208 = vadd.f32 %v1078, %v1192
      %v1209 = vadd.f32 %v1079, %v1197
      %v1210 = vadd.f32 %v1080, %v1202
      %v1211 = vld [vmem:[#allocation2 + $0x2] sm:$0xff]
      %v1212 = vld [vmem:[#allocation2 + $0xa] sm:$0xff]
      %v1213 = vld [vmem:[#allocation2 + $0x12] sm:$0xff]
      %v1214 = vld [vmem:[#allocation2 + $0x1a] sm:$0xff]
      %v1215 = vld [vmem:[#allocation2 + $0x22] sm:$0xff]
      %v1216 = vld [vmem:[#allocation2 + $0x2a] sm:$0xff]
      %s1217 = scalar_lea.vmem %s3, 64
      %v1218 = vld [vmem:[%s1217] sm:$0xff]
      %v1219 = vld [vmem:[%s1217 + $0x8] sm:$0xff]
      %v1220 = vld [vmem:[%s1217 + $0x10] sm:$0xff]
      %v1221 = vld [vmem:[%s1217 + $0x18] sm:$0xff]
      %v1223 = vsel %vm934, %v1211, 0
      %v1226 = vsel %vm934, %v1212, 0
      %v1229 = vsel %vm934, %v1213, 0
      %v1232 = vsel %vm934, %v1214, 0
      %v1235 = vsel %vm934, %v1215, 0
      %v1238 = vsel %vm934, %v1216, 0
      %1240 = vmatprep.subr.mxu0 0.0
      %1241 = vmatpush1.msra.mxu0 %v1218
      %1242 = vmatprep.subr.mxu0 0.0
      %1243 = vmatpush1.msra.mxu0 %v1219
      %1244 = vmatprep.subr.mxu0 0.0
      %1245 = vmatpush1.msra.mxu0 %v1220
      %1246 = vmatprep.subr.mxu0 0.0
      %1247 = vmatpush1.msra.mxu0 %v1221
      %1248 = vmatprep.subr.mxu0 0.0
      %1249 = vmatpush1.msra.mxu0 0.0
      %1250 = vmatprep.subr.mxu0 0.0
      %1251 = vmatpush1.msra.mxu0 0.0
      %1252 = vmatprep.subr.mxu0 0.0
      %1253 = vmatpush1.msra.mxu0 0.0
      %1254 = vmatprep.subr.mxu0 0.0
      %1255 = vmatpush1.msra.mxu0 0.0
      %1256 = vmatprep.subr.mxu0 0.0
      %1257 = vmatpush1.msra.mxu0 0.0
      %1258 = vmatprep.subr.mxu0 0.0
      %1259 = vmatpush1.msra.mxu0 0.0
      %1260 = vmatprep.subr.mxu0 0.0
      %1261 = vmatpush1.msra.mxu0 0.0
      %1262 = vmatprep.subr.mxu0 0.0
      %1263 = vmatpush1.msra.mxu0 0.0
      %1264 = vmatprep.subr.mxu0 0.0
      %1265 = vmatpush1.msra.mxu0 0.0
      %1266 = vmatprep.subr.mxu0 0.0
      %1267 = vmatpush1.msra.mxu0 0.0
      %1268 = vmatprep.subr.mxu0 0.0
      %1269 = vmatpush1.msra.mxu0 0.0
      %1270 = vmatprep.subr.mxu0 0.0
      %1271 = vmatpush1.msra.mxu0 0.0
      %1272 = vmatprep.subr.mxu0 0.0
      %1273 = vmatpush1.msra.mxu0 0.0
      %1274 = vmatprep.subr.mxu0 0.0
      %1275 = vmatpush1.msra.mxu0 0.0
      %1276 = vmatprep.subr.mxu0 0.0
      %1277 = vmatpush1.msra.mxu0 0.0
      %1278 = vmatprep.subr.mxu0 0.0
      %1279 = vmatpush1.msra.mxu0 0.0
      %1280 = vmatprep.subr.mxu0 0.0
      %1281 = vmatpush1.msra.mxu0 0.0
      %1282 = vmatprep.subr.mxu0 0.0
      %1283 = vmatpush1.msra.mxu0 0.0
      %1284 = vmatprep.subr.mxu0 0.0
      %1285 = vmatpush1.msra.mxu0 0.0
      %1286 = vmatprep.subr.mxu0 0.0
      %1287 = vmatpush1.msra.mxu0 0.0
      %1288 = vmatprep.subr.mxu0 0.0
      %1289 = vmatpush1.msra.mxu0 0.0
      %1290 = vmatprep.subr.mxu0 0.0
      %1291 = vmatpush1.msra.mxu0 0.0
      %1292 = vmatprep.subr.mxu0 0.0
      %1293 = vmatpush1.msra.mxu0 0.0
      %1294 = vmatprep.subr.mxu0 0.0
      %1295 = vmatpush1.msra.mxu0 0.0
      %1296 = vmatprep.subr.mxu0 0.0
      %1297 = vmatpush1.msra.mxu0 0.0
      %1298 = vmatprep.subr.mxu0 0.0
      %1299 = vmatpush1.msra.mxu0 0.0
      %1300 = vmatprep.subr.mxu0 0.0
      %1301 = vmatpush1.msra.mxu0 0.0
      %1302 = vmatprep.subr.mxu0 0.0
      %1303 = vmatpush1.msra.mxu0 0.0
      %1304 = vmatprep.mubr.f32.mxu0 0.0
      %1305 = vmatmul.mubr.f32.gmra.mrb[0].mxu0 %v1223
      %v1306 = vpop.f32.mrb[0].mxu0
      %v1307 = vadd.f32 0.0, %v1306
      %v1308 = vpop.f32.mrb[0].mxu0
      %1309 = vmatprep.mubr.f32.mxu0 0.0
      %1310 = vmatmul.mubr.f32.gmra.mrb[0].mxu0 %v1226
      %v1311 = vpop.f32.mrb[0].mxu0
      %v1312 = vadd.f32 0.0, %v1311
      %v1313 = vpop.f32.mrb[0].mxu0
      %1314 = vmatprep.mubr.f32.mxu0 0.0
      %1315 = vmatmul.mubr.f32.gmra.mrb[0].mxu0 %v1229
      %v1316 = vpop.f32.mrb[0].mxu0
      %v1317 = vadd.f32 0.0, %v1316
      %v1318 = vpop.f32.mrb[0].mxu0
      %1319 = vmatprep.mubr.f32.mxu0 0.0
      %1320 = vmatmul.mubr.f32.gmra.mrb[0].mxu0 %v1232
      %v1321 = vpop.f32.mrb[0].mxu0
      %v1322 = vadd.f32 0.0, %v1321
      %v1323 = vpop.f32.mrb[0].mxu0
      %1324 = vmatprep.mubr.f32.mxu0 0.0
      %1325 = vmatmul.mubr.f32.gmra.mrb[0].mxu0 %v1235
      %v1326 = vpop.f32.mrb[0].mxu0
      %v1327 = vadd.f32 0.0, %v1326
      %v1328 = vpop.f32.mrb[0].mxu0
      %1329 = vmatprep.mubr.f32.mxu0 0.0
      %1330 = vmatmul.mubr.f32.gmra.mrb[0].mxu0 %v1238
      %v1331 = vpop.f32.mrb[0].mxu0
      %v1332 = vadd.f32 0.0, %v1331
      %v1333 = vpop.f32.mrb[0].mxu0
      %1334 = vdwg.mxu0
      %v1335 = vadd.f32 %v1205, %v1307
      %v1336 = vadd.f32 %v1206, %v1312
      %v1337 = vadd.f32 %v1207, %v1317
      %v1338 = vadd.f32 %v1208, %v1322
      %v1339 = vadd.f32 %v1209, %v1327
      %v1340 = vadd.f32 %v1210, %v1332
      %v1341 = vld [vmem:[#allocation2 + $0x3] sm:$0xff]
      %v1342 = vld [vmem:[#allocation2 + $0xb] sm:$0xff]
      %v1343 = vld [vmem:[#allocation2 + $0x13] sm:$0xff]
      %v1344 = vld [vmem:[#allocation2 + $0x1b] sm:$0xff]
      %v1345 = vld [vmem:[#allocation2 + $0x23] sm:$0xff]
      %v1346 = vld [vmem:[#allocation2 + $0x2b] sm:$0xff]
      %s1347 = scalar_lea.vmem %s3, 96
      %v1348 = vld [vmem:[%s1347] sm:$0xff]
      %v1349 = vld [vmem:[%s1347 + $0x8] sm:$0xff]
      %v1350 = vld [vmem:[%s1347 + $0x10] sm:$0xff]
      %v1351 = vld [vmem:[%s1347 + $0x18] sm:$0xff]
      %v1353 = vsel %vm934, %v1341, 0
      %v1356 = vsel %vm934, %v1342, 0
      %v1359 = vsel %vm934, %v1343, 0
      %v1362 = vsel %vm934, %v1344, 0
      %v1365 = vsel %vm934, %v1345, 0
      %v1368 = vsel %vm934, %v1346, 0
      %1370 = vmatprep.subr.mxu0 0.0
      %1371 = vmatpush1.msra.mxu0 %v1348
      %1372 = vmatprep.subr.mxu0 0.0
      %1373 = vmatpush1.msra.mxu0 %v1349
      %1374 = vmatprep.subr.mxu0 0.0
      %1375 = vmatpush1.msra.mxu0 %v1350
      %1376 = vmatprep.subr.mxu0 0.0
      %1377 = vmatpush1.msra.mxu0 %v1351
      %1378 = vmatprep.subr.mxu0 0.0
      %1379 = vmatpush1.msra.mxu0 0.0
      %1380 = vmatprep.subr.mxu0 0.0
      %1381 = vmatpush1.msra.mxu0 0.0
      %1382 = vmatprep.subr.mxu0 0.0
      %1383 = vmatpush1.msra.mxu0 0.0
      %1384 = vmatprep.subr.mxu0 0.0
      %1385 = vmatpush1.msra.mxu0 0.0
      %1386 = vmatprep.subr.mxu0 0.0
      %1387 = vmatpush1.msra.mxu0 0.0
      %1388 = vmatprep.subr.mxu0 0.0
      %1389 = vmatpush1.msra.mxu0 0.0
      %1390 = vmatprep.subr.mxu0 0.0
      %1391 = vmatpush1.msra.mxu0 0.0
      %1392 = vmatprep.subr.mxu0 0.0
      %1393 = vmatpush1.msra.mxu0 0.0
      %1394 = vmatprep.subr.mxu0 0.0
      %1395 = vmatpush1.msra.mxu0 0.0
      %1396 = vmatprep.subr.mxu0 0.0
      %1397 = vmatpush1.msra.mxu0 0.0
      %1398 = vmatprep.subr.mxu0 0.0
      %1399 = vmatpush1.msra.mxu0 0.0
      %1400 = vmatprep.subr.mxu0 0.0
      %1401 = vmatpush1.msra.mxu0 0.0
      %1402 = vmatprep.subr.mxu0 0.0
      %1403 = vmatpush1.msra.mxu0 0.0
      %1404 = vmatprep.subr.mxu0 0.0
      %1405 = vmatpush1.msra.mxu0 0.0
      %1406 = vmatprep.subr.mxu0 0.0
      %1407 = vmatpush1.msra.mxu0 0.0
      %1408 = vmatprep.subr.mxu0 0.0
      %1409 = vmatpush1.msra.mxu0 0.0
      %1410 = vmatprep.subr.mxu0 0.0
      %1411 = vmatpush1.msra.mxu0 0.0
      %1412 = vmatprep.subr.mxu0 0.0
      %1413 = vmatpush1.msra.mxu0 0.0
      %1414 = vmatprep.subr.mxu0 0.0
      %1415 = vmatpush1.msra.mxu0 0.0
      %1416 = vmatprep.subr.mxu0 0.0
      %1417 = vmatpush1.msra.mxu0 0.0
      %1418 = vmatprep.subr.mxu0 0.0
      %1419 = vmatpush1.msra.mxu0 0.0
      %1420 = vmatprep.subr.mxu0 0.0
      %1421 = vmatpush1.msra.mxu0 0.0
      %1422 = vmatprep.subr.mxu0 0.0
      %1423 = vmatpush1.msra.mxu0 0.0
      %1424 = vmatprep.subr.mxu0 0.0
      %1425 = vmatpush1.msra.mxu0 0.0
      %1426 = vmatprep.subr.mxu0 0.0
      %1427 = vmatpush1.msra.mxu0 0.0
      %1428 = vmatprep.subr.mxu0 0.0
      %1429 = vmatpush1.msra.mxu0 0.0
      %1430 = vmatprep.subr.mxu0 0.0
      %1431 = vmatpush1.msra.mxu0 0.0
      %1432 = vmatprep.subr.mxu0 0.0
      %1433 = vmatpush1.msra.mxu0 0.0
      %1434 = vmatprep.mubr.f32.mxu0 0.0
      %1435 = vmatmul.mubr.f32.gmra.mrb[0].mxu0 %v1353
      %v1436 = vpop.f32.mrb[0].mxu0
      %v1437 = vadd.f32 0.0, %v1436
      %v1438 = vpop.f32.mrb[0].mxu0
      %1439 = vmatprep.mubr.f32.mxu0 0.0
      %1440 = vmatmul.mubr.f32.gmra.mrb[0].mxu0 %v1356
      %v1441 = vpop.f32.mrb[0].mxu0
      %v1442 = vadd.f32 0.0, %v1441
      %v1443 = vpop.f32.mrb[0].mxu0
      %1444 = vmatprep.mubr.f32.mxu0 0.0
      %1445 = vmatmul.mubr.f32.gmra.mrb[0].mxu0 %v1359
      %v1446 = vpop.f32.mrb[0].mxu0
      %v1447 = vadd.f32 0.0, %v1446
      %v1448 = vpop.f32.mrb[0].mxu0
      %1449 = vmatprep.mubr.f32.mxu0 0.0
      %1450 = vmatmul.mubr.f32.gmra.mrb[0].mxu0 %v1362
      %v1451 = vpop.f32.mrb[0].mxu0
      %v1452 = vadd.f32 0.0, %v1451
      %v1453 = vpop.f32.mrb[0].mxu0
      %1454 = vmatprep.mubr.f32.mxu0 0.0
      %1455 = vmatmul.mubr.f32.gmra.mrb[0].mxu0 %v1365
      %v1456 = vpop.f32.mrb[0].mxu0
      %v1457 = vadd.f32 0.0, %v1456
      %v1458 = vpop.f32.mrb[0].mxu0
      %1459 = vmatprep.mubr.f32.mxu0 0.0
      %1460 = vmatmul.mubr.f32.gmra.mrb[0].mxu0 %v1368
      %v1461 = vpop.f32.mrb[0].mxu0
      %v1462 = vadd.f32 0.0, %v1461
      %v1463 = vpop.f32.mrb[0].mxu0
      %1464 = vdwg.mxu0
      %v1465 = vadd.f32 %v1335, %v1437
      %v1466 = vadd.f32 %v1336, %v1442
      %v1467 = vadd.f32 %v1337, %v1447
      %v1468 = vadd.f32 %v1338, %v1452
      %v1469 = vadd.f32 %v1339, %v1457
      %v1470 = vadd.f32 %v1340, %v1462
      %v1471 = vld [vmem:[#allocation2 + $0x9] sm:$0xff]
      %v1472 = vld [vmem:[#allocation2 + $0x11] sm:$0xff]
      %v1473 = vld [vmem:[#allocation2 + $0x19] sm:$0xff]
      %v1474 = vld [vmem:[#allocation2 + $0x21] sm:$0xff]
      %v1475 = vld [vmem:[#allocation2 + $0x29] sm:$0xff]
      %v1476 = vld [vmem:[#allocation2 + $0x31] sm:$0xff]
      %s1477 = scalar_lea.vmem %s3, 128
      %v1478 = vld [vmem:[%s1477] sm:$0xff]
      %v1479 = vld [vmem:[%s1477 + $0x8] sm:$0xff]
      %v1480 = vld [vmem:[%s1477 + $0x10] sm:$0xff]
      %v1481 = vld [vmem:[%s1477 + $0x18] sm:$0xff]
      %v1483 = vsel %vm934, %v1471, 0
      %v1486 = vsel %vm934, %v1472, 0
      %v1489 = vsel %vm934, %v1473, 0
      %v1492 = vsel %vm934, %v1474, 0
      %v1495 = vsel %vm934, %v1475, 0
      %v1498 = vsel %vm934, %v1476, 0
      %1500 = vmatprep.subr.mxu0 0.0
      %1501 = vmatpush1.msra.mxu0 %v1478
      %1502 = vmatprep.subr.mxu0 0.0
      %1503 = vmatpush1.msra.mxu0 %v1479
      %1504 = vmatprep.subr.mxu0 0.0
      %1505 = vmatpush1.msra.mxu0 %v1480
      %1506 = vmatprep.subr.mxu0 0.0
      %1507 = vmatpush1.msra.mxu0 %v1481
      %1508 = vmatprep.subr.mxu0 0.0
      %1509 = vmatpush1.msra.mxu0 0.0
      %1510 = vmatprep.subr.mxu0 0.0
      %1511 = vmatpush1.msra.mxu0 0.0
      %1512 = vmatprep.subr.mxu0 0.0
      %1513 = vmatpush1.msra.mxu0 0.0
      %1514 = vmatprep.subr.mxu0 0.0
      %1515 = vmatpush1.msra.mxu0 0.0
      %1516 = vmatprep.subr.mxu0 0.0
      %1517 = vmatpush1.msra.mxu0 0.0
      %1518 = vmatprep.subr.mxu0 0.0
      %1519 = vmatpush1.msra.mxu0 0.0
      %1520 = vmatprep.subr.mxu0 0.0
      %1521 = vmatpush1.msra.mxu0 0.0
      %1522 = vmatprep.subr.mxu0 0.0
      %1523 = vmatpush1.msra.mxu0 0.0
      %1524 = vmatprep.subr.mxu0 0.0
      %1525 = vmatpush1.msra.mxu0 0.0
      %1526 = vmatprep.subr.mxu0 0.0
      %1527 = vmatpush1.msra.mxu0 0.0
      %1528 = vmatprep.subr.mxu0 0.0
      %1529 = vmatpush1.msra.mxu0 0.0
      %1530 = vmatprep.subr.mxu0 0.0
      %1531 = vmatpush1.msra.mxu0 0.0
      %1532 = vmatprep.subr.mxu0 0.0
      %1533 = vmatpush1.msra.mxu0 0.0
      %1534 = vmatprep.subr.mxu0 0.0
      %1535 = vmatpush1.msra.mxu0 0.0
      %1536 = vmatprep.subr.mxu0 0.0
      %1537 = vmatpush1.msra.mxu0 0.0
      %1538 = vmatprep.subr.mxu0 0.0
      %1539 = vmatpush1.msra.mxu0 0.0
      %1540 = vmatprep.subr.mxu0 0.0
      %1541 = vmatpush1.msra.mxu0 0.0
      %1542 = vmatprep.subr.mxu0 0.0
      %1543 = vmatpush1.msra.mxu0 0.0
      %1544 = vmatprep.subr.mxu0 0.0
      %1545 = vmatpush1.msra.mxu0 0.0
      %1546 = vmatprep.subr.mxu0 0.0
      %1547 = vmatpush1.msra.mxu0 0.0
      %1548 = vmatprep.subr.mxu0 0.0
      %1549 = vmatpush1.msra.mxu0 0.0
      %1550 = vmatprep.subr.mxu0 0.0
      %1551 = vmatpush1.msra.mxu0 0.0
      %1552 = vmatprep.subr.mxu0 0.0
      %1553 = vmatpush1.msra.mxu0 0.0
      %1554 = vmatprep.subr.mxu0 0.0
      %1555 = vmatpush1.msra.mxu0 0.0
      %1556 = vmatprep.subr.mxu0 0.0
      %1557 = vmatpush1.msra.mxu0 0.0
      %1558 = vmatprep.subr.mxu0 0.0
      %1559 = vmatpush1.msra.mxu0 0.0
      %1560 = vmatprep.subr.mxu0 0.0
      %1561 = vmatpush1.msra.mxu0 0.0
      %1562 = vmatprep.subr.mxu0 0.0
      %1563 = vmatpush1.msra.mxu0 0.0
      %1564 = vmatprep.mubr.f32.mxu0 0.0
      %1565 = vmatmul.mubr.f32.gmra.mrb[0].mxu0 %v1483
      %v1566 = vpop.f32.mrb[0].mxu0
      %v1567 = vadd.f32 0.0, %v1566
      %v1568 = vpop.f32.mrb[0].mxu0
      %1569 = vmatprep.mubr.f32.mxu0 0.0
      %1570 = vmatmul.mubr.f32.gmra.mrb[0].mxu0 %v1486
      %v1571 = vpop.f32.mrb[0].mxu0
      %v1572 = vadd.f32 0.0, %v1571
      %v1573 = vpop.f32.mrb[0].mxu0
      %1574 = vmatprep.mubr.f32.mxu0 0.0
      %1575 = vmatmul.mubr.f32.gmra.mrb[0].mxu0 %v1489
      %v1576 = vpop.f32.mrb[0].mxu0
      %v1577 = vadd.f32 0.0, %v1576
      %v1578 = vpop.f32.mrb[0].mxu0
      %1579 = vmatprep.mubr.f32.mxu0 0.0
      %1580 = vmatmul.mubr.f32.gmra.mrb[0].mxu0 %v1492
      %v1581 = vpop.f32.mrb[0].mxu0
      %v1582 = vadd.f32 0.0, %v1581
      %v1583 = vpop.f32.mrb[0].mxu0
      %1584 = vmatprep.mubr.f32.mxu0 0.0
      %1585 = vmatmul.mubr.f32.gmra.mrb[0].mxu0 %v1495
      %v1586 = vpop.f32.mrb[0].mxu0
      %v1587 = vadd.f32 0.0, %v1586
      %v1588 = vpop.f32.mrb[0].mxu0
      %1589 = vmatprep.mubr.f32.mxu0 0.0
      %1590 = vmatmul.mubr.f32.gmra.mrb[0].mxu0 %v1498
      %v1591 = vpop.f32.mrb[0].mxu0
      %v1592 = vadd.f32 0.0, %v1591
      %v1593 = vpop.f32.mrb[0].mxu0
      %1594 = vdwg.mxu0
      %v1595 = vadd.f32 %v1465, %v1567
      %v1596 = vadd.f32 %v1466, %v1572
      %v1597 = vadd.f32 %v1467, %v1577
      %v1598 = vadd.f32 %v1468, %v1582
      %v1599 = vadd.f32 %v1469, %v1587
      %v1600 = vadd.f32 %v1470, %v1592
      %v1601 = vld [vmem:[#allocation2 + $0xa] sm:$0xff]
      %v1602 = vld [vmem:[#allocation2 + $0x12] sm:$0xff]
      %v1603 = vld [vmem:[#allocation2 + $0x1a] sm:$0xff]
      %v1604 = vld [vmem:[#allocation2 + $0x22] sm:$0xff]
      %v1605 = vld [vmem:[#allocation2 + $0x2a] sm:$0xff]
      %v1606 = vld [vmem:[#allocation2 + $0x32] sm:$0xff]
      %s1607 = scalar_lea.vmem %s3, 160
      %v1608 = vld [vmem:[%s1607] sm:$0xff]
      %v1609 = vld [vmem:[%s1607 + $0x8] sm:$0xff]
      %v1610 = vld [vmem:[%s1607 + $0x10] sm:$0xff]
      %v1611 = vld [vmem:[%s1607 + $0x18] sm:$0xff]
      %v1613 = vsel %vm934, %v1601, 0
      %v1616 = vsel %vm934, %v1602, 0
      %v1619 = vsel %vm934, %v1603, 0
      %v1622 = vsel %vm934, %v1604, 0
      %v1625 = vsel %vm934, %v1605, 0
      %v1628 = vsel %vm934, %v1606, 0
      %1630 = vmatprep.subr.mxu0 0.0
      %1631 = vmatpush1.msra.mxu0 %v1608
      %1632 = vmatprep.subr.mxu0 0.0
      %1633 = vmatpush1.msra.mxu0 %v1609
      %1634 = vmatprep.subr.mxu0 0.0
      %1635 = vmatpush1.msra.mxu0 %v1610
      %1636 = vmatprep.subr.mxu0 0.0
      %1637 = vmatpush1.msra.mxu0 %v1611
      %1638 = vmatprep.subr.mxu0 0.0
      %1639 = vmatpush1.msra.mxu0 0.0
      %1640 = vmatprep.subr.mxu0 0.0
      %1641 = vmatpush1.msra.mxu0 0.0
      %1642 = vmatprep.subr.mxu0 0.0
      %1643 = vmatpush1.msra.mxu0 0.0
      %1644 = vmatprep.subr.mxu0 0.0
      %1645 = vmatpush1.msra.mxu0 0.0
      %1646 = vmatprep.subr.mxu0 0.0
      %1647 = vmatpush1.msra.mxu0 0.0
      %1648 = vmatprep.subr.mxu0 0.0
      %1649 = vmatpush1.msra.mxu0 0.0
      %1650 = vmatprep.subr.mxu0 0.0
      %1651 = vmatpush1.msra.mxu0 0.0
      %1652 = vmatprep.subr.mxu0 0.0
      %1653 = vmatpush1.msra.mxu0 0.0
      %1654 = vmatprep.subr.mxu0 0.0
      %1655 = vmatpush1.msra.mxu0 0.0
      %1656 = vmatprep.subr.mxu0 0.0
      %1657 = vmatpush1.msra.mxu0 0.0
      %1658 = vmatprep.subr.mxu0 0.0
      %1659 = vmatpush1.msra.mxu0 0.0
      %1660 = vmatprep.subr.mxu0 0.0
      %1661 = vmatpush1.msra.mxu0 0.0
      %1662 = vmatprep.subr.mxu0 0.0
      %1663 = vmatpush1.msra.mxu0 0.0
      %1664 = vmatprep.subr.mxu0 0.0
      %1665 = vmatpush1.msra.mxu0 0.0
      %1666 = vmatprep.subr.mxu0 0.0
      %1667 = vmatpush1.msra.mxu0 0.0
      %1668 = vmatprep.subr.mxu0 0.0
      %1669 = vmatpush1.msra.mxu0 0.0
      %1670 = vmatprep.subr.mxu0 0.0
      %1671 = vmatpush1.msra.mxu0 0.0
      %1672 = vmatprep.subr.mxu0 0.0
      %1673 = vmatpush1.msra.mxu0 0.0
      %1674 = vmatprep.subr.mxu0 0.0
      %1675 = vmatpush1.msra.mxu0 0.0
      %1676 = vmatprep.subr.mxu0 0.0
      %1677 = vmatpush1.msra.mxu0 0.0
      %1678 = vmatprep.subr.mxu0 0.0
      %1679 = vmatpush1.msra.mxu0 0.0
      %1680 = vmatprep.subr.mxu0 0.0
      %1681 = vmatpush1.msra.mxu0 0.0
      %1682 = vmatprep.subr.mxu0 0.0
      %1683 = vmatpush1.msra.mxu0 0.0
      %1684 = vmatprep.subr.mxu0 0.0
      %1685 = vmatpush1.msra.mxu0 0.0
      %1686 = vmatprep.subr.mxu0 0.0
      %1687 = vmatpush1.msra.mxu0 0.0
      %1688 = vmatprep.subr.mxu0 0.0
      %1689 = vmatpush1.msra.mxu0 0.0
      %1690 = vmatprep.subr.mxu0 0.0
      %1691 = vmatpush1.msra.mxu0 0.0
      %1692 = vmatprep.subr.mxu0 0.0
      %1693 = vmatpush1.msra.mxu0 0.0
      %1694 = vmatprep.mubr.f32.mxu0 0.0
      %1695 = vmatmul.mubr.f32.gmra.mrb[0].mxu0 %v1613
      %v1696 = vpop.f32.mrb[0].mxu0
      %v1697 = vadd.f32 0.0, %v1696
      %v1698 = vpop.f32.mrb[0].mxu0
      %1699 = vmatprep.mubr.f32.mxu0 0.0
      %1700 = vmatmul.mubr.f32.gmra.mrb[0].mxu0 %v1616
      %v1701 = vpop.f32.mrb[0].mxu0
      %v1702 = vadd.f32 0.0, %v1701
      %v1703 = vpop.f32.mrb[0].mxu0
      %1704 = vmatprep.mubr.f32.mxu0 0.0
      %1705 = vmatmul.mubr.f32.gmra.mrb[0].mxu0 %v1619
      %v1706 = vpop.f32.mrb[0].mxu0
      %v1707 = vadd.f32 0.0, %v1706
      %v1708 = vpop.f32.mrb[0].mxu0
      %1709 = vmatprep.mubr.f32.mxu0 0.0
      %1710 = vmatmul.mubr.f32.gmra.mrb[0].mxu0 %v1622
      %v1711 = vpop.f32.mrb[0].mxu0
      %v1712 = vadd.f32 0.0, %v1711
      %v1713 = vpop.f32.mrb[0].mxu0
      %1714 = vmatprep.mubr.f32.mxu0 0.0
      %1715 = vmatmul.mubr.f32.gmra.mrb[0].mxu0 %v1625
      %v1716 = vpop.f32.mrb[0].mxu0
      %v1717 = vadd.f32 0.0, %v1716
      %v1718 = vpop.f32.mrb[0].mxu0
      %1719 = vmatprep.mubr.f32.mxu0 0.0
      %1720 = vmatmul.mubr.f32.gmra.mrb[0].mxu0 %v1628
      %v1721 = vpop.f32.mrb[0].mxu0
      %v1722 = vadd.f32 0.0, %v1721
      %v1723 = vpop.f32.mrb[0].mxu0
      %1724 = vdwg.mxu0
      %v1725 = vadd.f32 %v1595, %v1697
      %v1726 = vadd.f32 %v1596, %v1702
      %v1727 = vadd.f32 %v1597, %v1707
      %v1728 = vadd.f32 %v1598, %v1712
      %v1729 = vadd.f32 %v1599, %v1717
      %v1730 = vadd.f32 %v1600, %v1722
      %v1731 = vld [vmem:[#allocation2 + $0xb] sm:$0xff]
      %v1732 = vld [vmem:[#allocation2 + $0x13] sm:$0xff]
      %v1733 = vld [vmem:[#allocation2 + $0x1b] sm:$0xff]
      %v1734 = vld [vmem:[#allocation2 + $0x23] sm:$0xff]
      %v1735 = vld [vmem:[#allocation2 + $0x2b] sm:$0xff]
      %v1736 = vld [vmem:[#allocation2 + $0x33] sm:$0xff]
      %s1737 = scalar_lea.vmem %s3, 192
      %v1738 = vld [vmem:[%s1737] sm:$0xff]
      %v1739 = vld [vmem:[%s1737 + $0x8] sm:$0xff]
      %v1740 = vld [vmem:[%s1737 + $0x10] sm:$0xff]
      %v1741 = vld [vmem:[%s1737 + $0x18] sm:$0xff]
      %v1743 = vsel %vm934, %v1731, 0
      %v1746 = vsel %vm934, %v1732, 0
      %v1749 = vsel %vm934, %v1733, 0
      %v1752 = vsel %vm934, %v1734, 0
      %v1755 = vsel %vm934, %v1735, 0
      %v1758 = vsel %vm934, %v1736, 0
      %1760 = vmatprep.subr.mxu0 0.0
      %1761 = vmatpush1.msra.mxu0 %v1738
      %1762 = vmatprep.subr.mxu0 0.0
      %1763 = vmatpush1.msra.mxu0 %v1739
      %1764 = vmatprep.subr.mxu0 0.0
      %1765 = vmatpush1.msra.mxu0 %v1740
      %1766 = vmatprep.subr.mxu0 0.0
      %1767 = vmatpush1.msra.mxu0 %v1741
      %1768 = vmatprep.subr.mxu0 0.0
      %1769 = vmatpush1.msra.mxu0 0.0
      %1770 = vmatprep.subr.mxu0 0.0
      %1771 = vmatpush1.msra.mxu0 0.0
      %1772 = vmatprep.subr.mxu0 0.0
      %1773 = vmatpush1.msra.mxu0 0.0
      %1774 = vmatprep.subr.mxu0 0.0
      %1775 = vmatpush1.msra.mxu0 0.0
      %1776 = vmatprep.subr.mxu0 0.0
      %1777 = vmatpush1.msra.mxu0 0.0
      %1778 = vmatprep.subr.mxu0 0.0
      %1779 = vmatpush1.msra.mxu0 0.0
      %1780 = vmatprep.subr.mxu0 0.0
      %1781 = vmatpush1.msra.mxu0 0.0
      %1782 = vmatprep.subr.mxu0 0.0
      %1783 = vmatpush1.msra.mxu0 0.0
      %1784 = vmatprep.subr.mxu0 0.0
      %1785 = vmatpush1.msra.mxu0 0.0
      %1786 = vmatprep.subr.mxu0 0.0
      %1787 = vmatpush1.msra.mxu0 0.0
      %1788 = vmatprep.subr.mxu0 0.0
      %1789 = vmatpush1.msra.mxu0 0.0
      %1790 = vmatprep.subr.mxu0 0.0
      %1791 = vmatpush1.msra.mxu0 0.0
      %1792 = vmatprep.subr.mxu0 0.0
      %1793 = vmatpush1.msra.mxu0 0.0
      %1794 = vmatprep.subr.mxu0 0.0
      %1795 = vmatpush1.msra.mxu0 0.0
      %1796 = vmatprep.subr.mxu0 0.0
      %1797 = vmatpush1.msra.mxu0 0.0
      %1798 = vmatprep.subr.mxu0 0.0
      %1799 = vmatpush1.msra.mxu0 0.0
      %1800 = vmatprep.subr.mxu0 0.0
      %1801 = vmatpush1.msra.mxu0 0.0
      %1802 = vmatprep.subr.mxu0 0.0
      %1803 = vmatpush1.msra.mxu0 0.0
      %1804 = vmatprep.subr.mxu0 0.0
      %1805 = vmatpush1.msra.mxu0 0.0
      %1806 = vmatprep.subr.mxu0 0.0
      %1807 = vmatpush1.msra.mxu0 0.0
      %1808 = vmatprep.subr.mxu0 0.0
      %1809 = vmatpush1.msra.mxu0 0.0
      %1810 = vmatprep.subr.mxu0 0.0
      %1811 = vmatpush1.msra.mxu0 0.0
      %1812 = vmatprep.subr.mxu0 0.0
      %1813 = vmatpush1.msra.mxu0 0.0
      %1814 = vmatprep.subr.mxu0 0.0
      %1815 = vmatpush1.msra.mxu0 0.0
      %1816 = vmatprep.subr.mxu0 0.0
      %1817 = vmatpush1.msra.mxu0 0.0
      %1818 = vmatprep.subr.mxu0 0.0
      %1819 = vmatpush1.msra.mxu0 0.0
      %1820 = vmatprep.subr.mxu0 0.0
      %1821 = vmatpush1.msra.mxu0 0.0
      %1822 = vmatprep.subr.mxu0 0.0
      %1823 = vmatpush1.msra.mxu0 0.0
      %1824 = vmatprep.mubr.f32.mxu0 0.0
      %1825 = vmatmul.mubr.f32.gmra.mrb[0].mxu0 %v1743
      %v1826 = vpop.f32.mrb[0].mxu0
      %v1827 = vadd.f32 0.0, %v1826
      %v1828 = vpop.f32.mrb[0].mxu0
      %1829 = vmatprep.mubr.f32.mxu0 0.0
      %1830 = vmatmul.mubr.f32.gmra.mrb[0].mxu0 %v1746
      %v1831 = vpop.f32.mrb[0].mxu0
      %v1832 = vadd.f32 0.0, %v1831
      %v1833 = vpop.f32.mrb[0].mxu0
      %1834 = vmatprep.mubr.f32.mxu0 0.0
      %1835 = vmatmul.mubr.f32.gmra.mrb[0].mxu0 %v1749
      %v1836 = vpop.f32.mrb[0].mxu0
      %v1837 = vadd.f32 0.0, %v1836
      %v1838 = vpop.f32.mrb[0].mxu0
      %1839 = vmatprep.mubr.f32.mxu0 0.0
      %1840 = vmatmul.mubr.f32.gmra.mrb[0].mxu0 %v1752
      %v1841 = vpop.f32.mrb[0].mxu0
      %v1842 = vadd.f32 0.0, %v1841
      %v1843 = vpop.f32.mrb[0].mxu0
      %1844 = vmatprep.mubr.f32.mxu0 0.0
      %1845 = vmatmul.mubr.f32.gmra.mrb[0].mxu0 %v1755
      %v1846 = vpop.f32.mrb[0].mxu0
      %v1847 = vadd.f32 0.0, %v1846
      %v1848 = vpop.f32.mrb[0].mxu0
      %1849 = vmatprep.mubr.f32.mxu0 0.0
      %1850 = vmatmul.mubr.f32.gmra.mrb[0].mxu0 %v1758
      %v1851 = vpop.f32.mrb[0].mxu0
      %v1852 = vadd.f32 0.0, %v1851
      %v1853 = vpop.f32.mrb[0].mxu0
      %1854 = vdwg.mxu0
      %v1855 = vadd.f32 %v1725, %v1827
      %v1856 = vadd.f32 %v1726, %v1832
      %v1857 = vadd.f32 %v1727, %v1837
      %v1858 = vadd.f32 %v1728, %v1842
      %v1859 = vadd.f32 %v1729, %v1847
      %v1860 = vadd.f32 %v1730, %v1852
      %v1861 = vld [vmem:[#allocation2 + $0xc] sm:$0xff]
      %v1862 = vld [vmem:[#allocation2 + $0x14] sm:$0xff]
      %v1863 = vld [vmem:[#allocation2 + $0x1c] sm:$0xff]
      %v1864 = vld [vmem:[#allocation2 + $0x24] sm:$0xff]
      %v1865 = vld [vmem:[#allocation2 + $0x2c] sm:$0xff]
      %v1866 = vld [vmem:[#allocation2 + $0x34] sm:$0xff]
      %s1867 = scalar_lea.vmem %s3, 224
      %v1868 = vld [vmem:[%s1867] sm:$0xff]
      %v1869 = vld [vmem:[%s1867 + $0x8] sm:$0xff]
      %v1870 = vld [vmem:[%s1867 + $0x10] sm:$0xff]
      %v1871 = vld [vmem:[%s1867 + $0x18] sm:$0xff]
      %v1873 = vsel %vm934, %v1861, 0
      %v1876 = vsel %vm934, %v1862, 0
      %v1879 = vsel %vm934, %v1863, 0
      %v1882 = vsel %vm934, %v1864, 0
      %v1885 = vsel %vm934, %v1865, 0
      %v1888 = vsel %vm934, %v1866, 0
      %1890 = vmatprep.subr.mxu0 0.0
      %1891 = vmatpush1.msra.mxu0 %v1868
      %1892 = vmatprep.subr.mxu0 0.0
      %1893 = vmatpush1.msra.mxu0 %v1869
      %1894 = vmatprep.subr.mxu0 0.0
      %1895 = vmatpush1.msra.mxu0 %v1870
      %1896 = vmatprep.subr.mxu0 0.0
      %1897 = vmatpush1.msra.mxu0 %v1871
      %1898 = vmatprep.subr.mxu0 0.0
      %1899 = vmatpush1.msra.mxu0 0.0
      %1900 = vmatprep.subr.mxu0 0.0
      %1901 = vmatpush1.msra.mxu0 0.0
      %1902 = vmatprep.subr.mxu0 0.0
      %1903 = vmatpush1.msra.mxu0 0.0
      %1904 = vmatprep.subr.mxu0 0.0
      %1905 = vmatpush1.msra.mxu0 0.0
      %1906 = vmatprep.subr.mxu0 0.0
      %1907 = vmatpush1.msra.mxu0 0.0
      %1908 = vmatprep.subr.mxu0 0.0
      %1909 = vmatpush1.msra.mxu0 0.0
      %1910 = vmatprep.subr.mxu0 0.0
      %1911 = vmatpush1.msra.mxu0 0.0
      %1912 = vmatprep.subr.mxu0 0.0
      %1913 = vmatpush1.msra.mxu0 0.0
      %1914 = vmatprep.subr.mxu0 0.0
      %1915 = vmatpush1.msra.mxu0 0.0
      %1916 = vmatprep.subr.mxu0 0.0
      %1917 = vmatpush1.msra.mxu0 0.0
      %1918 = vmatprep.subr.mxu0 0.0
      %1919 = vmatpush1.msra.mxu0 0.0
      %1920 = vmatprep.subr.mxu0 0.0
      %1921 = vmatpush1.msra.mxu0 0.0
      %1922 = vmatprep.subr.mxu0 0.0
      %1923 = vmatpush1.msra.mxu0 0.0
      %1924 = vmatprep.subr.mxu0 0.0
      %1925 = vmatpush1.msra.mxu0 0.0
      %1926 = vmatprep.subr.mxu0 0.0
      %1927 = vmatpush1.msra.mxu0 0.0
      %1928 = vmatprep.subr.mxu0 0.0
      %1929 = vmatpush1.msra.mxu0 0.0
      %1930 = vmatprep.subr.mxu0 0.0
      %1931 = vmatpush1.msra.mxu0 0.0
      %1932 = vmatprep.subr.mxu0 0.0
      %1933 = vmatpush1.msra.mxu0 0.0
      %1934 = vmatprep.subr.mxu0 0.0
      %1935 = vmatpush1.msra.mxu0 0.0
      %1936 = vmatprep.subr.mxu0 0.0
      %1937 = vmatpush1.msra.mxu0 0.0
      %1938 = vmatprep.subr.mxu0 0.0
      %1939 = vmatpush1.msra.mxu0 0.0
      %1940 = vmatprep.subr.mxu0 0.0
      %1941 = vmatpush1.msra.mxu0 0.0
      %1942 = vmatprep.subr.mxu0 0.0
      %1943 = vmatpush1.msra.mxu0 0.0
      %1944 = vmatprep.subr.mxu0 0.0
      %1945 = vmatpush1.msra.mxu0 0.0
      %1946 = vmatprep.subr.mxu0 0.0
      %1947 = vmatpush1.msra.mxu0 0.0
      %1948 = vmatprep.subr.mxu0 0.0
      %1949 = vmatpush1.msra.mxu0 0.0
      %1950 = vmatprep.subr.mxu0 0.0
      %1951 = vmatpush1.msra.mxu0 0.0
      %1952 = vmatprep.subr.mxu0 0.0
      %1953 = vmatpush1.msra.mxu0 0.0
      %1954 = vmatprep.mubr.f32.mxu0 0.0
      %1955 = vmatmul.mubr.f32.gmra.mrb[0].mxu0 %v1873
      %v1956 = vpop.f32.mrb[0].mxu0
      %v1957 = vadd.f32 0.0, %v1956
      %v1958 = vpop.f32.mrb[0].mxu0
      %1959 = vmatprep.mubr.f32.mxu0 0.0
      %1960 = vmatmul.mubr.f32.gmra.mrb[0].mxu0 %v1876
      %v1961 = vpop.f32.mrb[0].mxu0
      %v1962 = vadd.f32 0.0, %v1961
      %v1963 = vpop.f32.mrb[0].mxu0
      %1964 = vmatprep.mubr.f32.mxu0 0.0
      %1965 = vmatmul.mubr.f32.gmra.mrb[0].mxu0 %v1879
      %v1966 = vpop.f32.mrb[0].mxu0
      %v1967 = vadd.f32 0.0, %v1966
      %v1968 = vpop.f32.mrb[0].mxu0
      %1969 = vmatprep.mubr.f32.mxu0 0.0
      %1970 = vmatmul.mubr.f32.gmra.mrb[0].mxu0 %v1882
      %v1971 = vpop.f32.mrb[0].mxu0
      %v1972 = vadd.f32 0.0, %v1971
      %v1973 = vpop.f32.mrb[0].mxu0
      %1974 = vmatprep.mubr.f32.mxu0 0.0
      %1975 = vmatmul.mubr.f32.gmra.mrb[0].mxu0 %v1885
      %v1976 = vpop.f32.mrb[0].mxu0
      %v1977 = vadd.f32 0.0, %v1976
      %v1978 = vpop.f32.mrb[0].mxu0
      %1979 = vmatprep.mubr.f32.mxu0 0.0
      %1980 = vmatmul.mubr.f32.gmra.mrb[0].mxu0 %v1888
      %v1981 = vpop.f32.mrb[0].mxu0
      %v1982 = vadd.f32 0.0, %v1981
      %v1983 = vpop.f32.mrb[0].mxu0
      %1984 = vdwg.mxu0
      %v1985 = vadd.f32 %v1855, %v1957
      %v1986 = vadd.f32 %v1856, %v1962
      %v1987 = vadd.f32 %v1857, %v1967
      %v1988 = vadd.f32 %v1858, %v1972
      %v1989 = vadd.f32 %v1859, %v1977
      %v1990 = vadd.f32 %v1860, %v1982
      %v1991 = vld [vmem:[#allocation2 + $0x12] sm:$0xff]
      %v1992 = vld [vmem:[#allocation2 + $0x1a] sm:$0xff]
      %v1993 = vld [vmem:[#allocation2 + $0x22] sm:$0xff]
      %v1994 = vld [vmem:[#allocation2 + $0x2a] sm:$0xff]
      %v1995 = vld [vmem:[#allocation2 + $0x32] sm:$0xff]
      %v1996 = vld [vmem:[#allocation2 + $0x3a] sm:$0xff]
      %s1997 = scalar_lea.vmem %s3, 256
      %v1998 = vld [vmem:[%s1997] sm:$0xff]
      %v1999 = vld [vmem:[%s1997 + $0x8] sm:$0xff]
      %v2000 = vld [vmem:[%s1997 + $0x10] sm:$0xff]
      %v2001 = vld [vmem:[%s1997 + $0x18] sm:$0xff]
      %v2003 = vsel %vm934, %v1991, 0
      %v2006 = vsel %vm934, %v1992, 0
      %v2009 = vsel %vm934, %v1993, 0
      %v2012 = vsel %vm934, %v1994, 0
      %v2015 = vsel %vm934, %v1995, 0
      %v2018 = vsel %vm934, %v1996, 0
      %2020 = vmatprep.subr.mxu0 0.0
      %2021 = vmatpush1.msra.mxu0 %v1998
      %2022 = vmatprep.subr.mxu0 0.0
      %2023 = vmatpush1.msra.mxu0 %v1999
      %2024 = vmatprep.subr.mxu0 0.0
      %2025 = vmatpush1.msra.mxu0 %v2000
      %2026 = vmatprep.subr.mxu0 0.0
      %2027 = vmatpush1.msra.mxu0 %v2001
      %2028 = vmatprep.subr.mxu0 0.0
      %2029 = vmatpush1.msra.mxu0 0.0
      %2030 = vmatprep.subr.mxu0 0.0
      %2031 = vmatpush1.msra.mxu0 0.0
      %2032 = vmatprep.subr.mxu0 0.0
      %2033 = vmatpush1.msra.mxu0 0.0
      %2034 = vmatprep.subr.mxu0 0.0
      %2035 = vmatpush1.msra.mxu0 0.0
      %2036 = vmatprep.subr.mxu0 0.0
      %2037 = vmatpush1.msra.mxu0 0.0
      %2038 = vmatprep.subr.mxu0 0.0
      %2039 = vmatpush1.msra.mxu0 0.0
      %2040 = vmatprep.subr.mxu0 0.0
      %2041 = vmatpush1.msra.mxu0 0.0
      %2042 = vmatprep.subr.mxu0 0.0
      %2043 = vmatpush1.msra.mxu0 0.0
      %2044 = vmatprep.subr.mxu0 0.0
      %2045 = vmatpush1.msra.mxu0 0.0
      %2046 = vmatprep.subr.mxu0 0.0
      %2047 = vmatpush1.msra.mxu0 0.0
      %2048 = vmatprep.subr.mxu0 0.0
      %2049 = vmatpush1.msra.mxu0 0.0
      %2050 = vmatprep.subr.mxu0 0.0
      %2051 = vmatpush1.msra.mxu0 0.0
      %2052 = vmatprep.subr.mxu0 0.0
      %2053 = vmatpush1.msra.mxu0 0.0
      %2054 = vmatprep.subr.mxu0 0.0
      %2055 = vmatpush1.msra.mxu0 0.0
      %2056 = vmatprep.subr.mxu0 0.0
      %2057 = vmatpush1.msra.mxu0 0.0
      %2058 = vmatprep.subr.mxu0 0.0
      %2059 = vmatpush1.msra.mxu0 0.0
      %2060 = vmatprep.subr.mxu0 0.0
      %2061 = vmatpush1.msra.mxu0 0.0
      %2062 = vmatprep.subr.mxu0 0.0
      %2063 = vmatpush1.msra.mxu0 0.0
      %2064 = vmatprep.subr.mxu0 0.0
      %2065 = vmatpush1.msra.mxu0 0.0
      %2066 = vmatprep.subr.mxu0 0.0
      %2067 = vmatpush1.msra.mxu0 0.0
      %2068 = vmatprep.subr.mxu0 0.0
      %2069 = vmatpush1.msra.mxu0 0.0
      %2070 = vmatprep.subr.mxu0 0.0
      %2071 = vmatpush1.msra.mxu0 0.0
      %2072 = vmatprep.subr.mxu0 0.0
      %2073 = vmatpush1.msra.mxu0 0.0
      %2074 = vmatprep.subr.mxu0 0.0
      %2075 = vmatpush1.msra.mxu0 0.0
      %2076 = vmatprep.subr.mxu0 0.0
      %2077 = vmatpush1.msra.mxu0 0.0
      %2078 = vmatprep.subr.mxu0 0.0
      %2079 = vmatpush1.msra.mxu0 0.0
      %2080 = vmatprep.subr.mxu0 0.0
      %2081 = vmatpush1.msra.mxu0 0.0
      %2082 = vmatprep.subr.mxu0 0.0
      %2083 = vmatpush1.msra.mxu0 0.0
      %2084 = vmatprep.mubr.f32.mxu0 0.0
      %2085 = vmatmul.mubr.f32.gmra.mrb[0].mxu0 %v2003
      %v2086 = vpop.f32.mrb[0].mxu0
      %v2087 = vadd.f32 0.0, %v2086
      %v2088 = vpop.f32.mrb[0].mxu0
      %2089 = vmatprep.mubr.f32.mxu0 0.0
      %2090 = vmatmul.mubr.f32.gmra.mrb[0].mxu0 %v2006
      %v2091 = vpop.f32.mrb[0].mxu0
      %v2092 = vadd.f32 0.0, %v2091
      %v2093 = vpop.f32.mrb[0].mxu0
      %2094 = vmatprep.mubr.f32.mxu0 0.0
      %2095 = vmatmul.mubr.f32.gmra.mrb[0].mxu0 %v2009
      %v2096 = vpop.f32.mrb[0].mxu0
      %v2097 = vadd.f32 0.0, %v2096
      %v2098 = vpop.f32.mrb[0].mxu0
      %2099 = vmatprep.mubr.f32.mxu0 0.0
      %2100 = vmatmul.mubr.f32.gmra.mrb[0].mxu0 %v2012
      %v2101 = vpop.f32.mrb[0].mxu0
      %v2102 = vadd.f32 0.0, %v2101
      %v2103 = vpop.f32.mrb[0].mxu0
      %2104 = vmatprep.mubr.f32.mxu0 0.0
      %2105 = vmatmul.mubr.f32.gmra.mrb[0].mxu0 %v2015
      %v2106 = vpop.f32.mrb[0].mxu0
      %v2107 = vadd.f32 0.0, %v2106
      %v2108 = vpop.f32.mrb[0].mxu0
      %2109 = vmatprep.mubr.f32.mxu0 0.0
      %2110 = vmatmul.mubr.f32.gmra.mrb[0].mxu0 %v2018
      %v2111 = vpop.f32.mrb[0].mxu0
      %v2112 = vadd.f32 0.0, %v2111
      %v2113 = vpop.f32.mrb[0].mxu0
      %2114 = vdwg.mxu0
      %v2115 = vadd.f32 %v1985, %v2087
      %v2116 = vadd.f32 %v1986, %v2092
      %v2117 = vadd.f32 %v1987, %v2097
      %v2118 = vadd.f32 %v1988, %v2102
      %v2119 = vadd.f32 %v1989, %v2107
      %v2120 = vadd.f32 %v1990, %v2112
      %v2121 = vld [vmem:[#allocation2 + $0x13] sm:$0xff]
      %v2122 = vld [vmem:[#allocation2 + $0x1b] sm:$0xff]
      %v2123 = vld [vmem:[#allocation2 + $0x23] sm:$0xff]
      %v2124 = vld [vmem:[#allocation2 + $0x2b] sm:$0xff]
      %v2125 = vld [vmem:[#allocation2 + $0x33] sm:$0xff]
      %v2126 = vld [vmem:[#allocation2 + $0x3b] sm:$0xff]
      %s2127 = scalar_lea.vmem %s3, 288
      %v2128 = vld [vmem:[%s2127] sm:$0xff]
      %v2129 = vld [vmem:[%s2127 + $0x8] sm:$0xff]
      %v2130 = vld [vmem:[%s2127 + $0x10] sm:$0xff]
      %v2131 = vld [vmem:[%s2127 + $0x18] sm:$0xff]
      %v2133 = vsel %vm934, %v2121, 0
      %v2136 = vsel %vm934, %v2122, 0
      %v2139 = vsel %vm934, %v2123, 0
      %v2142 = vsel %vm934, %v2124, 0
      %v2145 = vsel %vm934, %v2125, 0
      %v2148 = vsel %vm934, %v2126, 0
      %2150 = vmatprep.subr.mxu0 0.0
      %2151 = vmatpush1.msra.mxu0 %v2128
      %2152 = vmatprep.subr.mxu0 0.0
      %2153 = vmatpush1.msra.mxu0 %v2129
      %2154 = vmatprep.subr.mxu0 0.0
      %2155 = vmatpush1.msra.mxu0 %v2130
      %2156 = vmatprep.subr.mxu0 0.0
      %2157 = vmatpush1.msra.mxu0 %v2131
      %2158 = vmatprep.subr.mxu0 0.0
      %2159 = vmatpush1.msra.mxu0 0.0
      %2160 = vmatprep.subr.mxu0 0.0
      %2161 = vmatpush1.msra.mxu0 0.0
      %2162 = vmatprep.subr.mxu0 0.0
      %2163 = vmatpush1.msra.mxu0 0.0
      %2164 = vmatprep.subr.mxu0 0.0
      %2165 = vmatpush1.msra.mxu0 0.0
      %2166 = vmatprep.subr.mxu0 0.0
      %2167 = vmatpush1.msra.mxu0 0.0
      %2168 = vmatprep.subr.mxu0 0.0
      %2169 = vmatpush1.msra.mxu0 0.0
      %2170 = vmatprep.subr.mxu0 0.0
      %2171 = vmatpush1.msra.mxu0 0.0
      %2172 = vmatprep.subr.mxu0 0.0
      %2173 = vmatpush1.msra.mxu0 0.0
      %2174 = vmatprep.subr.mxu0 0.0
      %2175 = vmatpush1.msra.mxu0 0.0
      %2176 = vmatprep.subr.mxu0 0.0
      %2177 = vmatpush1.msra.mxu0 0.0
      %2178 = vmatprep.subr.mxu0 0.0
      %2179 = vmatpush1.msra.mxu0 0.0
      %2180 = vmatprep.subr.mxu0 0.0
      %2181 = vmatpush1.msra.mxu0 0.0
      %2182 = vmatprep.subr.mxu0 0.0
      %2183 = vmatpush1.msra.mxu0 0.0
      %2184 = vmatprep.subr.mxu0 0.0
      %2185 = vmatpush1.msra.mxu0 0.0
      %2186 = vmatprep.subr.mxu0 0.0
      %2187 = vmatpush1.msra.mxu0 0.0
      %2188 = vmatprep.subr.mxu0 0.0
      %2189 = vmatpush1.msra.mxu0 0.0
      %2190 = vmatprep.subr.mxu0 0.0
      %2191 = vmatpush1.msra.mxu0 0.0
      %2192 = vmatprep.subr.mxu0 0.0
      %2193 = vmatpush1.msra.mxu0 0.0
      %2194 = vmatprep.subr.mxu0 0.0
      %2195 = vmatpush1.msra.mxu0 0.0
      %2196 = vmatprep.subr.mxu0 0.0
      %2197 = vmatpush1.msra.mxu0 0.0
      %2198 = vmatprep.subr.mxu0 0.0
      %2199 = vmatpush1.msra.mxu0 0.0
      %2200 = vmatprep.subr.mxu0 0.0
      %2201 = vmatpush1.msra.mxu0 0.0
      %2202 = vmatprep.subr.mxu0 0.0
      %2203 = vmatpush1.msra.mxu0 0.0
      %2204 = vmatprep.subr.mxu0 0.0
      %2205 = vmatpush1.msra.mxu0 0.0
      %2206 = vmatprep.subr.mxu0 0.0
      %2207 = vmatpush1.msra.mxu0 0.0
      %2208 = vmatprep.subr.mxu0 0.0
      %2209 = vmatpush1.msra.mxu0 0.0
      %2210 = vmatprep.subr.mxu0 0.0
      %2211 = vmatpush1.msra.mxu0 0.0
      %2212 = vmatprep.subr.mxu0 0.0
      %2213 = vmatpush1.msra.mxu0 0.0
      %2214 = vmatprep.mubr.f32.mxu0 0.0
      %2215 = vmatmul.mubr.f32.gmra.mrb[0].mxu0 %v2133
      %v2216 = vpop.f32.mrb[0].mxu0
      %v2217 = vadd.f32 0.0, %v2216
      %v2218 = vpop.f32.mrb[0].mxu0
      %2219 = vmatprep.mubr.f32.mxu0 0.0
      %2220 = vmatmul.mubr.f32.gmra.mrb[0].mxu0 %v2136
      %v2221 = vpop.f32.mrb[0].mxu0
      %v2222 = vadd.f32 0.0, %v2221
      %v2223 = vpop.f32.mrb[0].mxu0
      %2224 = vmatprep.mubr.f32.mxu0 0.0
      %2225 = vmatmul.mubr.f32.gmra.mrb[0].mxu0 %v2139
      %v2226 = vpop.f32.mrb[0].mxu0
      %v2227 = vadd.f32 0.0, %v2226
      %v2228 = vpop.f32.mrb[0].mxu0
      %2229 = vmatprep.mubr.f32.mxu0 0.0
      %2230 = vmatmul.mubr.f32.gmra.mrb[0].mxu0 %v2142
      %v2231 = vpop.f32.mrb[0].mxu0
      %v2232 = vadd.f32 0.0, %v2231
      %v2233 = vpop.f32.mrb[0].mxu0
      %2234 = vmatprep.mubr.f32.mxu0 0.0
      %2235 = vmatmul.mubr.f32.gmra.mrb[0].mxu0 %v2145
      %v2236 = vpop.f32.mrb[0].mxu0
      %v2237 = vadd.f32 0.0, %v2236
      %v2238 = vpop.f32.mrb[0].mxu0
      %2239 = vmatprep.mubr.f32.mxu0 0.0
      %2240 = vmatmul.mubr.f32.gmra.mrb[0].mxu0 %v2148
      %v2241 = vpop.f32.mrb[0].mxu0
      %v2242 = vadd.f32 0.0, %v2241
      %v2243 = vpop.f32.mrb[0].mxu0
      %2244 = vdwg.mxu0
      %v2245 = vadd.f32 %v2115, %v2217
      %v2246 = vadd.f32 %v2116, %v2222
      %v2247 = vadd.f32 %v2117, %v2227
      %v2248 = vadd.f32 %v2118, %v2232
      %v2249 = vadd.f32 %v2119, %v2237
      %v2250 = vadd.f32 %v2120, %v2242
      %v2251 = vld [vmem:[#allocation2 + $0x14] sm:$0xff]
      %v2252 = vld [vmem:[#allocation2 + $0x1c] sm:$0xff]
      %v2253 = vld [vmem:[#allocation2 + $0x24] sm:$0xff]
      %v2254 = vld [vmem:[#allocation2 + $0x2c] sm:$0xff]
      %v2255 = vld [vmem:[#allocation2 + $0x34] sm:$0xff]
      %v2256 = vld [vmem:[#allocation2 + $0x3c] sm:$0xff]
      %s2257 = scalar_lea.vmem %s3, 320
      %v2258 = vld [vmem:[%s2257] sm:$0xff]
      %v2259 = vld [vmem:[%s2257 + $0x8] sm:$0xff]
      %v2260 = vld [vmem:[%s2257 + $0x10] sm:$0xff]
      %v2261 = vld [vmem:[%s2257 + $0x18] sm:$0xff]
      %v2263 = vsel %vm934, %v2251, 0
      %v2266 = vsel %vm934, %v2252, 0
      %v2269 = vsel %vm934, %v2253, 0
      %v2272 = vsel %vm934, %v2254, 0
      %v2275 = vsel %vm934, %v2255, 0
      %v2278 = vsel %vm934, %v2256, 0
      %2280 = vmatprep.subr.mxu0 0.0
      %2281 = vmatpush1.msra.mxu0 %v2258
      %2282 = vmatprep.subr.mxu0 0.0
      %2283 = vmatpush1.msra.mxu0 %v2259
      %2284 = vmatprep.subr.mxu0 0.0
      %2285 = vmatpush1.msra.mxu0 %v2260
      %2286 = vmatprep.subr.mxu0 0.0
      %2287 = vmatpush1.msra.mxu0 %v2261
      %2288 = vmatprep.subr.mxu0 0.0
      %2289 = vmatpush1.msra.mxu0 0.0
      %2290 = vmatprep.subr.mxu0 0.0
      %2291 = vmatpush1.msra.mxu0 0.0
      %2292 = vmatprep.subr.mxu0 0.0
      %2293 = vmatpush1.msra.mxu0 0.0
      %2294 = vmatprep.subr.mxu0 0.0
      %2295 = vmatpush1.msra.mxu0 0.0
      %2296 = vmatprep.subr.mxu0 0.0
      %2297 = vmatpush1.msra.mxu0 0.0
      %2298 = vmatprep.subr.mxu0 0.0
      %2299 = vmatpush1.msra.mxu0 0.0
      %2300 = vmatprep.subr.mxu0 0.0
      %2301 = vmatpush1.msra.mxu0 0.0
      %2302 = vmatprep.subr.mxu0 0.0
      %2303 = vmatpush1.msra.mxu0 0.0
      %2304 = vmatprep.subr.mxu0 0.0
      %2305 = vmatpush1.msra.mxu0 0.0
      %2306 = vmatprep.subr.mxu0 0.0
      %2307 = vmatpush1.msra.mxu0 0.0
      %2308 = vmatprep.subr.mxu0 0.0
      %2309 = vmatpush1.msra.mxu0 0.0
      %2310 = vmatprep.subr.mxu0 0.0
      %2311 = vmatpush1.msra.mxu0 0.0
      %2312 = vmatprep.subr.mxu0 0.0
      %2313 = vmatpush1.msra.mxu0 0.0
      %2314 = vmatprep.subr.mxu0 0.0
      %2315 = vmatpush1.msra.mxu0 0.0
      %2316 = vmatprep.subr.mxu0 0.0
      %2317 = vmatpush1.msra.mxu0 0.0
      %2318 = vmatprep.subr.mxu0 0.0
      %2319 = vmatpush1.msra.mxu0 0.0
      %2320 = vmatprep.subr.mxu0 0.0
      %2321 = vmatpush1.msra.mxu0 0.0
      %2322 = vmatprep.subr.mxu0 0.0
      %2323 = vmatpush1.msra.mxu0 0.0
      %2324 = vmatprep.subr.mxu0 0.0
      %2325 = vmatpush1.msra.mxu0 0.0
      %2326 = vmatprep.subr.mxu0 0.0
      %2327 = vmatpush1.msra.mxu0 0.0
      %2328 = vmatprep.subr.mxu0 0.0
      %2329 = vmatpush1.msra.mxu0 0.0
      %2330 = vmatprep.subr.mxu0 0.0
      %2331 = vmatpush1.msra.mxu0 0.0
      %2332 = vmatprep.subr.mxu0 0.0
      %2333 = vmatpush1.msra.mxu0 0.0
      %2334 = vmatprep.subr.mxu0 0.0
      %2335 = vmatpush1.msra.mxu0 0.0
      %2336 = vmatprep.subr.mxu0 0.0
      %2337 = vmatpush1.msra.mxu0 0.0
      %2338 = vmatprep.subr.mxu0 0.0
      %2339 = vmatpush1.msra.mxu0 0.0
      %2340 = vmatprep.subr.mxu0 0.0
      %2341 = vmatpush1.msra.mxu0 0.0
      %2342 = vmatprep.subr.mxu0 0.0
      %2343 = vmatpush1.msra.mxu0 0.0
      %2344 = vmatprep.mubr.f32.mxu0 0.0
      %2345 = vmatmul.mubr.f32.gmra.mrb[0].mxu0 %v2263
      %v2346 = vpop.f32.mrb[0].mxu0
      %v2347 = vadd.f32 0.0, %v2346
      %v2348 = vpop.f32.mrb[0].mxu0
      %2349 = vmatprep.mubr.f32.mxu0 0.0
      %2350 = vmatmul.mubr.f32.gmra.mrb[0].mxu0 %v2266
      %v2351 = vpop.f32.mrb[0].mxu0
      %v2352 = vadd.f32 0.0, %v2351
      %v2353 = vpop.f32.mrb[0].mxu0
      %2354 = vmatprep.mubr.f32.mxu0 0.0
      %2355 = vmatmul.mubr.f32.gmra.mrb[0].mxu0 %v2269
      %v2356 = vpop.f32.mrb[0].mxu0
      %v2357 = vadd.f32 0.0, %v2356
      %v2358 = vpop.f32.mrb[0].mxu0
      %2359 = vmatprep.mubr.f32.mxu0 0.0
      %2360 = vmatmul.mubr.f32.gmra.mrb[0].mxu0 %v2272
      %v2361 = vpop.f32.mrb[0].mxu0
      %v2362 = vadd.f32 0.0, %v2361
      %v2363 = vpop.f32.mrb[0].mxu0
      %2364 = vmatprep.mubr.f32.mxu0 0.0
      %2365 = vmatmul.mubr.f32.gmra.mrb[0].mxu0 %v2275
      %v2366 = vpop.f32.mrb[0].mxu0
      %v2367 = vadd.f32 0.0, %v2366
      %v2368 = vpop.f32.mrb[0].mxu0
      %2369 = vmatprep.mubr.f32.mxu0 0.0
      %2370 = vmatmul.mubr.f32.gmra.mrb[0].mxu0 %v2278
      %v2371 = vpop.f32.mrb[0].mxu0
      %v2372 = vadd.f32 0.0, %v2371
      %v2373 = vpop.f32.mrb[0].mxu0
      %2374 = vdwg.mxu0
      %v2375 = vadd.f32 %v2245, %v2347
      %v2376 = vadd.f32 %v2246, %v2352
      %v2377 = vadd.f32 %v2247, %v2357
      %v2378 = vadd.f32 %v2248, %v2362
      %v2379 = vadd.f32 %v2249, %v2367
      %v2380 = vadd.f32 %v2250, %v2372
      %v2381 = vld [vmem:[#allocation2 + $0x15] sm:$0xff]
      %v2382 = vld [vmem:[#allocation2 + $0x1d] sm:$0xff]
      %v2383 = vld [vmem:[#allocation2 + $0x25] sm:$0xff]
      %v2384 = vld [vmem:[#allocation2 + $0x2d] sm:$0xff]
      %v2385 = vld [vmem:[#allocation2 + $0x35] sm:$0xff]
      %v2386 = vld [vmem:[#allocation2 + $0x3d] sm:$0xff]
      %s2387 = scalar_lea.vmem %s3, 352
      %v2388 = vld [vmem:[%s2387] sm:$0xff]
      %v2389 = vld [vmem:[%s2387 + $0x8] sm:$0xff]
      %v2390 = vld [vmem:[%s2387 + $0x10] sm:$0xff]
      %v2391 = vld [vmem:[%s2387 + $0x18] sm:$0xff]
      %v2393 = vsel %vm934, %v2381, 0
      %v2396 = vsel %vm934, %v2382, 0
      %v2399 = vsel %vm934, %v2383, 0
      %v2402 = vsel %vm934, %v2384, 0
      %v2405 = vsel %vm934, %v2385, 0
      %v2408 = vsel %vm934, %v2386, 0
      %2410 = vmatprep.subr.mxu0 0.0
      %2411 = vmatpush1.msra.mxu0 %v2388
      %2412 = vmatprep.subr.mxu0 0.0
      %2413 = vmatpush1.msra.mxu0 %v2389
      %2414 = vmatprep.subr.mxu0 0.0
      %2415 = vmatpush1.msra.mxu0 %v2390
      %2416 = vmatprep.subr.mxu0 0.0
      %2417 = vmatpush1.msra.mxu0 %v2391
      %2418 = vmatprep.subr.mxu0 0.0
      %2419 = vmatpush1.msra.mxu0 0.0
      %2420 = vmatprep.subr.mxu0 0.0
      %2421 = vmatpush1.msra.mxu0 0.0
      %2422 = vmatprep.subr.mxu0 0.0
      %2423 = vmatpush1.msra.mxu0 0.0
      %2424 = vmatprep.subr.mxu0 0.0
      %2425 = vmatpush1.msra.mxu0 0.0
      %2426 = vmatprep.subr.mxu0 0.0
      %2427 = vmatpush1.msra.mxu0 0.0
      %2428 = vmatprep.subr.mxu0 0.0
      %2429 = vmatpush1.msra.mxu0 0.0
      %2430 = vmatprep.subr.mxu0 0.0
      %2431 = vmatpush1.msra.mxu0 0.0
      %2432 = vmatprep.subr.mxu0 0.0
      %2433 = vmatpush1.msra.mxu0 0.0
      %2434 = vmatprep.subr.mxu0 0.0
      %2435 = vmatpush1.msra.mxu0 0.0
      %2436 = vmatprep.subr.mxu0 0.0
      %2437 = vmatpush1.msra.mxu0 0.0
      %2438 = vmatprep.subr.mxu0 0.0
      %2439 = vmatpush1.msra.mxu0 0.0
      %2440 = vmatprep.subr.mxu0 0.0
      %2441 = vmatpush1.msra.mxu0 0.0
      %2442 = vmatprep.subr.mxu0 0.0
      %2443 = vmatpush1.msra.mxu0 0.0
      %2444 = vmatprep.subr.mxu0 0.0
      %2445 = vmatpush1.msra.mxu0 0.0
      %2446 = vmatprep.subr.mxu0 0.0
      %2447 = vmatpush1.msra.mxu0 0.0
      %2448 = vmatprep.subr.mxu0 0.0
      %2449 = vmatpush1.msra.mxu0 0.0
      %2450 = vmatprep.subr.mxu0 0.0
      %2451 = vmatpush1.msra.mxu0 0.0
      %2452 = vmatprep.subr.mxu0 0.0
      %2453 = vmatpush1.msra.mxu0 0.0
      %2454 = vmatprep.subr.mxu0 0.0
      %2455 = vmatpush1.msra.mxu0 0.0
      %2456 = vmatprep.subr.mxu0 0.0
      %2457 = vmatpush1.msra.mxu0 0.0
      %2458 = vmatprep.subr.mxu0 0.0
      %2459 = vmatpush1.msra.mxu0 0.0
      %2460 = vmatprep.subr.mxu0 0.0
      %2461 = vmatpush1.msra.mxu0 0.0
      %2462 = vmatprep.subr.mxu0 0.0
      %2463 = vmatpush1.msra.mxu0 0.0
      %2464 = vmatprep.subr.mxu0 0.0
      %2465 = vmatpush1.msra.mxu0 0.0
      %2466 = vmatprep.subr.mxu0 0.0
      %2467 = vmatpush1.msra.mxu0 0.0
      %2468 = vmatprep.subr.mxu0 0.0
      %2469 = vmatpush1.msra.mxu0 0.0
      %2470 = vmatprep.subr.mxu0 0.0
      %2471 = vmatpush1.msra.mxu0 0.0
      %2472 = vmatprep.subr.mxu0 0.0
      %2473 = vmatpush1.msra.mxu0 0.0
      %2474 = vmatprep.mubr.f32.mxu0 0.0
      %2475 = vmatmul.mubr.f32.gmra.mrb[0].mxu0 %v2393
      %v2476 = vpop.f32.mrb[0].mxu0
      %v2477 = vadd.f32 0.0, %v2476
      %v2478 = vpop.f32.mrb[0].mxu0
      %2479 = vmatprep.mubr.f32.mxu0 0.0
      %2480 = vmatmul.mubr.f32.gmra.mrb[0].mxu0 %v2396
      %v2481 = vpop.f32.mrb[0].mxu0
      %v2482 = vadd.f32 0.0, %v2481
      %v2483 = vpop.f32.mrb[0].mxu0
      %2484 = vmatprep.mubr.f32.mxu0 0.0
      %2485 = vmatmul.mubr.f32.gmra.mrb[0].mxu0 %v2399
      %v2486 = vpop.f32.mrb[0].mxu0
      %v2487 = vadd.f32 0.0, %v2486
      %v2488 = vpop.f32.mrb[0].mxu0
      %2489 = vmatprep.mubr.f32.mxu0 0.0
      %2490 = vmatmul.mubr.f32.gmra.mrb[0].mxu0 %v2402
      %v2491 = vpop.f32.mrb[0].mxu0
      %v2492 = vadd.f32 0.0, %v2491
      %v2493 = vpop.f32.mrb[0].mxu0
      %2494 = vmatprep.mubr.f32.mxu0 0.0
      %2495 = vmatmul.mubr.f32.gmra.mrb[0].mxu0 %v2405
      %v2496 = vpop.f32.mrb[0].mxu0
      %v2497 = vadd.f32 0.0, %v2496
      %v2498 = vpop.f32.mrb[0].mxu0
      %2499 = vmatprep.mubr.f32.mxu0 0.0
      %2500 = vmatmul.mubr.f32.gmra.mrb[0].mxu0 %v2408
      %v2501 = vpop.f32.mrb[0].mxu0
      %v2502 = vadd.f32 0.0, %v2501
      %v2503 = vpop.f32.mrb[0].mxu0
      %2504 = vdwg.mxu0
      %v2505 = vadd.f32 %v2375, %v2477
      %v2506 = vadd.f32 %v2376, %v2482
      %v2507 = vadd.f32 %v2377, %v2487
      %v2508 = vadd.f32 %v2378, %v2492
      %v2509 = vadd.f32 %v2379, %v2497
      %v2510 = vadd.f32 %v2380, %v2502
      %v2511 = vld [vmem:[#allocation2 + $0x1b] sm:$0xff]
      %v2512 = vld [vmem:[#allocation2 + $0x23] sm:$0xff]
      %v2513 = vld [vmem:[#allocation2 + $0x2b] sm:$0xff]
      %v2514 = vld [vmem:[#allocation2 + $0x33] sm:$0xff]
      %v2515 = vld [vmem:[#allocation2 + $0x3b] sm:$0xff]
      %v2516 = vld [vmem:[#allocation2 + $0x43] sm:$0xff]
      %s2517 = scalar_lea.vmem %s3, 384
      %v2518 = vld [vmem:[%s2517] sm:$0xff]
      %v2519 = vld [vmem:[%s2517 + $0x8] sm:$0xff]
      %v2520 = vld [vmem:[%s2517 + $0x10] sm:$0xff]
      %v2521 = vld [vmem:[%s2517 + $0x18] sm:$0xff]
      %v2523 = vsel %vm934, %v2511, 0
      %v2526 = vsel %vm934, %v2512, 0
      %v2529 = vsel %vm934, %v2513, 0
      %v2532 = vsel %vm934, %v2514, 0
      %v2535 = vsel %vm934, %v2515, 0
      %v2538 = vsel %vm934, %v2516, 0
      %2540 = vmatprep.subr.mxu0 0.0
      %2541 = vmatpush1.msra.mxu0 %v2518
      %2542 = vmatprep.subr.mxu0 0.0
      %2543 = vmatpush1.msra.mxu0 %v2519
      %2544 = vmatprep.subr.mxu0 0.0
      %2545 = vmatpush1.msra.mxu0 %v2520
      %2546 = vmatprep.subr.mxu0 0.0
      %2547 = vmatpush1.msra.mxu0 %v2521
      %2548 = vmatprep.subr.mxu0 0.0
      %2549 = vmatpush1.msra.mxu0 0.0
      %2550 = vmatprep.subr.mxu0 0.0
      %2551 = vmatpush1.msra.mxu0 0.0
      %2552 = vmatprep.subr.mxu0 0.0
      %2553 = vmatpush1.msra.mxu0 0.0
      %2554 = vmatprep.subr.mxu0 0.0
      %2555 = vmatpush1.msra.mxu0 0.0
      %2556 = vmatprep.subr.mxu0 0.0
      %2557 = vmatpush1.msra.mxu0 0.0
      %2558 = vmatprep.subr.mxu0 0.0
      %2559 = vmatpush1.msra.mxu0 0.0
      %2560 = vmatprep.subr.mxu0 0.0
      %2561 = vmatpush1.msra.mxu0 0.0
      %2562 = vmatprep.subr.mxu0 0.0
      %2563 = vmatpush1.msra.mxu0 0.0
      %2564 = vmatprep.subr.mxu0 0.0
      %2565 = vmatpush1.msra.mxu0 0.0
      %2566 = vmatprep.subr.mxu0 0.0
      %2567 = vmatpush1.msra.mxu0 0.0
      %2568 = vmatprep.subr.mxu0 0.0
      %2569 = vmatpush1.msra.mxu0 0.0
      %2570 = vmatprep.subr.mxu0 0.0
      %2571 = vmatpush1.msra.mxu0 0.0
      %2572 = vmatprep.subr.mxu0 0.0
      %2573 = vmatpush1.msra.mxu0 0.0
      %2574 = vmatprep.subr.mxu0 0.0
      %2575 = vmatpush1.msra.mxu0 0.0
      %2576 = vmatprep.subr.mxu0 0.0
      %2577 = vmatpush1.msra.mxu0 0.0
      %2578 = vmatprep.subr.mxu0 0.0
      %2579 = vmatpush1.msra.mxu0 0.0
      %2580 = vmatprep.subr.mxu0 0.0
      %2581 = vmatpush1.msra.mxu0 0.0
      %2582 = vmatprep.subr.mxu0 0.0
      %2583 = vmatpush1.msra.mxu0 0.0
      %2584 = vmatprep.subr.mxu0 0.0
      %2585 = vmatpush1.msra.mxu0 0.0
      %2586 = vmatprep.subr.mxu0 0.0
      %2587 = vmatpush1.msra.mxu0 0.0
      %2588 = vmatprep.subr.mxu0 0.0
      %2589 = vmatpush1.msra.mxu0 0.0
      %2590 = vmatprep.subr.mxu0 0.0
      %2591 = vmatpush1.msra.mxu0 0.0
      %2592 = vmatprep.subr.mxu0 0.0
      %2593 = vmatpush1.msra.mxu0 0.0
      %2594 = vmatprep.subr.mxu0 0.0
      %2595 = vmatpush1.msra.mxu0 0.0
      %2596 = vmatprep.subr.mxu0 0.0
      %2597 = vmatpush1.msra.mxu0 0.0
      %2598 = vmatprep.subr.mxu0 0.0
      %2599 = vmatpush1.msra.mxu0 0.0
      %2600 = vmatprep.subr.mxu0 0.0
      %2601 = vmatpush1.msra.mxu0 0.0
      %2602 = vmatprep.subr.mxu0 0.0
      %2603 = vmatpush1.msra.mxu0 0.0
      %2604 = vmatprep.mubr.f32.mxu0 0.0
      %2605 = vmatmul.mubr.f32.gmra.mrb[0].mxu0 %v2523
      %v2606 = vpop.f32.mrb[0].mxu0
      %v2607 = vadd.f32 0.0, %v2606
      %v2608 = vpop.f32.mrb[0].mxu0
      %2609 = vmatprep.mubr.f32.mxu0 0.0
      %2610 = vmatmul.mubr.f32.gmra.mrb[0].mxu0 %v2526
      %v2611 = vpop.f32.mrb[0].mxu0
      %v2612 = vadd.f32 0.0, %v2611
      %v2613 = vpop.f32.mrb[0].mxu0
      %2614 = vmatprep.mubr.f32.mxu0 0.0
      %2615 = vmatmul.mubr.f32.gmra.mrb[0].mxu0 %v2529
      %v2616 = vpop.f32.mrb[0].mxu0
      %v2617 = vadd.f32 0.0, %v2616
      %v2618 = vpop.f32.mrb[0].mxu0
      %2619 = vmatprep.mubr.f32.mxu0 0.0
      %2620 = vmatmul.mubr.f32.gmra.mrb[0].mxu0 %v2532
      %v2621 = vpop.f32.mrb[0].mxu0
      %v2622 = vadd.f32 0.0, %v2621
      %v2623 = vpop.f32.mrb[0].mxu0
      %2624 = vmatprep.mubr.f32.mxu0 0.0
      %2625 = vmatmul.mubr.f32.gmra.mrb[0].mxu0 %v2535
      %v2626 = vpop.f32.mrb[0].mxu0
      %v2627 = vadd.f32 0.0, %v2626
      %v2628 = vpop.f32.mrb[0].mxu0
      %2629 = vmatprep.mubr.f32.mxu0 0.0
      %2630 = vmatmul.mubr.f32.gmra.mrb[0].mxu0 %v2538
      %v2631 = vpop.f32.mrb[0].mxu0
      %v2632 = vadd.f32 0.0, %v2631
      %v2633 = vpop.f32.mrb[0].mxu0
      %2634 = vdwg.mxu0
      %v2635 = vadd.f32 %v2505, %v2607
      %v2636 = vadd.f32 %v2506, %v2612
      %v2637 = vadd.f32 %v2507, %v2617
      %v2638 = vadd.f32 %v2508, %v2622
      %v2639 = vadd.f32 %v2509, %v2627
      %v2640 = vadd.f32 %v2510, %v2632
      %v2641 = vld [vmem:[#allocation2 + $0x1c] sm:$0xff]
      %v2642 = vld [vmem:[#allocation2 + $0x24] sm:$0xff]
      %v2643 = vld [vmem:[#allocation2 + $0x2c] sm:$0xff]
      %v2644 = vld [vmem:[#allocation2 + $0x34] sm:$0xff]
      %v2645 = vld [vmem:[#allocation2 + $0x3c] sm:$0xff]
      %v2646 = vld [vmem:[#allocation2 + $0x44] sm:$0xff]
      %s2647 = scalar_lea.vmem %s3, 416
      %v2648 = vld [vmem:[%s2647] sm:$0xff]
      %v2649 = vld [vmem:[%s2647 + $0x8] sm:$0xff]
      %v2650 = vld [vmem:[%s2647 + $0x10] sm:$0xff]
      %v2651 = vld [vmem:[%s2647 + $0x18] sm:$0xff]
      %v2653 = vsel %vm934, %v2641, 0
      %v2656 = vsel %vm934, %v2642, 0
      %v2659 = vsel %vm934, %v2643, 0
      %v2662 = vsel %vm934, %v2644, 0
      %v2665 = vsel %vm934, %v2645, 0
      %v2668 = vsel %vm934, %v2646, 0
      %2670 = vmatprep.subr.mxu0 0.0
      %2671 = vmatpush1.msra.mxu0 %v2648
      %2672 = vmatprep.subr.mxu0 0.0
      %2673 = vmatpush1.msra.mxu0 %v2649
      %2674 = vmatprep.subr.mxu0 0.0
      %2675 = vmatpush1.msra.mxu0 %v2650
      %2676 = vmatprep.subr.mxu0 0.0
      %2677 = vmatpush1.msra.mxu0 %v2651
      %2678 = vmatprep.subr.mxu0 0.0
      %2679 = vmatpush1.msra.mxu0 0.0
      %2680 = vmatprep.subr.mxu0 0.0
      %2681 = vmatpush1.msra.mxu0 0.0
      %2682 = vmatprep.subr.mxu0 0.0
      %2683 = vmatpush1.msra.mxu0 0.0
      %2684 = vmatprep.subr.mxu0 0.0
      %2685 = vmatpush1.msra.mxu0 0.0
      %2686 = vmatprep.subr.mxu0 0.0
      %2687 = vmatpush1.msra.mxu0 0.0
      %2688 = vmatprep.subr.mxu0 0.0
      %2689 = vmatpush1.msra.mxu0 0.0
      %2690 = vmatprep.subr.mxu0 0.0
      %2691 = vmatpush1.msra.mxu0 0.0
      %2692 = vmatprep.subr.mxu0 0.0
      %2693 = vmatpush1.msra.mxu0 0.0
      %2694 = vmatprep.subr.mxu0 0.0
      %2695 = vmatpush1.msra.mxu0 0.0
      %2696 = vmatprep.subr.mxu0 0.0
      %2697 = vmatpush1.msra.mxu0 0.0
      %2698 = vmatprep.subr.mxu0 0.0
      %2699 = vmatpush1.msra.mxu0 0.0
      %2700 = vmatprep.subr.mxu0 0.0
      %2701 = vmatpush1.msra.mxu0 0.0
      %2702 = vmatprep.subr.mxu0 0.0
      %2703 = vmatpush1.msra.mxu0 0.0
      %2704 = vmatprep.subr.mxu0 0.0
      %2705 = vmatpush1.msra.mxu0 0.0
      %2706 = vmatprep.subr.mxu0 0.0
      %2707 = vmatpush1.msra.mxu0 0.0
      %2708 = vmatprep.subr.mxu0 0.0
      %2709 = vmatpush1.msra.mxu0 0.0
      %2710 = vmatprep.subr.mxu0 0.0
      %2711 = vmatpush1.msra.mxu0 0.0
      %2712 = vmatprep.subr.mxu0 0.0
      %2713 = vmatpush1.msra.mxu0 0.0
      %2714 = vmatprep.subr.mxu0 0.0
      %2715 = vmatpush1.msra.mxu0 0.0
      %2716 = vmatprep.subr.mxu0 0.0
      %2717 = vmatpush1.msra.mxu0 0.0
      %2718 = vmatprep.subr.mxu0 0.0
      %2719 = vmatpush1.msra.mxu0 0.0
      %2720 = vmatprep.subr.mxu0 0.0
      %2721 = vmatpush1.msra.mxu0 0.0
      %2722 = vmatprep.subr.mxu0 0.0
      %2723 = vmatpush1.msra.mxu0 0.0
      %2724 = vmatprep.subr.mxu0 0.0
      %2725 = vmatpush1.msra.mxu0 0.0
      %2726 = vmatprep.subr.mxu0 0.0
      %2727 = vmatpush1.msra.mxu0 0.0
      %2728 = vmatprep.subr.mxu0 0.0
      %2729 = vmatpush1.msra.mxu0 0.0
      %2730 = vmatprep.subr.mxu0 0.0
      %2731 = vmatpush1.msra.mxu0 0.0
      %2732 = vmatprep.subr.mxu0 0.0
      %2733 = vmatpush1.msra.mxu0 0.0
      %2734 = vmatprep.mubr.f32.mxu0 0.0
      %2735 = vmatmul.mubr.f32.gmra.mrb[0].mxu0 %v2653
      %v2736 = vpop.f32.mrb[0].mxu0
      %v2737 = vadd.f32 0.0, %v2736
      %v2738 = vpop.f32.mrb[0].mxu0
      %2739 = vmatprep.mubr.f32.mxu0 0.0
      %2740 = vmatmul.mubr.f32.gmra.mrb[0].mxu0 %v2656
      %v2741 = vpop.f32.mrb[0].mxu0
      %v2742 = vadd.f32 0.0, %v2741
      %v2743 = vpop.f32.mrb[0].mxu0
      %2744 = vmatprep.mubr.f32.mxu0 0.0
      %2745 = vmatmul.mubr.f32.gmra.mrb[0].mxu0 %v2659
      %v2746 = vpop.f32.mrb[0].mxu0
      %v2747 = vadd.f32 0.0, %v2746
      %v2748 = vpop.f32.mrb[0].mxu0
      %2749 = vmatprep.mubr.f32.mxu0 0.0
      %2750 = vmatmul.mubr.f32.gmra.mrb[0].mxu0 %v2662
      %v2751 = vpop.f32.mrb[0].mxu0
      %v2752 = vadd.f32 0.0, %v2751
      %v2753 = vpop.f32.mrb[0].mxu0
      %2754 = vmatprep.mubr.f32.mxu0 0.0
      %2755 = vmatmul.mubr.f32.gmra.mrb[0].mxu0 %v2665
      %v2756 = vpop.f32.mrb[0].mxu0
      %v2757 = vadd.f32 0.0, %v2756
      %v2758 = vpop.f32.mrb[0].mxu0
      %2759 = vmatprep.mubr.f32.mxu0 0.0
      %2760 = vmatmul.mubr.f32.gmra.mrb[0].mxu0 %v2668
      %v2761 = vpop.f32.mrb[0].mxu0
      %v2762 = vadd.f32 0.0, %v2761
      %v2763 = vpop.f32.mrb[0].mxu0
      %2764 = vdwg.mxu0
      %v2765 = vadd.f32 %v2635, %v2737
      %v2766 = vadd.f32 %v2636, %v2742
      %v2767 = vadd.f32 %v2637, %v2747
      %v2768 = vadd.f32 %v2638, %v2752
      %v2769 = vadd.f32 %v2639, %v2757
      %v2770 = vadd.f32 %v2640, %v2762
      %v2771 = vld [vmem:[#allocation2 + $0x1d] sm:$0xff]
      %v2772 = vld [vmem:[#allocation2 + $0x25] sm:$0xff]
      %v2773 = vld [vmem:[#allocation2 + $0x2d] sm:$0xff]
      %v2774 = vld [vmem:[#allocation2 + $0x35] sm:$0xff]
      %v2775 = vld [vmem:[#allocation2 + $0x3d] sm:$0xff]
      %v2776 = vld [vmem:[#allocation2 + $0x45] sm:$0xff]
      %s2777 = scalar_lea.vmem %s3, 448
      %v2778 = vld [vmem:[%s2777] sm:$0xff]
      %v2779 = vld [vmem:[%s2777 + $0x8] sm:$0xff]
      %v2780 = vld [vmem:[%s2777 + $0x10] sm:$0xff]
      %v2781 = vld [vmem:[%s2777 + $0x18] sm:$0xff]
      %v2783 = vsel %vm934, %v2771, 0
      %v2786 = vsel %vm934, %v2772, 0
      %v2789 = vsel %vm934, %v2773, 0
      %v2792 = vsel %vm934, %v2774, 0
      %v2795 = vsel %vm934, %v2775, 0
      %v2798 = vsel %vm934, %v2776, 0
      %2800 = vmatprep.subr.mxu0 0.0
      %2801 = vmatpush1.msra.mxu0 %v2778
      %2802 = vmatprep.subr.mxu0 0.0
      %2803 = vmatpush1.msra.mxu0 %v2779
      %2804 = vmatprep.subr.mxu0 0.0
      %2805 = vmatpush1.msra.mxu0 %v2780
      %2806 = vmatprep.subr.mxu0 0.0
      %2807 = vmatpush1.msra.mxu0 %v2781
      %2808 = vmatprep.subr.mxu0 0.0
      %2809 = vmatpush1.msra.mxu0 0.0
      %2810 = vmatprep.subr.mxu0 0.0
      %2811 = vmatpush1.msra.mxu0 0.0
      %2812 = vmatprep.subr.mxu0 0.0
      %2813 = vmatpush1.msra.mxu0 0.0
      %2814 = vmatprep.subr.mxu0 0.0
      %2815 = vmatpush1.msra.mxu0 0.0
      %2816 = vmatprep.subr.mxu0 0.0
      %2817 = vmatpush1.msra.mxu0 0.0
      %2818 = vmatprep.subr.mxu0 0.0
      %2819 = vmatpush1.msra.mxu0 0.0
      %2820 = vmatprep.subr.mxu0 0.0
      %2821 = vmatpush1.msra.mxu0 0.0
      %2822 = vmatprep.subr.mxu0 0.0
      %2823 = vmatpush1.msra.mxu0 0.0
      %2824 = vmatprep.subr.mxu0 0.0
      %2825 = vmatpush1.msra.mxu0 0.0
      %2826 = vmatprep.subr.mxu0 0.0
      %2827 = vmatpush1.msra.mxu0 0.0
      %2828 = vmatprep.subr.mxu0 0.0
      %2829 = vmatpush1.msra.mxu0 0.0
      %2830 = vmatprep.subr.mxu0 0.0
      %2831 = vmatpush1.msra.mxu0 0.0
      %2832 = vmatprep.subr.mxu0 0.0
      %2833 = vmatpush1.msra.mxu0 0.0
      %2834 = vmatprep.subr.mxu0 0.0
      %2835 = vmatpush1.msra.mxu0 0.0
      %2836 = vmatprep.subr.mxu0 0.0
      %2837 = vmatpush1.msra.mxu0 0.0
      %2838 = vmatprep.subr.mxu0 0.0
      %2839 = vmatpush1.msra.mxu0 0.0
      %2840 = vmatprep.subr.mxu0 0.0
      %2841 = vmatpush1.msra.mxu0 0.0
      %2842 = vmatprep.subr.mxu0 0.0
      %2843 = vmatpush1.msra.mxu0 0.0
      %2844 = vmatprep.subr.mxu0 0.0
      %2845 = vmatpush1.msra.mxu0 0.0
      %2846 = vmatprep.subr.mxu0 0.0
      %2847 = vmatpush1.msra.mxu0 0.0
      %2848 = vmatprep.subr.mxu0 0.0
      %2849 = vmatpush1.msra.mxu0 0.0
      %2850 = vmatprep.subr.mxu0 0.0
      %2851 = vmatpush1.msra.mxu0 0.0
      %2852 = vmatprep.subr.mxu0 0.0
      %2853 = vmatpush1.msra.mxu0 0.0
      %2854 = vmatprep.subr.mxu0 0.0
      %2855 = vmatpush1.msra.mxu0 0.0
      %2856 = vmatprep.subr.mxu0 0.0
      %2857 = vmatpush1.msra.mxu0 0.0
      %2858 = vmatprep.subr.mxu0 0.0
      %2859 = vmatpush1.msra.mxu0 0.0
      %2860 = vmatprep.subr.mxu0 0.0
      %2861 = vmatpush1.msra.mxu0 0.0
      %2862 = vmatprep.subr.mxu0 0.0
      %2863 = vmatpush1.msra.mxu0 0.0
      %2864 = vmatprep.mubr.f32.mxu0 0.0
      %2865 = vmatmul.mubr.f32.gmra.mrb[0].mxu0 %v2783
      %v2866 = vpop.f32.mrb[0].mxu0
      %v2867 = vadd.f32 0.0, %v2866
      %v2868 = vpop.f32.mrb[0].mxu0
      %2869 = vmatprep.mubr.f32.mxu0 0.0
      %2870 = vmatmul.mubr.f32.gmra.mrb[0].mxu0 %v2786
      %v2871 = vpop.f32.mrb[0].mxu0
      %v2872 = vadd.f32 0.0, %v2871
      %v2873 = vpop.f32.mrb[0].mxu0
      %2874 = vmatprep.mubr.f32.mxu0 0.0
      %2875 = vmatmul.mubr.f32.gmra.mrb[0].mxu0 %v2789
      %v2876 = vpop.f32.mrb[0].mxu0
      %v2877 = vadd.f32 0.0, %v2876
      %v2878 = vpop.f32.mrb[0].mxu0
      %2879 = vmatprep.mubr.f32.mxu0 0.0
      %2880 = vmatmul.mubr.f32.gmra.mrb[0].mxu0 %v2792
      %v2881 = vpop.f32.mrb[0].mxu0
      %v2882 = vadd.f32 0.0, %v2881
      %v2883 = vpop.f32.mrb[0].mxu0
      %2884 = vmatprep.mubr.f32.mxu0 0.0
      %2885 = vmatmul.mubr.f32.gmra.mrb[0].mxu0 %v2795
      %v2886 = vpop.f32.mrb[0].mxu0
      %v2887 = vadd.f32 0.0, %v2886
      %v2888 = vpop.f32.mrb[0].mxu0
      %2889 = vmatprep.mubr.f32.mxu0 0.0
      %2890 = vmatmul.mubr.f32.gmra.mrb[0].mxu0 %v2798
      %v2891 = vpop.f32.mrb[0].mxu0
      %v2892 = vadd.f32 0.0, %v2891
      %v2893 = vpop.f32.mrb[0].mxu0
      %2894 = vdwg.mxu0
      %v2895 = vadd.f32 %v2765, %v2867
      %v2896 = vadd.f32 %v2766, %v2872
      %v2897 = vadd.f32 %v2767, %v2877
      %v2898 = vadd.f32 %v2768, %v2882
      %v2899 = vadd.f32 %v2769, %v2887
      %v2900 = vadd.f32 %v2770, %v2892
      %v2901 = vld [vmem:[#allocation2 + $0x1e] sm:$0xff]
      %v2902 = vld [vmem:[#allocation2 + $0x26] sm:$0xff]
      %v2903 = vld [vmem:[#allocation2 + $0x2e] sm:$0xff]
      %v2904 = vld [vmem:[#allocation2 + $0x36] sm:$0xff]
      %v2905 = vld [vmem:[#allocation2 + $0x3e] sm:$0xff]
      %v2906 = vld [vmem:[#allocation2 + $0x46] sm:$0xff]
      %s2907 = scalar_lea.vmem %s3, 480
      %v2908 = vld [vmem:[%s2907] sm:$0xff]
      %v2909 = vld [vmem:[%s2907 + $0x8] sm:$0xff]
      %v2910 = vld [vmem:[%s2907 + $0x10] sm:$0xff]
      %v2911 = vld [vmem:[%s2907 + $0x18] sm:$0xff]
      %v2913 = vsel %vm934, %v2901, 0
      %v2916 = vsel %vm934, %v2902, 0
      %v2919 = vsel %vm934, %v2903, 0
      %v2922 = vsel %vm934, %v2904, 0
      %v2925 = vsel %vm934, %v2905, 0
      %v2928 = vsel %vm934, %v2906, 0
      %2930 = vmatprep.subr.mxu0 0.0
      %2931 = vmatpush1.msra.mxu0 %v2908
      %2932 = vmatprep.subr.mxu0 0.0
      %2933 = vmatpush1.msra.mxu0 %v2909
      %2934 = vmatprep.subr.mxu0 0.0
      %2935 = vmatpush1.msra.mxu0 %v2910
      %2936 = vmatprep.subr.mxu0 0.0
      %2937 = vmatpush1.msra.mxu0 %v2911
      %2938 = vmatprep.subr.mxu0 0.0
      %2939 = vmatpush1.msra.mxu0 0.0
      %2940 = vmatprep.subr.mxu0 0.0
      %2941 = vmatpush1.msra.mxu0 0.0
      %2942 = vmatprep.subr.mxu0 0.0
      %2943 = vmatpush1.msra.mxu0 0.0
      %2944 = vmatprep.subr.mxu0 0.0
      %2945 = vmatpush1.msra.mxu0 0.0
      %2946 = vmatprep.subr.mxu0 0.0
      %2947 = vmatpush1.msra.mxu0 0.0
      %2948 = vmatprep.subr.mxu0 0.0
      %2949 = vmatpush1.msra.mxu0 0.0
      %2950 = vmatprep.subr.mxu0 0.0
      %2951 = vmatpush1.msra.mxu0 0.0
      %2952 = vmatprep.subr.mxu0 0.0
      %2953 = vmatpush1.msra.mxu0 0.0
      %2954 = vmatprep.subr.mxu0 0.0
      %2955 = vmatpush1.msra.mxu0 0.0
      %2956 = vmatprep.subr.mxu0 0.0
      %2957 = vmatpush1.msra.mxu0 0.0
      %2958 = vmatprep.subr.mxu0 0.0
      %2959 = vmatpush1.msra.mxu0 0.0
      %2960 = vmatprep.subr.mxu0 0.0
      %2961 = vmatpush1.msra.mxu0 0.0
      %2962 = vmatprep.subr.mxu0 0.0
      %2963 = vmatpush1.msra.mxu0 0.0
      %2964 = vmatprep.subr.mxu0 0.0
      %2965 = vmatpush1.msra.mxu0 0.0
      %2966 = vmatprep.subr.mxu0 0.0
      %2967 = vmatpush1.msra.mxu0 0.0
      %2968 = vmatprep.subr.mxu0 0.0
      %2969 = vmatpush1.msra.mxu0 0.0
      %2970 = vmatprep.subr.mxu0 0.0
      %2971 = vmatpush1.msra.mxu0 0.0
      %2972 = vmatprep.subr.mxu0 0.0
      %2973 = vmatpush1.msra.mxu0 0.0
      %2974 = vmatprep.subr.mxu0 0.0
      %2975 = vmatpush1.msra.mxu0 0.0
      %2976 = vmatprep.subr.mxu0 0.0
      %2977 = vmatpush1.msra.mxu0 0.0
      %2978 = vmatprep.subr.mxu0 0.0
      %2979 = vmatpush1.msra.mxu0 0.0
      %2980 = vmatprep.subr.mxu0 0.0
      %2981 = vmatpush1.msra.mxu0 0.0
      %2982 = vmatprep.subr.mxu0 0.0
      %2983 = vmatpush1.msra.mxu0 0.0
      %2984 = vmatprep.subr.mxu0 0.0
      %2985 = vmatpush1.msra.mxu0 0.0
      %2986 = vmatprep.subr.mxu0 0.0
      %2987 = vmatpush1.msra.mxu0 0.0
      %2988 = vmatprep.subr.mxu0 0.0
      %2989 = vmatpush1.msra.mxu0 0.0
      %2990 = vmatprep.subr.mxu0 0.0
      %2991 = vmatpush1.msra.mxu0 0.0
      %2992 = vmatprep.subr.mxu0 0.0
      %2993 = vmatpush1.msra.mxu0 0.0
      %2994 = vmatprep.mubr.f32.mxu0 0.0
      %2995 = vmatmul.mubr.f32.gmra.mrb[0].mxu0 %v2913
      %v2996 = vpop.f32.mrb[0].mxu0
      %v2997 = vadd.f32 0.0, %v2996
      %v2998 = vpop.f32.mrb[0].mxu0
      %2999 = vmatprep.mubr.f32.mxu0 0.0
      %3000 = vmatmul.mubr.f32.gmra.mrb[0].mxu0 %v2916
      %v3001 = vpop.f32.mrb[0].mxu0
      %v3002 = vadd.f32 0.0, %v3001
      %v3003 = vpop.f32.mrb[0].mxu0
      %3004 = vmatprep.mubr.f32.mxu0 0.0
      %3005 = vmatmul.mubr.f32.gmra.mrb[0].mxu0 %v2919
      %v3006 = vpop.f32.mrb[0].mxu0
      %v3007 = vadd.f32 0.0, %v3006
      %v3008 = vpop.f32.mrb[0].mxu0
      %3009 = vmatprep.mubr.f32.mxu0 0.0
      %3010 = vmatmul.mubr.f32.gmra.mrb[0].mxu0 %v2922
      %v3011 = vpop.f32.mrb[0].mxu0
      %v3012 = vadd.f32 0.0, %v3011
      %v3013 = vpop.f32.mrb[0].mxu0
      %3014 = vmatprep.mubr.f32.mxu0 0.0
      %3015 = vmatmul.mubr.f32.gmra.mrb[0].mxu0 %v2925
      %v3016 = vpop.f32.mrb[0].mxu0
      %v3017 = vadd.f32 0.0, %v3016
      %v3018 = vpop.f32.mrb[0].mxu0
      %3019 = vmatprep.mubr.f32.mxu0 0.0
      %3020 = vmatmul.mubr.f32.gmra.mrb[0].mxu0 %v2928
      %v3021 = vpop.f32.mrb[0].mxu0
      %v3022 = vadd.f32 0.0, %v3021
      %v3023 = vpop.f32.mrb[0].mxu0
      %3024 = vdwg.mxu0
      %v3025 = vadd.f32 %v2895, %v2997
      %v3026 = vadd.f32 %v2896, %v3002
      %v3027 = vadd.f32 %v2897, %v3007
      %v3028 = vadd.f32 %v2898, %v3012
      %v3029 = vadd.f32 %v2899, %v3017
      %v3030 = vadd.f32 %v2900, %v3022
      %3031 = vst [vmem:[%s224] sm:$0xff] %v3025
      %3032 = vst [vmem:[%s224 + $0x8] sm:$0xff] %v3026
      %3033 = vst [vmem:[%s224 + $0x10] sm:$0xff] %v3027
      %3034 = vst [vmem:[%s224 + $0x18] sm:$0xff] %v3028
      %3035 = vst [vmem:[%s224 + $0x20] sm:$0xff] %v3029
      %3036 = vst [vmem:[%s224 + $0x28] sm:$0xff] %v3030
      %p3037 = scmp.lt.s32.totalorder %s16, 1
      %s3038 = scalar_select %p3037, %s16, 1
      %s3039 = smul.addr %s3038, 6
      %s3040 = smul.addr %s3039, 8
      %s3041 = scalar_lea.vmem %s5, %s3040
      // Predicated region
      $region41: #{spatial_discriminator.1} parent=39 // pred_check
        %p3042 = pneg %p144
      $region42: #{spatial_discriminator.1} parent=39 // pred_check_branch
        %3044 = sbr.rel (%p3042) target = $region44
      $region43: #{spatial_discriminator.1} parent=39 // pred_region
        _
      $region44: #{spatial_discriminator.1} parent=39 // pred_fallthru
        _
    $region40: #{spatial_discriminator.1} parent=5 // pred_fallthru
      _
    %p3045 = scmp.le.s32.totalorder 2, %s11
    // Predicated region
    $region45: #{spatial_discriminator.1} parent=5 // pred_check
      %p3046 = pneg %p3045
    $region46: #{spatial_discriminator.1} parent=5 // pred_check_branch
      %3048 = sbr.rel (%p3046) target = $region48
    $region47: #{spatial_discriminator.1} parent=5 // pred_region
      %s3049 = ssub.s32 %s11, 2
      // Predicated region
      $region49: #{spatial_discriminator.1} parent=47 // pred_check
        %p3050 = pneg %p150
      $region50: #{spatial_discriminator.1} parent=47 // pred_check_branch
        %3052 = sbr.rel (%p3050) target = $region52
      $region51: #{spatial_discriminator.1} parent=47 // pred_region
        %p3053 = scmp.lt.s32.totalorder %s17, 1
        %s3054 = scalar_select %p3053, %s17, 1
        %s3055 = smul.addr %s3054, 6
        %s3056 = smul.addr %s3055, 8
        %s3057 = scalar_lea.vmem %s5, %s3056
      $region52: #{spatial_discriminator.1} parent=47 // pred_fallthru
        _
    $region48: #{spatial_discriminator.1} parent=5 // pred_fallthru
      _
  $region6: #{spatial_discriminator.1} parent=0 // loop_footer
    %s15 = sadd.s32 1, %s11
  $region7: #{spatial_discriminator.1} parent=0 // loop_footer_branch
    %10 = sbr.rel target = $region3
  $region8: #{spatial_discriminator.1} parent=0 // loop_exit
    _

</llo_original>
